<compile_context>
chip_gen: v6e
topology: v6e:2x2x1
jax: 0.10.0
libtpu: 0.0.40
codegen_flags: <defaults>
</compile_context>

<pallas_src>
import functools
import math

import jax
import jax.numpy as jnp
from jax import lax
from jax.experimental import pallas as pl
from jax.experimental.pallas import tpu as pltpu

SQRT2 = 1.41421           # exact constant used by the PyTorch module
LRELU_SLOPE = 0.2
IN_EPS = 1e-5             # nn.InstanceNorm2d default
MM_DTYPE = jnp.bfloat16   # MXU operand dtype (accumulation stays f32)
VMEM_LIMIT = 48 * 1024 * 1024   # explicit scoped-VMEM budget (safe on v5e/v6e/v7x)
TOL = 5e-2


def _check_vmem(tag, blocks, extra_bytes=0):
    """Rough per-grid-step VMEM footprint guard for the whole-plane blocking."""
    total = extra_bytes
    for shape, dtype in blocks:
        total += 2 * math.prod(shape) * jnp.dtype(dtype).itemsize   # double-buffered
    if total > VMEM_LIMIT:
        raise ValueError(
            f"{tag}: estimated per-step VMEM footprint {total / 2**20:.1f} MiB exceeds "
            f"{VMEM_LIMIT / 2**20:.0f} MiB; these shapes need the row-tiled path "
            "(not implemented — see TODO(synk) in the module docstring).")


# ---------------------------------------------------------------------------
# Kernel 1: fused InstanceNorm/AdaIN + LeakyReLU (+ 2x2 avg-pool) (+ conv zero-pad)
# ---------------------------------------------------------------------------
def _norm_act_kernel(*refs, pool, pad, slope, eps):
    """Per-sample fused kernel.

    pool=True : refs = (x00, x01, x10, x11, gamma, beta, z_out[bf16], pooled_x_out[f32])
                x?? are the four 2x2-strided sub-grids of the full-res plane, so both
                the InstanceNorm statistics (over all of them) and the 2x2 average pool
                (mean of the four) are element-wise work.
    pool=False: refs = (x, gamma, beta, z_out[bf16])
    """
    if pool:
        x00_ref, x01_ref, x10_ref, x11_ref, g_ref, bt_ref, z_ref, px_ref = refs
        parts = (x00_ref[0], x01_ref[0], x10_ref[0], x11_ref[0])     # (h, w, C) f32 each
    else:
        x_ref, g_ref, bt_ref, z_ref = refs
        parts = (x_ref[0],)

    h, w, c = parts[0].shape
    n = float(h * w * len(parts))

    # Two-pass mean / variance (avoids E[x^2]-E[x]^2 catastrophic cancellation).
    acc_s = jnp.zeros((1, 1, c), jnp.float32)
    for p in parts:
        acc_s = acc_s + jnp.sum(p, axis=(0, 1), keepdims=True)
    mean = acc_s / n
    acc_v = jnp.zeros((1, 1, c), jnp.float32)
    for p in parts:
        d = p - mean
        acc_v = acc_v + jnp.sum(d * d, axis=(0, 1), keepdims=True)
    var = acc_v / n
    inv = lax.rsqrt(var + eps)

    gamma = g_ref[...]                                               # (1, 1, C)
    beta = bt_ref[...]
    scale = inv * gamma
    shift = beta - mean * scale

    def act(v):
        y = v * scale + shift
        return jnp.where(y > 0, y, slope * y)

    if pool:
        y = 0.25 * (act(parts[0]) + act(parts[1]) + act(parts[2]) + act(parts[3]))
        px_ref[0] = 0.25 * (parts[0] + parts[1] + parts[2] + parts[3])   # raw pooled x
    else:
        y = act(parts[0])

    y = y.astype(z_ref.dtype)                                        # bf16 store
    if pad:
        # Zero only the border strips, then store the interior (W-offset interior store
        # is a known masked-store cost; accepted — see review notes).
        zrow = jnp.zeros((1, w + 2, c), z_ref.dtype)
        zcol = jnp.zeros((h, 1, c), z_ref.dtype)
        z_ref[0, 0:1, :, :] = zrow
        z_ref[0, h + 1:h + 2, :, :] = zrow
        z_ref[0, 1:1 + h, 0:1, :] = zcol
        z_ref[0, 1:1 + h, w + 1:w + 2, :] = zcol
        z_ref[0, 1:1 + h, 1:1 + w, :] = y
    else:
        z_ref[0] = y


def norm_act_resample_pad(x, gamma, beta, *, pool, pad=True,
                          slope=LRELU_SLOPE, eps=IN_EPS):
    """x: (B, H, W, C) f32; gamma/beta: (B, 1, C).
    pool=True  -> (z_pad bf16 (B, H/2+2, W/2+2, C), pooled_x f32 (B, H/2, W/2, C))
    pool=False -> z bf16 (B, H(+2), W(+2), C) depending on `pad`."""
    B, H, W, C = x.shape
    if pool:
        assert H % 2 == 0 and W % 2 == 0
        Hs, Ws = H // 2, W // 2
        # TODO(synk): these four strided sub-grid views are materialized by XLA (one extra
        # HBM pass over x); move the even/odd split in-kernel with strided pl.ds reads once
        # that path is validated on all target generations.
        subs = (x[:, 0::2, 0::2, :], x[:, 0::2, 1::2, :],
                x[:, 1::2, 0::2, :], x[:, 1::2, 1::2, :])
    else:
        Hs, Ws = H, W
        subs = (x,)

    plane_in = pl.BlockSpec((1, Hs, Ws, C), lambda b: (b, 0, 0, 0))
    chan = pl.BlockSpec((1, 1, C), lambda b: (b, 0, 0))
    in_specs = [plane_in] * len(subs) + [chan, chan]

    Ho, Wo = (Hs + 2, Ws + 2) if pad else (Hs, Ws)
    z_shape = jax.ShapeDtypeStruct((B, Ho, Wo, C), MM_DTYPE)
    z_spec = pl.BlockSpec((1, Ho, Wo, C), lambda b: (b, 0, 0, 0))

    if pool:
        out_shape = (z_shape, jax.ShapeDtypeStruct((B, Hs, Ws, C), jnp.float32))
        out_specs = (z_spec, plane_in)
    else:
        out_shape = z_shape
        out_specs = z_spec

    _check_vmem("norm_act_resample_pad",
                [((1, Hs, Ws, C), jnp.float32)] * len(subs)
                + [((1, Ho, Wo, C), MM_DTYPE)]
                + ([((1, Hs, Ws, C), jnp.float32)] if pool else []))

    kern = functools.partial(_norm_act_kernel, pool=pool, pad=pad, slope=slope, eps=eps)
    return pl.pallas_call(
        kern,
        out_shape=out_shape,
        grid=(B,),
        in_specs=in_specs,
        out_specs=out_specs,
        compiler_params=pltpu.CompilerParams(
            dimension_semantics=("parallel",),
            vmem_limit_bytes=VMEM_LIMIT),
    )(*subs, gamma, beta)


# ---------------------------------------------------------------------------
# Shared helper: tap-packed im2col (9 static slices -> one (S, 9*Cin) bf16 operand)
# ---------------------------------------------------------------------------
def _im2col_3x3(xp, h, w):
    """xp: (h+2, w+2, Cin) bf16 -> (h*w, 9*Cin) bf16, tap-major column order matching
    weight.reshape(9*Cin, Cout)."""
    cin = xp.shape[-1]
    cols = []
    for dy in range(3):
        rows = xp[dy:dy + h]                         # (h, w+2, cin)
        for dx in range(3):
            cols.append(rows[:, dx:dx + w, :].reshape(h * w, cin))
    return jnp.concatenate(cols, axis=-1)            # (h*w, 9*cin)


# ---------------------------------------------------------------------------
# Kernel 2: conv1 (3x3, tap-packed) + bias + norm2 + LeakyReLU + zero-pad, bf16 out
# ---------------------------------------------------------------------------
def _conv3x3_norm_act_pad_kernel(xp_ref, w_ref, b_ref, g_ref, bt_ref, z_ref,
                                 *, h, w, slope, eps):
    """xp: (1, h+2, w+2, Cin) bf16; w: (9*Cin, Cin) bf16; b: (1, Cin) f32;
    g/bt: (1, 1, Cin) f32 (AdaIN gamma/beta or ones/zeros); z: (1, h+2, w+2, Cin) bf16."""
    cin = xp_ref.shape[-1]
    xcol = _im2col_3x3(xp_ref[0], h, w)                                  # (S, 9*cin) bf16
    y = jnp.dot(xcol, w_ref[...], preferred_element_type=jnp.float32)    # single K=9*Cin matmul
    y = y + b_ref[...]                                                   # (S, cin) f32

    # Fused norm2 (InstanceNorm/AdaIN): two-pass stats over the spatial axis.
    mean = jnp.mean(y, axis=0, keepdims=True)                            # (1, cin)
    var = jnp.mean(jnp.square(y - mean), axis=0, keepdims=True)
    inv = lax.rsqrt(var + eps)
    scale = inv * g_ref[0]
    shift = bt_ref[0] - mean * scale
    z = y * scale + shift
    z = jnp.where(z > 0, z, slope * z)
    z = z.reshape(h, w, cin).astype(z_ref.dtype)

    # Zero only the border strips of the padded output, then store the interior.
    zrow = jnp.zeros((1, w + 2, cin), z_ref.dtype)
    zcol = jnp.zeros((h, 1, cin), z_ref.dtype)
    z_ref[0, 0:1, :, :] = zrow
    z_ref[0, h + 1:h + 2, :, :] = zrow
    z_ref[0, 1:1 + h, 0:1, :] = zcol
    z_ref[0, 1:1 + h, w + 1:w + 2, :] = zcol
    z_ref[0, 1:1 + h, 1:1 + w, :] = z


def conv3x3_norm_act_pad(xp, wcol, b, gamma, beta, *, slope=LRELU_SLOPE, eps=IN_EPS):
    """xp: (B, h+2, w+2, Cin) bf16; wcol: (9*Cin, Cin) bf16; b: (Cin,) f32;
    gamma/beta: (B, 1, Cin) f32.  Returns z2_pad: (B, h+2, w+2, Cin) bf16."""
    B, Hp, Wp, Cin = xp.shape
    h, w = Hp - 2, Wp - 2
    assert wcol.shape == (9 * Cin, Cin)

    _check_vmem("conv3x3_norm_act_pad",
                [((1, Hp, Wp, Cin), MM_DTYPE), ((9 * Cin, Cin), MM_DTYPE),
                 ((1, Hp, Wp, Cin), MM_DTYPE)],
                extra_bytes=h * w * 9 * Cin * 2 + h * w * Cin * 4)   # im2col + f32 result

    kern = functools.partial(_conv3x3_norm_act_pad_kernel, h=h, w=w, slope=slope, eps=eps)
    return pl.pallas_call(
        kern,
        out_shape=jax.ShapeDtypeStruct((B, Hp, Wp, Cin), MM_DTYPE),
        grid=(B,),
        in_specs=[
            pl.BlockSpec((1, Hp, Wp, Cin), lambda i: (i, 0, 0, 0)),
            pl.BlockSpec((9 * Cin, Cin), lambda i: (0, 0)),
            pl.BlockSpec((1, Cin), lambda i: (0, 0)),
            pl.BlockSpec((1, 1, Cin), lambda i: (i, 0, 0)),
            pl.BlockSpec((1, 1, Cin), lambda i: (i, 0, 0)),
        ],
        out_specs=pl.BlockSpec((1, Hp, Wp, Cin), lambda i: (i, 0, 0, 0)),
        compiler_params=pltpu.CompilerParams(
            dimension_semantics=("parallel",),
            vmem_limit_bytes=VMEM_LIMIT),
    )(xp, wcol, b.reshape(1, Cin).astype(jnp.float32), gamma, beta)


# ---------------------------------------------------------------------------
# Kernel 3: conv2 (3x3, tap-packed) + bias + (1x1 skip conv | skip add) + /1.41421
# ---------------------------------------------------------------------------
def _conv3x3_res_kernel(*refs, h, w, skip_mode, res_scale):
    """refs: xp, wcol, b [, skip [, skip_w]], out
      xp   : (1, h+2, w+2, Cin) bf16 padded input plane
      wcol : (9*Cin, tn)  bf16
      b    : (1, tn)      f32
      skip : (1, h*w, Cin) f32 ('conv')  or (1, h*w, tn) f32 ('add')
      out  : (1, h*w, tn) f32
    """
    if skip_mode == "conv":
        xp_ref, w_ref, b_ref, skip_ref, skw_ref, o_ref = refs
    elif skip_mode == "add":
        xp_ref, w_ref, b_ref, skip_ref, o_ref = refs
    else:
        xp_ref, w_ref, b_ref, o_ref = refs

    xcol = _im2col_3x3(xp_ref[0], h, w)                                  # (S, 9*cin) bf16
    y = jnp.dot(xcol, w_ref[...], preferred_element_type=jnp.float32)    # single matmul
    y = y + b_ref[...]
    if skip_mode == "conv":                                              # fused 1x1 skip conv
        y = y + jnp.dot(skip_ref[0].astype(MM_DTYPE), skw_ref[...],
                        preferred_element_type=jnp.float32)
    elif skip_mode == "add":
        y = y + skip_ref[0]
    if skip_mode is not None:
        y = y / res_scale                                                # (conv + skip)/1.41421
    o_ref[0] = y


def conv3x3_fused(xp, wcol, b, *, skip=None, skip_w=None, res_scale=SQRT2):
    """xp: (B, h+2, w+2, Cin) bf16; wcol: (9*Cin, Cout) bf16; b: (Cout,) f32.
    Optional fused residual epilogue:
      skip only        -> out = (conv + b + skip) / res_scale
      skip and skip_w  -> out = (conv + b + skip @ skip_w) / res_scale
    Returns (B, h*w, Cout) f32 (flattened spatial)."""
    B, Hp, Wp, Cin = xp.shape
    h, wd = Hp - 2, Wp - 2
    S = h * wd
    Cout = wcol.shape[1]
    skip_mode = None if skip is None else ("add" if skip_w is None else "conv")

    # Lane-dense output tiles; only split very wide Cout.
    # TODO(synk): prefer tn=128 on v5e (128-wide MXU); 256 targets v6e/v7x.
    tn = 256 if (Cout > 256 and Cout % 256 == 0) else Cout
    ncout = Cout // tn

    in_specs = [
        pl.BlockSpec((1, Hp, Wp, Cin), lambda i, j: (i, 0, 0, 0)),
        pl.BlockSpec((9 * Cin, tn), lambda i, j: (0, j)),
        pl.BlockSpec((1, tn), lambda i, j: (0, j)),
    ]
    args = [xp, wcol, b.reshape(1, Cout).astype(jnp.float32)]
    vmem_blocks = [((1, Hp, Wp, Cin), MM_DTYPE), ((9 * Cin, tn), MM_DTYPE),
                   ((1, S, tn), jnp.float32)]
    if skip_mode == "conv":
        in_specs.append(pl.BlockSpec((1, S, Cin), lambda i, j: (i, 0, 0)))
        in_specs.append(pl.BlockSpec((Cin, tn), lambda i, j: (0, j)))
        args += [skip, skip_w.astype(MM_DTYPE)]
        vmem_blocks += [((1, S, Cin), jnp.float32), ((Cin, tn), MM_DTYPE)]
    elif skip_mode == "add":
        in_specs.append(pl.BlockSpec((1, S, tn), lambda i, j: (i, 0, j)))
        args.append(skip)
        vmem_blocks += [((1, S, tn), jnp.float32)]

    _check_vmem("conv3x3_fused", vmem_blocks, extra_bytes=S * 9 * Cin * 2 + S * tn * 4)

    kern = functools.partial(_conv3x3_res_kernel, h=h, w=wd, skip_mode=skip_mode,
                             res_scale=res_scale)
    return pl.pallas_call(
        kern,
        out_shape=jax.ShapeDtypeStruct((B, S, Cout), jnp.float32),
        grid=(B, ncout),
        in_specs=in_specs,
        out_specs=pl.BlockSpec((1, S, tn), lambda i, j: (i, 0, j)),
        compiler_params=pltpu.CompilerParams(
            dimension_semantics=("parallel", "parallel"),
            vmem_limit_bytes=VMEM_LIMIT),
    )(*args)


# ---------------------------------------------------------------------------
# ResBlock forward
# ---------------------------------------------------------------------------
def _adain_affine(s, lin_w, lin_b, C):
    # AdaIn's Linear(style_dim -> 2C) is a negligible matmul; kept as XLA glue.
    proj = jnp.dot(s, lin_w) + lin_b                # (B, 2C)
    beta = proj[:, :C]
    gamma = 1.0 + proj[:, C:]
    B = s.shape[0]
    return gamma.reshape(B, 1, C), beta.reshape(B, 1, C)


def res_block_forward(params, x_nchw, s=None, *, downsample=False, upsample=False):
    """Pallas forward of the PyTorch ResBlock.  NCHW f32 in / NCHW f32 out."""
    use_adain = "lin1_w" in params
    cin = params["w1"].shape[2]
    cout = params["w2"].shape[3]
    x = jnp.transpose(x_nchw, (0, 2, 3, 1)).astype(jnp.float32)     # NHWC
    B, H, W, _ = x.shape

    if use_adain:
        g1, bt1 = _adain_affine(s, params["lin1_w"], params["lin1_b"], cin)
        g2, bt2 = _adain_affine(s, params["lin2_w"], params["lin2_b"], cin)
    else:
        g1 = g2 = jnp.ones((B, 1, cin), jnp.float32)
        bt1 = bt2 = jnp.zeros((B, 1, cin), jnp.float32)

    # Tap-packed weights: (3,3,Cin,Cout) -> (9*Cin, Cout), cast once to bf16.
    w1col = params["w1"].reshape(9 * cin, cin).astype(MM_DTYPE)
    w2col = params["w2"].reshape(9 * cin, cout).astype(MM_DTYPE)

    if downsample:
        # norm1 + LeakyReLU + AvgPool2d(2) + conv padding fused; the pooled raw input
        # for the skip branch comes out of the same kernel.
        z1_pad, x_res = norm_act_resample_pad(x, g1, bt1, pool=True, pad=True)
        Hs, Ws = H // 2, W // 2
        skip_src = x_res.reshape(B, Hs * Ws, cin)
    elif upsample:
        # TODO(synk): nearest-neighbour 2x resize (+pad) kept as XLA glue between kernels.
        z1 = norm_act_resample_pad(x, g1, bt1, pool=False, pad=False)
        z1 = jnp.repeat(jnp.repeat(z1, 2, axis=1), 2, axis=2)
        z1_pad = jnp.pad(z1, ((0, 0), (1, 1), (1, 1), (0, 0)))
        Hs, Ws = 2 * H, 2 * W
        x_res = jnp.repeat(jnp.repeat(x, 2, axis=1), 2, axis=2)
        skip_src = x_res.reshape(B, Hs * Ws, cin)
    else:
        z1_pad = norm_act_resample_pad(x, g1, bt1, pool=False, pad=True)
        Hs, Ws = H, W
        skip_src = x.reshape(B, H * W, cin)

    # conv1 + bias + norm2 + LeakyReLU + re-pad, all in one kernel (bf16 output).
    z2_pad = conv3x3_norm_act_pad(z1_pad, w1col, params["b1"], g2, bt2)
    # conv2 + bias + (1x1 skip conv | add) + residual /1.41421.
    out = conv3x3_fused(z2_pad, w2col, params["b2"],
                        skip=skip_src, skip_w=params.get("skip_w"),
                        res_scale=SQRT2)
    out = out.reshape(B, Hs, Ws, cout)
    return jnp.transpose(out, (0, 3, 1, 2))                         # NCHW


# ---------------------------------------------------------------------------
# Pure-XLA reference (mirrors the PyTorch module; rounds matmul operands to bf16
# to match the kernel's MXU precision) for validation
# ---------------------------------------------------------------------------
def _reference_res_block(params, x_nchw, s=None, *, downsample=False, upsample=False):
    use_adain = "lin1_w" in params
    x = x_nchw.astype(jnp.float32)
    q = lambda v: v.astype(jnp.bfloat16).astype(jnp.float32)   # matmul-operand rounding

    def inorm(v, lw=None, lb=None):
        mean = v.mean(axis=(2, 3), keepdims=True)
        var = v.var(axis=(2, 3), keepdims=True)
        y = (v - mean) / jnp.sqrt(var + IN_EPS)
        if use_adain:
            proj = jnp.dot(s, lw) + lb
            C = v.shape[1]
            bias = proj[:, :C][:, :, None, None]
            mult = proj[:, C:][:, :, None, None]
            y = y * (1.0 + mult) + bias
        return y

    def leaky(v):
        return jnp.where(v > 0, v, LRELU_SLOPE * v)

    def conv3(v, w, b):
        wt = jnp.transpose(q(w), (3, 2, 0, 1))               # (co, ci, kh, kw)
        y = lax.conv_general_dilated(q(v), wt, (1, 1), ((1, 1), (1, 1)),
                                     dimension_numbers=("NCHW", "OIHW", "NCHW"))
        return y + b[None, :, None, None]

    if downsample:
        def resample(v):
            Bq, Cq, Hq, Wq = v.shape
            return v.reshape(Bq, Cq, Hq // 2, 2, Wq // 2, 2).mean(axis=(3, 5))
    elif upsample:
        def resample(v):
            return jnp.repeat(jnp.repeat(v, 2, axis=2), 2, axis=3)
    else:
        def resample(v):
            return v

    skip = resample(x)
    if "skip_w" in params:
        skip = jnp.einsum("bchw,cd->bdhw", q(skip), q(params["skip_w"]))
    z = resample(leaky(inorm(x, params.get("lin1_w"), params.get("lin1_b"))))
    z = conv3(z, params["w1"], params["b1"])
    z = leaky(inorm(z, params.get("lin2_w"), params.get("lin2_b")))
    z = conv3(z, params["w2"], params["b2"])
    return (z + skip) / SQRT2


# ---------------------------------------------------------------------------
# Deterministic parameter construction (shapes mirror the PyTorch __init__)
# ---------------------------------------------------------------------------
def init_res_block(key, cin, cout, *, use_adain=False, style_dim=None):
    ks = jax.random.split(key, 10)

    def conv_w(k, kh, kw, ci, co):
        return jax.random.normal(k, (kh, kw, ci, co), jnp.float32) / jnp.sqrt(float(kh * kw * ci))

    p = {
        "w1": conv_w(ks[0], 3, 3, cin, cin),
        "b1": 0.01 * jax.random.normal(ks[1], (cin,), jnp.float32),
        "w2": conv_w(ks[2], 3, 3, cin, cout),
        "b2": 0.01 * jax.random.normal(ks[3], (cout,), jnp.float32),
    }
    if cin != cout:
        p["skip_w"] = conv_w(ks[4], 1, 1, cin, cout).reshape(cin, cout)
    if use_adain:
        assert style_dim is not None
        p["lin1_w"] = jax.random.normal(ks[5], (style_dim, 2 * cin), jnp.float32) / jnp.sqrt(float(style_dim))
        p["lin1_b"] = 0.01 * jax.random.normal(ks[6], (2 * cin,), jnp.float32)
        p["lin2_w"] = jax.random.normal(ks[7], (style_dim, 2 * cin), jnp.float32) / jnp.sqrt(float(style_dim))
        p["lin2_b"] = 0.01 * jax.random.normal(ks[8], (2 * cin,), jnp.float32)
    return p


if __name__ == "__main__":
    key = jax.random.PRNGKey(0)
    kx, kstyle, kp1, kp2 = jax.random.split(key, 4)

    B, CIN, COUT, H, W = 2, 32, 64, 16, 16
    x = jax.random.normal(kx, (B, CIN, H, W), jnp.float32)

    # Config 1: downsampling ResBlock with channel change (1x1 skip conv), plain InstanceNorm.
    p1 = init_res_block(kp1, CIN, COUT)
    fwd1 = jax.jit(functools.partial(res_block_forward, downsample=True))
    out1 = fwd1(p1, x)
    jax.block_until_ready(out1)
    assert out1.shape == (B, COUT, H // 2, W // 2) and out1.dtype == jnp.float32
    ref1 = _reference_res_block(p1, x, downsample=True)
    err1 = float(jnp.max(jnp.abs(out1 - ref1)))
    assert err1 < TOL, f"config1 mismatch vs reference: max |diff| = {err1}"

    # Config 2: identity-resample ResBlock with AdaIN conditioning (in == out channels).
    STYLE = 16
    s = jax.random.normal(kstyle, (B, STYLE), jnp.float32)
    p2 = init_res_block(kp2, CIN, CIN, use_adain=True, style_dim=STYLE)
    fwd2 = jax.jit(res_block_forward)
    out2 = fwd2(p2, x, s)
    jax.block_until_ready(out2)
    assert out2.shape == (B, CIN, H, W) and out2.dtype == jnp.float32
    ref2 = _reference_res_block(p2, x, s)
    err2 = float(jnp.max(jnp.abs(out2 - ref2)))
    assert err2 < TOL, f"config2 mismatch vs reference: max |diff| = {err2}"

    print("KERNEL_OK")
</pallas_src>

<mosaic_0001>
module attributes {stable_mosaic.version = 11 : i64} {
  func.func @_norm_act_kernel(%arg0: i32, %arg1: memref<1x8x8x32xf32, #tpu.memory_space<vmem>>, %arg2: memref<1x8x8x32xf32, #tpu.memory_space<vmem>>, %arg3: memref<1x8x8x32xf32, #tpu.memory_space<vmem>>, %arg4: memref<1x8x8x32xf32, #tpu.memory_space<vmem>>, %arg5: memref<1x1x32xf32, #tpu.memory_space<vmem>>, %arg6: memref<1x1x32xf32, #tpu.memory_space<vmem>>, %arg7: memref<1x10x10x32xbf16, #tpu.memory_space<vmem>>, %arg8: memref<1x8x8x32xf32, #tpu.memory_space<vmem>>) attributes {dimension_semantics = [#tpu.dimension_semantics<parallel>], iteration_bounds = array<i64: 2>, scalar_prefetch = 0 : i64, scratch_operands = 0 : i64, tpu.core_type = #tpu.core_type<tc>, window_params = [{transform_indices = @transform_0, window_bounds = array<i64: 1, 8, 8, 32>}, {transform_indices = @transform_1, window_bounds = array<i64: 1, 8, 8, 32>}, {transform_indices = @transform_2, window_bounds = array<i64: 1, 8, 8, 32>}, {transform_indices = @transform_3, window_bounds = array<i64: 1, 8, 8, 32>}, {transform_indices = @transform_4, window_bounds = array<i64: 1, 1, 32>}, {transform_indices = @transform_5, window_bounds = array<i64: 1, 1, 32>}, {transform_indices = @transform_6, window_bounds = array<i64: 1, 10, 10, 32>}, {transform_indices = @transform_7, window_bounds = array<i64: 1, 8, 8, 32>}]} {
    %c0 = arith.constant 0 : index
    %c0_0 = arith.constant 0 : index
    %c0_1 = arith.constant 0 : index
    %c0_2 = arith.constant 0 : index
    %0 = vector.load %arg1[%c0, %c0_0, %c0_1, %c0_2] : memref<1x8x8x32xf32, #tpu.memory_space<vmem>>, vector<1x8x8x32xf32>
    %1 = vector.shape_cast %0 : vector<1x8x8x32xf32> to vector<8x8x32xf32>
    %c0_3 = arith.constant 0 : index
    %c0_4 = arith.constant 0 : index
    %c0_5 = arith.constant 0 : index
    %c0_6 = arith.constant 0 : index
    %2 = vector.load %arg2[%c0_3, %c0_4, %c0_5, %c0_6] : memref<1x8x8x32xf32, #tpu.memory_space<vmem>>, vector<1x8x8x32xf32>
    %3 = vector.shape_cast %2 : vector<1x8x8x32xf32> to vector<8x8x32xf32>
    %c0_7 = arith.constant 0 : index
    %c0_8 = arith.constant 0 : index
    %c0_9 = arith.constant 0 : index
    %c0_10 = arith.constant 0 : index
    %4 = vector.load %arg3[%c0_7, %c0_8, %c0_9, %c0_10] : memref<1x8x8x32xf32, #tpu.memory_space<vmem>>, vector<1x8x8x32xf32>
    %5 = vector.shape_cast %4 : vector<1x8x8x32xf32> to vector<8x8x32xf32>
    %c0_11 = arith.constant 0 : index
    %c0_12 = arith.constant 0 : index
    %c0_13 = arith.constant 0 : index
    %c0_14 = arith.constant 0 : index
    %6 = vector.load %arg4[%c0_11, %c0_12, %c0_13, %c0_14] : memref<1x8x8x32xf32, #tpu.memory_space<vmem>>, vector<1x8x8x32xf32>
    %7 = vector.shape_cast %6 : vector<1x8x8x32xf32> to vector<8x8x32xf32>
    %cst = arith.constant 0.000000e+00 : f32
    %8 = vector.broadcast %cst : f32 to vector<1x1x32xf32>
    %cst_15 = arith.constant dense<0.000000e+00> : vector<32xf32>
    %9 = vector.multi_reduction <add>, %1, %cst_15 [0, 1] : vector<8x8x32xf32> to vector<32xf32>
    %10 = vector.shape_cast %9 : vector<32xf32> to vector<1x1x32xf32>
    %11 = arith.addf %8, %10 : vector<1x1x32xf32>
    %cst_16 = arith.constant dense<0.000000e+00> : vector<32xf32>
    %12 = vector.multi_reduction <add>, %3, %cst_16 [0, 1] : vector<8x8x32xf32> to vector<32xf32>
    %13 = vector.shape_cast %12 : vector<32xf32> to vector<1x1x32xf32>
    %14 = arith.addf %11, %13 : vector<1x1x32xf32>
    %cst_17 = arith.constant dense<0.000000e+00> : vector<32xf32>
    %15 = vector.multi_reduction <add>, %5, %cst_17 [0, 1] : vector<8x8x32xf32> to vector<32xf32>
    %16 = vector.shape_cast %15 : vector<32xf32> to vector<1x1x32xf32>
    %17 = arith.addf %14, %16 : vector<1x1x32xf32>
    %cst_18 = arith.constant dense<0.000000e+00> : vector<32xf32>
    %18 = vector.multi_reduction <add>, %7, %cst_18 [0, 1] : vector<8x8x32xf32> to vector<32xf32>
    %19 = vector.shape_cast %18 : vector<32xf32> to vector<1x1x32xf32>
    %20 = arith.addf %17, %19 : vector<1x1x32xf32>
    %cst_19 = arith.constant 2.560000e+02 : f32
    %21 = vector.broadcast %cst_19 : f32 to vector<1x1x32xf32>
    %22 = arith.divf %20, %21 : vector<1x1x32xf32>
    %cst_20 = arith.constant 0.000000e+00 : f32
    %23 = vector.broadcast %cst_20 : f32 to vector<1x1x32xf32>
    %24 = vector.broadcast %22 : vector<1x1x32xf32> to vector<8x8x32xf32>
    %25 = arith.subf %1, %24 : vector<8x8x32xf32>
    %26 = arith.mulf %25, %25 : vector<8x8x32xf32>
    %cst_21 = arith.constant dense<0.000000e+00> : vector<32xf32>
    %27 = vector.multi_reduction <add>, %26, %cst_21 [0, 1] : vector<8x8x32xf32> to vector<32xf32>
    %28 = vector.shape_cast %27 : vector<32xf32> to vector<1x1x32xf32>
    %29 = arith.addf %23, %28 : vector<1x1x32xf32>
    %30 = vector.broadcast %22 : vector<1x1x32xf32> to vector<8x8x32xf32>
    %31 = arith.subf %3, %30 : vector<8x8x32xf32>
    %32 = arith.mulf %31, %31 : vector<8x8x32xf32>
    %cst_22 = arith.constant dense<0.000000e+00> : vector<32xf32>
    %33 = vector.multi_reduction <add>, %32, %cst_22 [0, 1] : vector<8x8x32xf32> to vector<32xf32>
    %34 = vector.shape_cast %33 : vector<32xf32> to vector<1x1x32xf32>
    %35 = arith.addf %29, %34 : vector<1x1x32xf32>
    %36 = vector.broadcast %22 : vector<1x1x32xf32> to vector<8x8x32xf32>
    %37 = arith.subf %5, %36 : vector<8x8x32xf32>
    %38 = arith.mulf %37, %37 : vector<8x8x32xf32>
    %cst_23 = arith.constant dense<0.000000e+00> : vector<32xf32>
    %39 = vector.multi_reduction <add>, %38, %cst_23 [0, 1] : vector<8x8x32xf32> to vector<32xf32>
    %40 = vector.shape_cast %39 : vector<32xf32> to vector<1x1x32xf32>
    %41 = arith.addf %35, %40 : vector<1x1x32xf32>
    %42 = vector.broadcast %22 : vector<1x1x32xf32> to vector<8x8x32xf32>
    %43 = arith.subf %7, %42 : vector<8x8x32xf32>
    %44 = arith.mulf %43, %43 : vector<8x8x32xf32>
    %cst_24 = arith.constant dense<0.000000e+00> : vector<32xf32>
    %45 = vector.multi_reduction <add>, %44, %cst_24 [0, 1] : vector<8x8x32xf32> to vector<32xf32>
    %46 = vector.shape_cast %45 : vector<32xf32> to vector<1x1x32xf32>
    %47 = arith.addf %41, %46 : vector<1x1x32xf32>
    %cst_25 = arith.constant 2.560000e+02 : f32
    %48 = vector.broadcast %cst_25 : f32 to vector<1x1x32xf32>
    %49 = arith.divf %47, %48 : vector<1x1x32xf32>
    %cst_26 = arith.constant 9.99999974E-6 : f32
    %50 = vector.broadcast %cst_26 : f32 to vector<1x1x32xf32>
    %51 = arith.addf %49, %50 : vector<1x1x32xf32>
    %52 = math.rsqrt %51 : vector<1x1x32xf32>
    %c0_27 = arith.constant 0 : index
    %c0_28 = arith.constant 0 : index
    %c0_29 = arith.constant 0 : index
    %53 = vector.load %arg5[%c0_27, %c0_28, %c0_29] : memref<1x1x32xf32, #tpu.memory_space<vmem>>, vector<1x1x32xf32>
    %c0_30 = arith.constant 0 : index
    %c0_31 = arith.constant 0 : index
    %c0_32 = arith.constant 0 : index
    %54 = vector.load %arg6[%c0_30, %c0_31, %c0_32] : memref<1x1x32xf32, #tpu.memory_space<vmem>>, vector<1x1x32xf32>
    %55 = arith.mulf %52, %53 : vector<1x1x32xf32>
    %56 = arith.mulf %22, %55 : vector<1x1x32xf32>
    %57 = arith.subf %54, %56 : vector<1x1x32xf32>
    %58 = vector.broadcast %55 : vector<1x1x32xf32> to vector<8x8x32xf32>
    %59 = arith.mulf %1, %58 : vector<8x8x32xf32>
    %60 = vector.broadcast %57 : vector<1x1x32xf32> to vector<8x8x32xf32>
    %61 = arith.addf %59, %60 : vector<8x8x32xf32>
    %cst_33 = arith.constant 0.000000e+00 : f32
    %62 = vector.broadcast %cst_33 : f32 to vector<8x8x32xf32>
    %63 = arith.cmpf ogt, %61, %62 : vector<8x8x32xf32>
    %cst_34 = arith.constant 2.000000e-01 : f32
    %64 = vector.broadcast %cst_34 : f32 to vector<8x8x32xf32>
    %65 = arith.mulf %64, %61 : vector<8x8x32xf32>
    %66 = arith.select %63, %61, %65 : vector<8x8x32xi1>, vector<8x8x32xf32>
    %67 = vector.broadcast %55 : vector<1x1x32xf32> to vector<8x8x32xf32>
    %68 = arith.mulf %3, %67 : vector<8x8x32xf32>
    %69 = vector.broadcast %57 : vector<1x1x32xf32> to vector<8x8x32xf32>
    %70 = arith.addf %68, %69 : vector<8x8x32xf32>
    %cst_35 = arith.constant 0.000000e+00 : f32
    %71 = vector.broadcast %cst_35 : f32 to vector<8x8x32xf32>
    %72 = arith.cmpf ogt, %70, %71 : vector<8x8x32xf32>
    %cst_36 = arith.constant 2.000000e-01 : f32
    %73 = vector.broadcast %cst_36 : f32 to vector<8x8x32xf32>
    %74 = arith.mulf %73, %70 : vector<8x8x32xf32>
    %75 = arith.select %72, %70, %74 : vector<8x8x32xi1>, vector<8x8x32xf32>
    %76 = arith.addf %66, %75 : vector<8x8x32xf32>
    %77 = vector.broadcast %55 : vector<1x1x32xf32> to vector<8x8x32xf32>
    %78 = arith.mulf %5, %77 : vector<8x8x32xf32>
    %79 = vector.broadcast %57 : vector<1x1x32xf32> to vector<8x8x32xf32>
    %80 = arith.addf %78, %79 : vector<8x8x32xf32>
    %cst_37 = arith.constant 0.000000e+00 : f32
    %81 = vector.broadcast %cst_37 : f32 to vector<8x8x32xf32>
    %82 = arith.cmpf ogt, %80, %81 : vector<8x8x32xf32>
    %cst_38 = arith.constant 2.000000e-01 : f32
    %83 = vector.broadcast %cst_38 : f32 to vector<8x8x32xf32>
    %84 = arith.mulf %83, %80 : vector<8x8x32xf32>
    %85 = arith.select %82, %80, %84 : vector<8x8x32xi1>, vector<8x8x32xf32>
    %86 = arith.addf %76, %85 : vector<8x8x32xf32>
    %87 = vector.broadcast %55 : vector<1x1x32xf32> to vector<8x8x32xf32>
    %88 = arith.mulf %7, %87 : vector<8x8x32xf32>
    %89 = vector.broadcast %57 : vector<1x1x32xf32> to vector<8x8x32xf32>
    %90 = arith.addf %88, %89 : vector<8x8x32xf32>
    %cst_39 = arith.constant 0.000000e+00 : f32
    %91 = vector.broadcast %cst_39 : f32 to vector<8x8x32xf32>
    %92 = arith.cmpf ogt, %90, %91 : vector<8x8x32xf32>
    %cst_40 = arith.constant 2.000000e-01 : f32
    %93 = vector.broadcast %cst_40 : f32 to vector<8x8x32xf32>
    %94 = arith.mulf %93, %90 : vector<8x8x32xf32>
    %95 = arith.select %92, %90, %94 : vector<8x8x32xi1>, vector<8x8x32xf32>
    %96 = arith.addf %86, %95 : vector<8x8x32xf32>
    %cst_41 = arith.constant 2.500000e-01 : f32
    %97 = vector.broadcast %cst_41 : f32 to vector<8x8x32xf32>
    %98 = arith.mulf %97, %96 : vector<8x8x32xf32>
    %99 = arith.addf %1, %3 : vector<8x8x32xf32>
    %100 = arith.addf %99, %5 : vector<8x8x32xf32>
    %101 = arith.addf %100, %7 : vector<8x8x32xf32>
    %cst_42 = arith.constant 2.500000e-01 : f32
    %102 = vector.broadcast %cst_42 : f32 to vector<8x8x32xf32>
    %103 = arith.mulf %102, %101 : vector<8x8x32xf32>
    %c0_43 = arith.constant 0 : index
    %c0_44 = arith.constant 0 : index
    %c0_45 = arith.constant 0 : index
    %c0_46 = arith.constant 0 : index
    %104 = vector.load %arg8[%c0_43, %c0_44, %c0_45, %c0_46] : memref<1x8x8x32xf32, #tpu.memory_space<vmem>>, vector<1x8x8x32xf32>
    %105 = vector.shape_cast %104 : vector<1x8x8x32xf32> to vector<8x8x32xf32>
    %106 = vector.shape_cast %103 : vector<8x8x32xf32> to vector<1x8x8x32xf32>
    tpu.vector_store %arg8[%c0_43, %c0_44, %c0_45, %c0_46], %106 {strides = array<i32>} : memref<1x8x8x32xf32, #tpu.memory_space<vmem>>, vector<1x8x8x32xf32>,
    %107 = arith.truncf %98 : vector<8x8x32xf32> to vector<8x8x32xbf16>
    %cst_47 = arith.constant 0.000000e+00 : bf16
    %108 = vector.broadcast %cst_47 : bf16 to vector<1x10x32xbf16>
    %cst_48 = arith.constant 0.000000e+00 : bf16
    %109 = vector.broadcast %cst_48 : bf16 to vector<8x1x32xbf16>
    %c0_49 = arith.constant 0 : index
    %c0_50 = arith.constant 0 : index
    %c0_51 = arith.constant 0 : index
    %c0_52 = arith.constant 0 : index
    %110 = vector.load %arg7[%c0_49, %c0_50, %c0_51, %c0_52] : memref<1x10x10x32xbf16, #tpu.memory_space<vmem>>, vector<1x1x10x32xbf16>
    %111 = vector.shape_cast %110 : vector<1x1x10x32xbf16> to vector<1x10x32xbf16>
    %112 = vector.shape_cast %108 : vector<1x10x32xbf16> to vector<1x1x10x32xbf16>
    tpu.vector_store %arg7[%c0_49, %c0_50, %c0_51, %c0_52], %112 {strides = array<i32>} : memref<1x10x10x32xbf16, #tpu.memory_space<vmem>>, vector<1x1x10x32xbf16>,
    %c0_53 = arith.constant 0 : index
    %c9 = arith.constant 9 : index
    %c0_54 = arith.constant 0 : index
    %c0_55 = arith.constant 0 : index
    %113 = vector.load %arg7[%c0_53, %c9, %c0_54, %c0_55] : memref<1x10x10x32xbf16, #tpu.memory_space<vmem>>, vector<1x1x10x32xbf16>
    %114 = vector.shape_cast %113 : vector<1x1x10x32xbf16> to vector<1x10x32xbf16>
    %115 = vector.shape_cast %108 : vector<1x10x32xbf16> to vector<1x1x10x32xbf16>
    tpu.vector_store %arg7[%c0_53, %c9, %c0_54, %c0_55], %115 {strides = array<i32>} : memref<1x10x10x32xbf16, #tpu.memory_space<vmem>>, vector<1x1x10x32xbf16>,
    %c0_56 = arith.constant 0 : index
    %c1 = arith.constant 1 : index
    %c0_57 = arith.constant 0 : index
    %c0_58 = arith.constant 0 : index
    %116 = vector.load %arg7[%c0_56, %c1, %c0_57, %c0_58] : memref<1x10x10x32xbf16, #tpu.memory_space<vmem>>, vector<1x8x1x32xbf16>
    %117 = vector.shape_cast %116 : vector<1x8x1x32xbf16> to vector<8x1x32xbf16>
    %118 = vector.shape_cast %109 : vector<8x1x32xbf16> to vector<1x8x1x32xbf16>
    tpu.vector_store %arg7[%c0_56, %c1, %c0_57, %c0_58], %118 {strides = array<i32>} : memref<1x10x10x32xbf16, #tpu.memory_space<vmem>>, vector<1x8x1x32xbf16>,
    %c0_59 = arith.constant 0 : index
    %c1_60 = arith.constant 1 : index
    %c9_61 = arith.constant 9 : index
    %c0_62 = arith.constant 0 : index
    %119 = vector.load %arg7[%c0_59, %c1_60, %c9_61, %c0_62] : memref<1x10x10x32xbf16, #tpu.memory_space<vmem>>, vector<1x8x1x32xbf16>
    %120 = vector.shape_cast %119 : vector<1x8x1x32xbf16> to vector<8x1x32xbf16>
    %121 = vector.shape_cast %109 : vector<8x1x32xbf16> to vector<1x8x1x32xbf16>
    tpu.vector_store %arg7[%c0_59, %c1_60, %c9_61, %c0_62], %121 {strides = array<i32>} : memref<1x10x10x32xbf16, #tpu.memory_space<vmem>>, vector<1x8x1x32xbf16>,
    %c0_63 = arith.constant 0 : index
    %c1_64 = arith.constant 1 : index
    %c1_65 = arith.constant 1 : index
    %c0_66 = arith.constant 0 : index
    %122 = vector.load %arg7[%c0_63, %c1_64, %c1_65, %c0_66] : memref<1x10x10x32xbf16, #tpu.memory_space<vmem>>, vector<1x8x8x32xbf16>
    %123 = vector.shape_cast %122 : vector<1x8x8x32xbf16> to vector<8x8x32xbf16>
    %124 = vector.shape_cast %107 : vector<8x8x32xbf16> to vector<1x8x8x32xbf16>
    tpu.vector_store %arg7[%c0_63, %c1_64, %c1_65, %c0_66], %124 {strides = array<i32>} : memref<1x10x10x32xbf16, #tpu.memory_space<vmem>>, vector<1x8x8x32xbf16>,
    return
  }
  func.func @transform_0(%arg0: i32) -> (i32, i32, i32, i32) {
    %c0_i32 = arith.constant 0 : i32
    %c0_i32_0 = arith.constant 0 : i32
    %c0_i32_1 = arith.constant 0 : i32
    %c0_i32_2 = arith.constant 0 : i32
    return %arg0, %c0_i32, %c0_i32_0, %c0_i32_1 : i32, i32, i32, i32
  }
  func.func @transform_1(%arg0: i32) -> (i32, i32, i32, i32) {
    %c0_i32 = arith.constant 0 : i32
    %c0_i32_0 = arith.constant 0 : i32
    %c0_i32_1 = arith.constant 0 : i32
    %c0_i32_2 = arith.constant 0 : i32
    return %arg0, %c0_i32, %c0_i32_0, %c0_i32_1 : i32, i32, i32, i32
  }
  func.func @transform_2(%arg0: i32) -> (i32, i32, i32, i32) {
    %c0_i32 = arith.constant 0 : i32
    %c0_i32_0 = arith.constant 0 : i32
    %c0_i32_1 = arith.constant 0 : i32
    %c0_i32_2 = arith.constant 0 : i32
    return %arg0, %c0_i32, %c0_i32_0, %c0_i32_1 : i32, i32, i32, i32
  }
  func.func @transform_3(%arg0: i32) -> (i32, i32, i32, i32) {
    %c0_i32 = arith.constant 0 : i32
    %c0_i32_0 = arith.constant 0 : i32
    %c0_i32_1 = arith.constant 0 : i32
    %c0_i32_2 = arith.constant 0 : i32
    return %arg0, %c0_i32, %c0_i32_0, %c0_i32_1 : i32, i32, i32, i32
  }
  func.func @transform_4(%arg0: i32) -> (i32, i32, i32) {
    %c0_i32 = arith.constant 0 : i32
    %c0_i32_0 = arith.constant 0 : i32
    %c0_i32_1 = arith.constant 0 : i32
    return %arg0, %c0_i32, %c0_i32_0 : i32, i32, i32
  }
  func.func @transform_5(%arg0: i32) -> (i32, i32, i32) {
    %c0_i32 = arith.constant 0 : i32
    %c0_i32_0 = arith.constant 0 : i32
    %c0_i32_1 = arith.constant 0 : i32
    return %arg0, %c0_i32, %c0_i32_0 : i32, i32, i32
  }
  func.func @transform_6(%arg0: i32) -> (i32, i32, i32, i32) {
    %c0_i32 = arith.constant 0 : i32
    %c0_i32_0 = arith.constant 0 : i32
    %c0_i32_1 = arith.constant 0 : i32
    %c0_i32_2 = arith.constant 0 : i32
    return %arg0, %c0_i32, %c0_i32_0, %c0_i32_1 : i32, i32, i32, i32
  }
  func.func @transform_7(%arg0: i32) -> (i32, i32, i32, i32) {
    %c0_i32 = arith.constant 0 : i32
    %c0_i32_0 = arith.constant 0 : i32
    %c0_i32_1 = arith.constant 0 : i32
    %c0_i32_2 = arith.constant 0 : i32
    return %arg0, %c0_i32, %c0_i32_0, %c0_i32_1 : i32, i32, i32, i32
  }
}

module attributes {stable_mosaic.version = 11 : i64} {
  func.func @_conv3x3_norm_act_pad_kernel(%arg0: i32, %arg1: memref<1x10x10x32xbf16, #tpu.memory_space<vmem>>, %arg2: memref<288x32xbf16, #tpu.memory_space<vmem>>, %arg3: memref<1x32xf32, #tpu.memory_space<vmem>>, %arg4: memref<1x1x32xf32, #tpu.memory_space<vmem>>, %arg5: memref<1x1x32xf32, #tpu.memory_space<vmem>>, %arg6: memref<1x10x10x32xbf16, #tpu.memory_space<vmem>>) attributes {dimension_semantics = [#tpu.dimension_semantics<parallel>], iteration_bounds = array<i64: 2>, scalar_prefetch = 0 : i64, scratch_operands = 0 : i64, tpu.core_type = #tpu.core_type<tc>, window_params = [{transform_indices = @transform_0, window_bounds = array<i64: 1, 10, 10, 32>}, {pipeline_mode = #tpu.pipeline_mode<synchronous>, transform_indices = @transform_1, window_bounds = array<i64: 288, 32>}, {pipeline_mode = #tpu.pipeline_mode<synchronous>, transform_indices = @transform_2, window_bounds = array<i64: 1, 32>}, {transform_indices = @transform_3, window_bounds = array<i64: 1, 1, 32>}, {transform_indices = @transform_4, window_bounds = array<i64: 1, 1, 32>}, {transform_indices = @transform_5, window_bounds = array<i64: 1, 10, 10, 32>}]} {
    %c0 = arith.constant 0 : index
    %c0_0 = arith.constant 0 : index
    %c0_1 = arith.constant 0 : index
    %c0_2 = arith.constant 0 : index
    %0 = vector.load %arg1[%c0, %c0_0, %c0_1, %c0_2] : memref<1x10x10x32xbf16, #tpu.memory_space<vmem>>, vector<1x10x10x32xbf16>
    %1 = vector.shape_cast %0 : vector<1x10x10x32xbf16> to vector<10x10x32xbf16>
    %2 = vector.extract_strided_slice %1 {offsets = [0, 0, 0], sizes = [8, 10, 32], strides = [1, 1, 1]} : vector<10x10x32xbf16> to vector<8x10x32xbf16>
    %3 = vector.extract_strided_slice %2 {offsets = [0, 0, 0], sizes = [8, 8, 32], strides = [1, 1, 1]} : vector<8x10x32xbf16> to vector<8x8x32xbf16>
    %4 = vector.shape_cast %3 : vector<8x8x32xbf16> to vector<64x32xbf16>
    %5 = vector.extract_strided_slice %2 {offsets = [0, 1, 0], sizes = [8, 8, 32], strides = [1, 1, 1]} : vector<8x10x32xbf16> to vector<8x8x32xbf16>
    %6 = vector.shape_cast %5 : vector<8x8x32xbf16> to vector<64x32xbf16>
    %7 = vector.extract_strided_slice %2 {offsets = [0, 2, 0], sizes = [8, 8, 32], strides = [1, 1, 1]} : vector<8x10x32xbf16> to vector<8x8x32xbf16>
    %8 = vector.shape_cast %7 : vector<8x8x32xbf16> to vector<64x32xbf16>
    %9 = vector.extract_strided_slice %1 {offsets = [1, 0, 0], sizes = [8, 10, 32], strides = [1, 1, 1]} : vector<10x10x32xbf16> to vector<8x10x32xbf16>
    %10 = vector.extract_strided_slice %9 {offsets = [0, 0, 0], sizes = [8, 8, 32], strides = [1, 1, 1]} : vector<8x10x32xbf16> to vector<8x8x32xbf16>
    %11 = vector.shape_cast %10 : vector<8x8x32xbf16> to vector<64x32xbf16>
    %12 = vector.extract_strided_slice %9 {offsets = [0, 1, 0], sizes = [8, 8, 32], strides = [1, 1, 1]} : vector<8x10x32xbf16> to vector<8x8x32xbf16>
    %13 = vector.shape_cast %12 : vector<8x8x32xbf16> to vector<64x32xbf16>
    %14 = vector.extract_strided_slice %9 {offsets = [0, 2, 0], sizes = [8, 8, 32], strides = [1, 1, 1]} : vector<8x10x32xbf16> to vector<8x8x32xbf16>
    %15 = vector.shape_cast %14 : vector<8x8x32xbf16> to vector<64x32xbf16>
    %16 = vector.extract_strided_slice %1 {offsets = [2, 0, 0], sizes = [8, 10, 32], strides = [1, 1, 1]} : vector<10x10x32xbf16> to vector<8x10x32xbf16>
    %17 = vector.extract_strided_slice %16 {offsets = [0, 0, 0], sizes = [8, 8, 32], strides = [1, 1, 1]} : vector<8x10x32xbf16> to vector<8x8x32xbf16>
    %18 = vector.shape_cast %17 : vector<8x8x32xbf16> to vector<64x32xbf16>
    %19 = vector.extract_strided_slice %16 {offsets = [0, 1, 0], sizes = [8, 8, 32], strides = [1, 1, 1]} : vector<8x10x32xbf16> to vector<8x8x32xbf16>
    %20 = vector.shape_cast %19 : vector<8x8x32xbf16> to vector<64x32xbf16>
    %21 = vector.extract_strided_slice %16 {offsets = [0, 2, 0], sizes = [8, 8, 32], strides = [1, 1, 1]} : vector<8x10x32xbf16> to vector<8x8x32xbf16>
    %22 = vector.shape_cast %21 : vector<8x8x32xbf16> to vector<64x32xbf16>
    %23 = tpu.concatenate %4, %6, %8, %11, %13, %15, %18, %20, %22 in 1 : vector<64x32xbf16>, vector<64x32xbf16>, vector<64x32xbf16>, vector<64x32xbf16>, vector<64x32xbf16>, vector<64x32xbf16>, vector<64x32xbf16>, vector<64x32xbf16>, vector<64x32xbf16> -> vector<64x288xbf16>
    %c0_3 = arith.constant 0 : index
    %c0_4 = arith.constant 0 : index
    %24 = vector.load %arg2[%c0_3, %c0_4] : memref<288x32xbf16, #tpu.memory_space<vmem>>, vector<288x32xbf16>
    %cst = arith.constant dense<0.000000e+00> : vector<64x32xf32>
    %25 = tpu.matmul %23, %24, %cst {dimension_numbers = #tpu.dot_dimension_numbers<[1], [0], [0], [1], [0, 0, 1, 1], [], []>} : vector<64x288xbf16>, vector<288x32xbf16>, vector<64x32xf32> -> vector<64x32xf32>
    %c0_5 = arith.constant 0 : index
    %c0_6 = arith.constant 0 : index
    %26 = vector.load %arg3[%c0_5, %c0_6] : memref<1x32xf32, #tpu.memory_space<vmem>>, vector<1x32xf32>
    %27 = vector.broadcast %26 : vector<1x32xf32> to vector<64x32xf32>
    %28 = arith.addf %25, %27 : vector<64x32xf32>
    %cst_7 = arith.constant dense<0.000000e+00> : vector<32xf32>
    %29 = vector.multi_reduction <add>, %28, %cst_7 [0] : vector<64x32xf32> to vector<32xf32>
    %30 = vector.shape_cast %29 : vector<32xf32> to vector<1x32xf32>
    %cst_8 = arith.constant 6.400000e+01 : f32
    %31 = vector.broadcast %cst_8 : f32 to vector<1x32xf32>
    %32 = arith.divf %30, %31 : vector<1x32xf32>
    %33 = vector.broadcast %32 : vector<1x32xf32> to vector<64x32xf32>
    %34 = arith.subf %28, %33 : vector<64x32xf32>
    %35 = arith.mulf %34, %34 : vector<64x32xf32>
    %cst_9 = arith.constant dense<0.000000e+00> : vector<32xf32>
    %36 = vector.multi_reduction <add>, %35, %cst_9 [0] : vector<64x32xf32> to vector<32xf32>
    %37 = vector.shape_cast %36 : vector<32xf32> to vector<1x32xf32>
    %cst_10 = arith.constant 6.400000e+01 : f32
    %38 = vector.broadcast %cst_10 : f32 to vector<1x32xf32>
    %39 = arith.divf %37, %38 : vector<1x32xf32>
    %cst_11 = arith.constant 9.99999974E-6 : f32
    %40 = vector.broadcast %cst_11 : f32 to vector<1x32xf32>
    %41 = arith.addf %39, %40 : vector<1x32xf32>
    %42 = math.rsqrt %41 : vector<1x32xf32>
    %c0_12 = arith.constant 0 : index
    %c0_13 = arith.constant 0 : index
    %c0_14 = arith.constant 0 : index
    %43 = vector.load %arg4[%c0_12, %c0_13, %c0_14] : memref<1x1x32xf32, #tpu.memory_space<vmem>>, vector<1x1x32xf32>
    %44 = vector.shape_cast %43 : vector<1x1x32xf32> to vector<1x32xf32>
    %45 = arith.mulf %42, %44 : vector<1x32xf32>
    %c0_15 = arith.constant 0 : index
    %c0_16 = arith.constant 0 : index
    %c0_17 = arith.constant 0 : index
    %46 = vector.load %arg5[%c0_15, %c0_16, %c0_17] : memref<1x1x32xf32, #tpu.memory_space<vmem>>, vector<1x1x32xf32>
    %47 = vector.shape_cast %46 : vector<1x1x32xf32> to vector<1x32xf32>
    %48 = arith.mulf %32, %45 : vector<1x32xf32>
    %49 = arith.subf %47, %48 : vector<1x32xf32>
    %50 = vector.broadcast %45 : vector<1x32xf32> to vector<64x32xf32>
    %51 = arith.mulf %28, %50 : vector<64x32xf32>
    %52 = vector.broadcast %49 : vector<1x32xf32> to vector<64x32xf32>
    %53 = arith.addf %51, %52 : vector<64x32xf32>
    %cst_18 = arith.constant 0.000000e+00 : f32
    %54 = vector.broadcast %cst_18 : f32 to vector<64x32xf32>
    %55 = arith.cmpf ogt, %53, %54 : vector<64x32xf32>
    %cst_19 = arith.constant 2.000000e-01 : f32
    %56 = vector.broadcast %cst_19 : f32 to vector<64x32xf32>
    %57 = arith.mulf %56, %53 : vector<64x32xf32>
    %58 = arith.select %55, %53, %57 : vector<64x32xi1>, vector<64x32xf32>
    %59 = vector.shape_cast %58 : vector<64x32xf32> to vector<8x8x32xf32>
    %60 = arith.truncf %59 : vector<8x8x32xf32> to vector<8x8x32xbf16>
    %cst_20 = arith.constant 0.000000e+00 : bf16
    %61 = vector.broadcast %cst_20 : bf16 to vector<1x10x32xbf16>
    %cst_21 = arith.constant 0.000000e+00 : bf16
    %62 = vector.broadcast %cst_21 : bf16 to vector<8x1x32xbf16>
    %c0_22 = arith.constant 0 : index
    %c0_23 = arith.constant 0 : index
    %c0_24 = arith.constant 0 : index
    %c0_25 = arith.constant 0 : index
    %63 = vector.load %arg6[%c0_22, %c0_23, %c0_24, %c0_25] : memref<1x10x10x32xbf16, #tpu.memory_space<vmem>>, vector<1x1x10x32xbf16>
    %64 = vector.shape_cast %63 : vector<1x1x10x32xbf16> to vector<1x10x32xbf16>
    %65 = vector.shape_cast %61 : vector<1x10x32xbf16> to vector<1x1x10x32xbf16>
    tpu.vector_store %arg6[%c0_22, %c0_23, %c0_24, %c0_25], %65 {strides = array<i32>} : memref<1x10x10x32xbf16, #tpu.memory_space<vmem>>, vector<1x1x10x32xbf16>,
    %c0_26 = arith.constant 0 : index
    %c9 = arith.constant 9 : index
    %c0_27 = arith.constant 0 : index
    %c0_28 = arith.constant 0 : index
    %66 = vector.load %arg6[%c0_26, %c9, %c0_27, %c0_28] : memref<1x10x10x32xbf16, #tpu.memory_space<vmem>>, vector<1x1x10x32xbf16>
    %67 = vector.shape_cast %66 : vector<1x1x10x32xbf16> to vector<1x10x32xbf16>
    %68 = vector.shape_cast %61 : vector<1x10x32xbf16> to vector<1x1x10x32xbf16>
    tpu.vector_store %arg6[%c0_26, %c9, %c0_27, %c0_28], %68 {strides = array<i32>} : memref<1x10x10x32xbf16, #tpu.memory_space<vmem>>, vector<1x1x10x32xbf16>,
    %c0_29 = arith.constant 0 : index
    %c1 = arith.constant 1 : index
    %c0_30 = arith.constant 0 : index
    %c0_31 = arith.constant 0 : index
    %69 = vector.load %arg6[%c0_29, %c1, %c0_30, %c0_31] : memref<1x10x10x32xbf16, #tpu.memory_space<vmem>>, vector<1x8x1x32xbf16>
    %70 = vector.shape_cast %69 : vector<1x8x1x32xbf16> to vector<8x1x32xbf16>
    %71 = vector.shape_cast %62 : vector<8x1x32xbf16> to vector<1x8x1x32xbf16>
    tpu.vector_store %arg6[%c0_29, %c1, %c0_30, %c0_31], %71 {strides = array<i32>} : memref<1x10x10x32xbf16, #tpu.memory_space<vmem>>, vector<1x8x1x32xbf16>,
    %c0_32 = arith.constant 0 : index
    %c1_33 = arith.constant 1 : index
    %c9_34 = arith.constant 9 : index
    %c0_35 = arith.constant 0 : index
    %72 = vector.load %arg6[%c0_32, %c1_33, %c9_34, %c0_35] : memref<1x10x10x32xbf16, #tpu.memory_space<vmem>>, vector<1x8x1x32xbf16>
    %73 = vector.shape_cast %72 : vector<1x8x1x32xbf16> to vector<8x1x32xbf16>
    %74 = vector.shape_cast %62 : vector<8x1x32xbf16> to vector<1x8x1x32xbf16>
    tpu.vector_store %arg6[%c0_32, %c1_33, %c9_34, %c0_35], %74 {strides = array<i32>} : memref<1x10x10x32xbf16, #tpu.memory_space<vmem>>, vector<1x8x1x32xbf16>,
    %c0_36 = arith.constant 0 : index
    %c1_37 = arith.constant 1 : index
    %c1_38 = arith.constant 1 : index
    %c0_39 = arith.constant 0 : index
    %75 = vector.load %arg6[%c0_36, %c1_37, %c1_38, %c0_39] : memref<1x10x10x32xbf16, #tpu.memory_space<vmem>>, vector<1x8x8x32xbf16>
    %76 = vector.shape_cast %75 : vector<1x8x8x32xbf16> to vector<8x8x32xbf16>
    %77 = vector.shape_cast %60 : vector<8x8x32xbf16> to vector<1x8x8x32xbf16>
    tpu.vector_store %arg6[%c0_36, %c1_37, %c1_38, %c0_39], %77 {strides = array<i32>} : memref<1x10x10x32xbf16, #tpu.memory_space<vmem>>, vector<1x8x8x32xbf16>,
    return
  }
  func.func @transform_0(%arg0: i32) -> (i32, i32, i32, i32) {
    %c0_i32 = arith.constant 0 : i32
    %c0_i32_0 = arith.constant 0 : i32
    %c0_i32_1 = arith.constant 0 : i32
    %c0_i32_2 = arith.constant 0 : i32
    return %arg0, %c0_i32, %c0_i32_0, %c0_i32_1 : i32, i32, i32, i32
  }
  func.func @transform_1(%arg0: i32) -> (i32, i32) {
    %c0_i32 = arith.constant 0 : i32
    %c0_i32_0 = arith.constant 0 : i32
    %c0_i32_1 = arith.constant 0 : i32
    return %c0_i32, %c0_i32_0 : i32, i32
  }
  func.func @transform_2(%arg0: i32) -> (i32, i32) {
    %c0_i32 = arith.constant 0 : i32
    %c0_i32_0 = arith.constant 0 : i32
    %c0_i32_1 = arith.constant 0 : i32
    return %c0_i32, %c0_i32_0 : i32, i32
  }
  func.func @transform_3(%arg0: i32) -> (i32, i32, i32) {
    %c0_i32 = arith.constant 0 : i32
    %c0_i32_0 = arith.constant 0 : i32
    %c0_i32_1 = arith.constant 0 : i32
    return %arg0, %c0_i32, %c0_i32_0 : i32, i32, i32
  }
  func.func @transform_4(%arg0: i32) -> (i32, i32, i32) {
    %c0_i32 = arith.constant 0 : i32
    %c0_i32_0 = arith.constant 0 : i32
    %c0_i32_1 = arith.constant 0 : i32
    return %arg0, %c0_i32, %c0_i32_0 : i32, i32, i32
  }
  func.func @transform_5(%arg0: i32) -> (i32, i32, i32, i32) {
    %c0_i32 = arith.constant 0 : i32
    %c0_i32_0 = arith.constant 0 : i32
    %c0_i32_1 = arith.constant 0 : i32
    %c0_i32_2 = arith.constant 0 : i32
    return %arg0, %c0_i32, %c0_i32_0, %c0_i32_1 : i32, i32, i32, i32
  }
}

module attributes {stable_mosaic.version = 11 : i64} {
  func.func @_conv3x3_res_kernel(%arg0: i32, %arg1: i32, %arg2: memref<1x10x10x32xbf16, #tpu.memory_space<vmem>>, %arg3: memref<288x64xbf16, #tpu.memory_space<vmem>>, %arg4: memref<1x64xf32, #tpu.memory_space<vmem>>, %arg5: memref<1x64x32xf32, #tpu.memory_space<vmem>>, %arg6: memref<32x64xbf16, #tpu.memory_space<vmem>>, %arg7: memref<1x64x64xf32, #tpu.memory_space<vmem>>) attributes {dimension_semantics = [#tpu.dimension_semantics<parallel>, #tpu.dimension_semantics<parallel>], iteration_bounds = array<i64: 2, 1>, scalar_prefetch = 0 : i64, scratch_operands = 0 : i64, tpu.core_type = #tpu.core_type<tc>, window_params = [{transform_indices = @transform_0, window_bounds = array<i64: 1, 10, 10, 32>}, {transform_indices = @transform_1, window_bounds = array<i64: 288, 64>}, {transform_indices = @transform_2, window_bounds = array<i64: 1, 64>}, {transform_indices = @transform_3, window_bounds = array<i64: 1, 64, 32>}, {transform_indices = @transform_4, window_bounds = array<i64: 32, 64>}, {transform_indices = @transform_5, window_bounds = array<i64: 1, 64, 64>}]} {
    %c0 = arith.constant 0 : index
    %c0_0 = arith.constant 0 : index
    %c0_1 = arith.constant 0 : index
    %c0_2 = arith.constant 0 : index
    %0 = vector.load %arg2[%c0, %c0_0, %c0_1, %c0_2] : memref<1x10x10x32xbf16, #tpu.memory_space<vmem>>, vector<1x10x10x32xbf16>
    %1 = vector.shape_cast %0 : vector<1x10x10x32xbf16> to vector<10x10x32xbf16>
    %2 = vector.extract_strided_slice %1 {offsets = [0, 0, 0], sizes = [8, 10, 32], strides = [1, 1, 1]} : vector<10x10x32xbf16> to vector<8x10x32xbf16>
    %3 = vector.extract_strided_slice %2 {offsets = [0, 0, 0], sizes = [8, 8, 32], strides = [1, 1, 1]} : vector<8x10x32xbf16> to vector<8x8x32xbf16>
    %4 = vector.shape_cast %3 : vector<8x8x32xbf16> to vector<64x32xbf16>
    %5 = vector.extract_strided_slice %2 {offsets = [0, 1, 0], sizes = [8, 8, 32], strides = [1, 1, 1]} : vector<8x10x32xbf16> to vector<8x8x32xbf16>
    %6 = vector.shape_cast %5 : vector<8x8x32xbf16> to vector<64x32xbf16>
    %7 = vector.extract_strided_slice %2 {offsets = [0, 2, 0], sizes = [8, 8, 32], strides = [1, 1, 1]} : vector<8x10x32xbf16> to vector<8x8x32xbf16>
    %8 = vector.shape_cast %7 : vector<8x8x32xbf16> to vector<64x32xbf16>
    %9 = vector.extract_strided_slice %1 {offsets = [1, 0, 0], sizes = [8, 10, 32], strides = [1, 1, 1]} : vector<10x10x32xbf16> to vector<8x10x32xbf16>
    %10 = vector.extract_strided_slice %9 {offsets = [0, 0, 0], sizes = [8, 8, 32], strides = [1, 1, 1]} : vector<8x10x32xbf16> to vector<8x8x32xbf16>
    %11 = vector.shape_cast %10 : vector<8x8x32xbf16> to vector<64x32xbf16>
    %12 = vector.extract_strided_slice %9 {offsets = [0, 1, 0], sizes = [8, 8, 32], strides = [1, 1, 1]} : vector<8x10x32xbf16> to vector<8x8x32xbf16>
    %13 = vector.shape_cast %12 : vector<8x8x32xbf16> to vector<64x32xbf16>
    %14 = vector.extract_strided_slice %9 {offsets = [0, 2, 0], sizes = [8, 8, 32], strides = [1, 1, 1]} : vector<8x10x32xbf16> to vector<8x8x32xbf16>
    %15 = vector.shape_cast %14 : vector<8x8x32xbf16> to vector<64x32xbf16>
    %16 = vector.extract_strided_slice %1 {offsets = [2, 0, 0], sizes = [8, 10, 32], strides = [1, 1, 1]} : vector<10x10x32xbf16> to vector<8x10x32xbf16>
    %17 = vector.extract_strided_slice %16 {offsets = [0, 0, 0], sizes = [8, 8, 32], strides = [1, 1, 1]} : vector<8x10x32xbf16> to vector<8x8x32xbf16>
    %18 = vector.shape_cast %17 : vector<8x8x32xbf16> to vector<64x32xbf16>
    %19 = vector.extract_strided_slice %16 {offsets = [0, 1, 0], sizes = [8, 8, 32], strides = [1, 1, 1]} : vector<8x10x32xbf16> to vector<8x8x32xbf16>
    %20 = vector.shape_cast %19 : vector<8x8x32xbf16> to vector<64x32xbf16>
    %21 = vector.extract_strided_slice %16 {offsets = [0, 2, 0], sizes = [8, 8, 32], strides = [1, 1, 1]} : vector<8x10x32xbf16> to vector<8x8x32xbf16>
    %22 = vector.shape_cast %21 : vector<8x8x32xbf16> to vector<64x32xbf16>
    %23 = tpu.concatenate %4, %6, %8, %11, %13, %15, %18, %20, %22 in 1 : vector<64x32xbf16>, vector<64x32xbf16>, vector<64x32xbf16>, vector<64x32xbf16>, vector<64x32xbf16>, vector<64x32xbf16>, vector<64x32xbf16>, vector<64x32xbf16>, vector<64x32xbf16> -> vector<64x288xbf16>
    %c0_3 = arith.constant 0 : index
    %c0_4 = arith.constant 0 : index
    %24 = vector.load %arg3[%c0_3, %c0_4] : memref<288x64xbf16, #tpu.memory_space<vmem>>, vector<288x64xbf16>
    %cst = arith.constant dense<0.000000e+00> : vector<64x64xf32>
    %25 = tpu.matmul %23, %24, %cst {dimension_numbers = #tpu.dot_dimension_numbers<[1], [0], [0], [1], [0, 0, 1, 1], [], []>} : vector<64x288xbf16>, vector<288x64xbf16>, vector<64x64xf32> -> vector<64x64xf32>
    %c0_5 = arith.constant 0 : index
    %c0_6 = arith.constant 0 : index
    %26 = vector.load %arg4[%c0_5, %c0_6] : memref<1x64xf32, #tpu.memory_space<vmem>>, vector<1x64xf32>
    %27 = vector.broadcast %26 : vector<1x64xf32> to vector<64x64xf32>
    %28 = arith.addf %25, %27 : vector<64x64xf32>
    %c0_7 = arith.constant 0 : index
    %c0_8 = arith.constant 0 : index
    %c0_9 = arith.constant 0 : index
    %29 = vector.load %arg5[%c0_7, %c0_8, %c0_9] : memref<1x64x32xf32, #tpu.memory_space<vmem>>, vector<1x64x32xf32>
    %30 = vector.shape_cast %29 : vector<1x64x32xf32> to vector<64x32xf32>
    %31 = arith.truncf %30 : vector<64x32xf32> to vector<64x32xbf16>
    %c0_10 = arith.constant 0 : index
    %c0_11 = arith.constant 0 : index
    %32 = vector.load %arg6[%c0_10, %c0_11] : memref<32x64xbf16, #tpu.memory_space<vmem>>, vector<32x64xbf16>
    %cst_12 = arith.constant dense<0.000000e+00> : vector<64x64xf32>
    %33 = tpu.matmul %31, %32, %cst_12 {dimension_numbers = #tpu.dot_dimension_numbers<[1], [0], [0], [1], [0, 0, 1, 1], [], []>} : vector<64x32xbf16>, vector<32x64xbf16>, vector<64x64xf32> -> vector<64x64xf32>
    %34 = arith.addf %28, %33 : vector<64x64xf32>
    %cst_13 = arith.constant 1.414210e+00 : f32
    %35 = vector.broadcast %cst_13 : f32 to vector<64x64xf32>
    %36 = arith.divf %34, %35 : vector<64x64xf32>
    %c0_14 = arith.constant 0 : index
    %c0_15 = arith.constant 0 : index
    %c0_16 = arith.constant 0 : index
    %37 = vector.load %arg7[%c0_14, %c0_15, %c0_16] : memref<1x64x64xf32, #tpu.memory_space<vmem>>, vector<1x64x64xf32>
    %38 = vector.shape_cast %37 : vector<1x64x64xf32> to vector<64x64xf32>
    %39 = vector.shape_cast %36 : vector<64x64xf32> to vector<1x64x64xf32>
    tpu.vector_store %arg7[%c0_14, %c0_15, %c0_16], %39 {strides = array<i32>} : memref<1x64x64xf32, #tpu.memory_space<vmem>>, vector<1x64x64xf32>,
    return
  }
  func.func @transform_0(%arg0: i32, %arg1: i32) -> (i32, i32, i32, i32) {
    %c0_i32 = arith.constant 0 : i32
    %c0_i32_0 = arith.constant 0 : i32
    %c0_i32_1 = arith.constant 0 : i32
    %c0_i32_2 = arith.constant 0 : i32
    return %arg0, %c0_i32, %c0_i32_0, %c0_i32_1 : i32, i32, i32, i32
  }
  func.func @transform_1(%arg0: i32, %arg1: i32) -> (i32, i32) {
    %c0_i32 = arith.constant 0 : i32
    %c0_i32_0 = arith.constant 0 : i32
    return %c0_i32, %arg1 : i32, i32
  }
  func.func @transform_2(%arg0: i32, %arg1: i32) -> (i32, i32) {
    %c0_i32 = arith.constant 0 : i32
    %c0_i32_0 = arith.constant 0 : i32
    return %c0_i32, %arg1 : i32, i32
  }
  func.func @transform_3(%arg0: i32, %arg1: i32) -> (i32, i32, i32) {
    %c0_i32 = arith.constant 0 : i32
    %c0_i32_0 = arith.constant 0 : i32
    %c0_i32_1 = arith.constant 0 : i32
    return %arg0, %c0_i32, %c0_i32_0 : i32, i32, i32
  }
  func.func @transform_4(%arg0: i32, %arg1: i32) -> (i32, i32) {
    %c0_i32 = arith.constant 0 : i32
    %c0_i32_0 = arith.constant 0 : i32
    return %c0_i32, %arg1 : i32, i32
  }
  func.func @transform_5(%arg0: i32, %arg1: i32) -> (i32, i32, i32) {
    %c0_i32 = arith.constant 0 : i32
    %c0_i32_0 = arith.constant 0 : i32
    return %arg0, %c0_i32, %arg1 : i32, i32, i32
  }
}

</mosaic_0001>

<llo_original>
// kernel: res_block_forward.3
$region0: #{res_block_forward.3}
  #allocation0 [shape = 'u32[]', space=smem, size = 0x4, offset = 0x4, fixed_abs, tag = 'smem constant byte address 0x4 - core index']
  #allocation1 [shape = 'u32[144,128]{1,0:T(1,128)}', space=vmem, size = 0x12000, scoped, tag = 'internal scratch']
  %s0 = inlined_call_operand.vmem [shape: f32[2,8,8,32], index: 0, kind: input, shape index: {}]
  %s1 = inlined_call_operand.vmem [shape: f32[2,8,8,32], index: 1, kind: input, shape index: {}]
  %s2 = inlined_call_operand.vmem [shape: f32[2,8,8,32], index: 2, kind: input, shape index: {}]
  %s3 = inlined_call_operand.vmem [shape: f32[2,8,8,32], index: 3, kind: input, shape index: {}]
  %s4 = inlined_call_operand.vmem [shape: f32[2,1,32], index: 4, kind: input, shape index: {}]
  %s5 = inlined_call_operand.vmem [shape: f32[2,1,32], index: 5, kind: input, shape index: {}]
  %s6 = inlined_call_operand.vmem [shape: bf16[2,10,10,32], index: 6, kind: output, shape index: {0}]
  %s7 = inlined_call_operand.vmem [shape: f32[2,8,8,32], index: 7, kind: output, shape index: {1}]
  %8 = xla_tuple %s6, %s7
  %s9 = sld [smem:[#allocation0]]
  $region65: #{res_block_forward.3} parent=0
    _
  %s11 = ssub.s32 1, %s9
  %s12 = scalar_select 0, %s11, %s9
  loop: start=0, step=1, limit=4
  $region2: #{res_block_forward.3} parent=0 // loop_pre_header
    _
  $region3: #{res_block_forward.3} parent=0 // loop_header
    %s14 = sphi 0, %s18
    %p15 = scmp.ge.s32.totalorder %s14, 4
    %s24 = sphi 0, %s26
    %s27 = sphi 0, %s24
    %s28 = sphi 0, %s27
    %s44 = sphi 0, %s28
    %s50 = sphi 0, %s52
    %s53 = sphi 0, %s50
    %s54 = sphi 0, %s53
    %s70 = sphi 0, %s54
    %s76 = sphi 0, %s78
    %s79 = sphi 0, %s76
    %s80 = sphi 0, %s79
    %s96 = sphi 0, %s80
    %s102 = sphi 0, %s104
    %s105 = sphi 0, %s102
    %s106 = sphi 0, %s105
    %s122 = sphi 0, %s106
    %s128 = sphi 0, %s130
    %s131 = sphi 0, %s128
    %s132 = sphi 0, %s131
    %s148 = sphi 0, %s132
    %s154 = sphi 0, %s156
    %s157 = sphi 0, %s154
    %s158 = sphi 0, %s157
    %s174 = sphi 0, %s158
    %s180 = sphi 0, %s182
    %s183 = sphi 0, %s180
    %s184 = sphi 0, %s183
    %s200 = sphi 0, %s184
    %s206 = sphi 0, %s208
    %s209 = sphi 0, %s206
    %s210 = sphi 0, %s209
    %s226 = sphi 0, %s210
  $region4: #{res_block_forward.3} parent=0 // loop_header_branch
    %17 = sbr.rel (%p15) target = $region8
  $region5: #{res_block_forward.3} parent=0 // loop_body
    %s19 = ssub.s32 %s14, 1
    %s20 = ssub.s32 %s14, 2
    %s21 = sadd.s32 %s14, 1
    %s22 = ssub.s32 %s14, %s21
    %p23 = scmp.eq.s32.totalorder %s22, 0
    %s25 = sadd.s32 %s24, 1
    %s26 = scalar_select %p23, %s24, %s25
    %p29 = pneg %p23
    %p30 = scmp.eq.s32.totalorder %s14, 1
    %p31 = por %p29, %p30
    %p32 = scmp.ne.s32.totalorder %s24, %s27
    %p33 = scmp.eq.s32.totalorder %s14, 0
    %p34 = por %p32, %p33
    %p35 = scmp.ne.s32.totalorder %s24, %s27
    %p36 = scmp.eq.s32.totalorder %s19, 1
    %p37 = por %p35, %p36
    %p38 = scmp.ne.s32.totalorder %s27, %s28
    %p39 = scmp.eq.s32.totalorder %s19, 0
    %p40 = por %p38, %p39
    %p41 = scmp.ne.s32.totalorder %s27, %s28
    %p42 = scmp.eq.s32.totalorder %s20, 1
    %p43 = por %p41, %p42
    %p45 = scmp.ne.s32.totalorder %s28, %s44
    %p46 = scmp.eq.s32.totalorder %s20, 0
    %p47 = por %p45, %p46
    %s48 = ssub.s32 %s14, %s21
    %p49 = scmp.eq.s32.totalorder %s48, 0
    %s51 = sadd.s32 %s50, 1
    %s52 = scalar_select %p49, %s50, %s51
    %p55 = pneg %p49
    %p56 = scmp.eq.s32.totalorder %s14, 1
    %p57 = por %p55, %p56
    %p58 = scmp.ne.s32.totalorder %s50, %s53
    %p59 = scmp.eq.s32.totalorder %s14, 0
    %p60 = por %p58, %p59
    %p61 = scmp.ne.s32.totalorder %s50, %s53
    %p62 = scmp.eq.s32.totalorder %s19, 1
    %p63 = por %p61, %p62
    %p64 = scmp.ne.s32.totalorder %s53, %s54
    %p65 = scmp.eq.s32.totalorder %s19, 0
    %p66 = por %p64, %p65
    %p67 = scmp.ne.s32.totalorder %s53, %s54
    %p68 = scmp.eq.s32.totalorder %s20, 1
    %p69 = por %p67, %p68
    %p71 = scmp.ne.s32.totalorder %s54, %s70
    %p72 = scmp.eq.s32.totalorder %s20, 0
    %p73 = por %p71, %p72
    %s74 = ssub.s32 %s14, %s21
    %p75 = scmp.eq.s32.totalorder %s74, 0
    %s77 = sadd.s32 %s76, 1
    %s78 = scalar_select %p75, %s76, %s77
    %p81 = pneg %p75
    %p82 = scmp.eq.s32.totalorder %s14, 1
    %p83 = por %p81, %p82
    %p84 = scmp.ne.s32.totalorder %s76, %s79
    %p85 = scmp.eq.s32.totalorder %s14, 0
    %p86 = por %p84, %p85
    %p87 = scmp.ne.s32.totalorder %s76, %s79
    %p88 = scmp.eq.s32.totalorder %s19, 1
    %p89 = por %p87, %p88
    %p90 = scmp.ne.s32.totalorder %s79, %s80
    %p91 = scmp.eq.s32.totalorder %s19, 0
    %p92 = por %p90, %p91
    %p93 = scmp.ne.s32.totalorder %s79, %s80
    %p94 = scmp.eq.s32.totalorder %s20, 1
    %p95 = por %p93, %p94
    %p97 = scmp.ne.s32.totalorder %s80, %s96
    %p98 = scmp.eq.s32.totalorder %s20, 0
    %p99 = por %p97, %p98
    %s100 = ssub.s32 %s14, %s21
    %p101 = scmp.eq.s32.totalorder %s100, 0
    %s103 = sadd.s32 %s102, 1
    %s104 = scalar_select %p101, %s102, %s103
    %p107 = pneg %p101
    %p108 = scmp.eq.s32.totalorder %s14, 1
    %p109 = por %p107, %p108
    %p110 = scmp.ne.s32.totalorder %s102, %s105
    %p111 = scmp.eq.s32.totalorder %s14, 0
    %p112 = por %p110, %p111
    %p113 = scmp.ne.s32.totalorder %s102, %s105
    %p114 = scmp.eq.s32.totalorder %s19, 1
    %p115 = por %p113, %p114
    %p116 = scmp.ne.s32.totalorder %s105, %s106
    %p117 = scmp.eq.s32.totalorder %s19, 0
    %p118 = por %p116, %p117
    %p119 = scmp.ne.s32.totalorder %s105, %s106
    %p120 = scmp.eq.s32.totalorder %s20, 1
    %p121 = por %p119, %p120
    %p123 = scmp.ne.s32.totalorder %s106, %s122
    %p124 = scmp.eq.s32.totalorder %s20, 0
    %p125 = por %p123, %p124
    %s126 = ssub.s32 %s14, %s21
    %p127 = scmp.eq.s32.totalorder %s126, 0
    %s129 = sadd.s32 %s128, 1
    %s130 = scalar_select %p127, %s128, %s129
    %p133 = pneg %p127
    %p134 = scmp.eq.s32.totalorder %s14, 1
    %p135 = por %p133, %p134
    %p136 = scmp.ne.s32.totalorder %s128, %s131
    %p137 = scmp.eq.s32.totalorder %s14, 0
    %p138 = por %p136, %p137
    %p139 = scmp.ne.s32.totalorder %s128, %s131
    %p140 = scmp.eq.s32.totalorder %s19, 1
    %p141 = por %p139, %p140
    %p142 = scmp.ne.s32.totalorder %s131, %s132
    %p143 = scmp.eq.s32.totalorder %s19, 0
    %p144 = por %p142, %p143
    %p145 = scmp.ne.s32.totalorder %s131, %s132
    %p146 = scmp.eq.s32.totalorder %s20, 1
    %p147 = por %p145, %p146
    %p149 = scmp.ne.s32.totalorder %s132, %s148
    %p150 = scmp.eq.s32.totalorder %s20, 0
    %p151 = por %p149, %p150
    %s152 = ssub.s32 %s14, %s21
    %p153 = scmp.eq.s32.totalorder %s152, 0
    %s155 = sadd.s32 %s154, 1
    %s156 = scalar_select %p153, %s154, %s155
    %p159 = pneg %p153
    %p160 = scmp.eq.s32.totalorder %s14, 1
    %p161 = por %p159, %p160
    %p162 = scmp.ne.s32.totalorder %s154, %s157
    %p163 = scmp.eq.s32.totalorder %s14, 0
    %p164 = por %p162, %p163
    %p165 = scmp.ne.s32.totalorder %s154, %s157
    %p166 = scmp.eq.s32.totalorder %s19, 1
    %p167 = por %p165, %p166
    %p168 = scmp.ne.s32.totalorder %s157, %s158
    %p169 = scmp.eq.s32.totalorder %s19, 0
    %p170 = por %p168, %p169
    %p171 = scmp.ne.s32.totalorder %s157, %s158
    %p172 = scmp.eq.s32.totalorder %s20, 1
    %p173 = por %p171, %p172
    %p175 = scmp.ne.s32.totalorder %s158, %s174
    %p176 = scmp.eq.s32.totalorder %s20, 0
    %p177 = por %p175, %p176
    %s178 = ssub.s32 %s14, %s21
    %p179 = scmp.eq.s32.totalorder %s178, 0
    %s181 = sadd.s32 %s180, 1
    %s182 = scalar_select %p179, %s180, %s181
    %p185 = pneg %p179
    %p186 = scmp.eq.s32.totalorder %s14, 1
    %p187 = por %p185, %p186
    %p188 = scmp.ne.s32.totalorder %s180, %s183
    %p189 = scmp.eq.s32.totalorder %s14, 0
    %p190 = por %p188, %p189
    %p191 = scmp.ne.s32.totalorder %s180, %s183
    %p192 = scmp.eq.s32.totalorder %s19, 1
    %p193 = por %p191, %p192
    %p194 = scmp.ne.s32.totalorder %s183, %s184
    %p195 = scmp.eq.s32.totalorder %s19, 0
    %p196 = por %p194, %p195
    %p197 = scmp.ne.s32.totalorder %s183, %s184
    %p198 = scmp.eq.s32.totalorder %s20, 1
    %p199 = por %p197, %p198
    %p201 = scmp.ne.s32.totalorder %s184, %s200
    %p202 = scmp.eq.s32.totalorder %s20, 0
    %p203 = por %p201, %p202
    %s204 = ssub.s32 %s14, %s21
    %p205 = scmp.eq.s32.totalorder %s204, 0
    %s207 = sadd.s32 %s206, 1
    %s208 = scalar_select %p205, %s206, %s207
    %p211 = pneg %p205
    %p212 = scmp.eq.s32.totalorder %s14, 1
    %p213 = por %p211, %p212
    %p214 = scmp.ne.s32.totalorder %s206, %s209
    %p215 = scmp.eq.s32.totalorder %s14, 0
    %p216 = por %p214, %p215
    %p217 = scmp.ne.s32.totalorder %s206, %s209
    %p218 = scmp.eq.s32.totalorder %s19, 1
    %p219 = por %p217, %p218
    %p220 = scmp.ne.s32.totalorder %s209, %s210
    %p221 = scmp.eq.s32.totalorder %s19, 0
    %p222 = por %p220, %p221
    %p223 = scmp.ne.s32.totalorder %s209, %s210
    %p224 = scmp.eq.s32.totalorder %s20, 1
    %p225 = por %p223, %p224
    %p227 = scmp.ne.s32.totalorder %s210, %s226
    %p228 = scmp.eq.s32.totalorder %s20, 0
    %p229 = por %p227, %p228
    %p230 = scmp.le.s32.totalorder 1, %s14
    %p231 = scmp.lt.s32.totalorder %s14, 3
    %p232 = pnand %p230, %p231
    %p233 = pneg %p232
    // Predicated region
    $region9: #{res_block_forward.3} parent=5 // pred_check
      _
    $region10: #{res_block_forward.3} parent=5 // pred_check_branch
      %235 = sbr.rel (%p232) target = $region12
    $region11: #{res_block_forward.3} parent=5 // pred_region
      %s236 = ssub.s32 %s14, 1
    $region12: #{res_block_forward.3} parent=5 // pred_fallthru
      _
    %p237 = scmp.lt.s32.totalorder %s14, 2
    // Predicated region
    $region13: #{res_block_forward.3} parent=5 // pred_check
      %p238 = pneg %p237
    $region14: #{res_block_forward.3} parent=5 // pred_check_branch
      %240 = sbr.rel (%p238) target = $region16
    $region15: #{res_block_forward.3} parent=5 // pred_region
      // Predicated region
      $region17: #{res_block_forward.3} parent=15 // pred_check
        %p241 = pneg %p34
      $region18: #{res_block_forward.3} parent=15 // pred_check_branch
        %243 = sbr.rel (%p241) target = $region20
      $region19: #{res_block_forward.3} parent=15 // pred_region
        %p244 = scmp.lt.s32.totalorder %s14, 1
        %s245 = scalar_select %p244, %s14, 1
        %s246 = smul.addr %s245, 8
        %s247 = smul.addr %s246, 8
        %s248 = scalar_lea.vmem %s0, %s247
      $region20: #{res_block_forward.3} parent=15 // pred_fallthru
        _
      // Predicated region
      $region21: #{res_block_forward.3} parent=15 // pred_check
        %p249 = pneg %p60
      $region22: #{res_block_forward.3} parent=15 // pred_check_branch
        %251 = sbr.rel (%p249) target = $region24
      $region23: #{res_block_forward.3} parent=15 // pred_region
        %p252 = scmp.lt.s32.totalorder %s14, 1
        %s253 = scalar_select %p252, %s14, 1
        %s254 = smul.addr %s253, 8
        %s255 = smul.addr %s254, 8
        %s256 = scalar_lea.vmem %s1, %s255
      $region24: #{res_block_forward.3} parent=15 // pred_fallthru
        _
      // Predicated region
      $region25: #{res_block_forward.3} parent=15 // pred_check
        %p257 = pneg %p86
      $region26: #{res_block_forward.3} parent=15 // pred_check_branch
        %259 = sbr.rel (%p257) target = $region28
      $region27: #{res_block_forward.3} parent=15 // pred_region
        %p260 = scmp.lt.s32.totalorder %s14, 1
        %s261 = scalar_select %p260, %s14, 1
        %s262 = smul.addr %s261, 8
        %s263 = smul.addr %s262, 8
        %s264 = scalar_lea.vmem %s2, %s263
      $region28: #{res_block_forward.3} parent=15 // pred_fallthru
        _
      // Predicated region
      $region29: #{res_block_forward.3} parent=15 // pred_check
        %p265 = pneg %p112
      $region30: #{res_block_forward.3} parent=15 // pred_check_branch
        %267 = sbr.rel (%p265) target = $region32
      $region31: #{res_block_forward.3} parent=15 // pred_region
        %p268 = scmp.lt.s32.totalorder %s14, 1
        %s269 = scalar_select %p268, %s14, 1
        %s270 = smul.addr %s269, 8
        %s271 = smul.addr %s270, 8
        %s272 = scalar_lea.vmem %s3, %s271
      $region32: #{res_block_forward.3} parent=15 // pred_fallthru
        _
      // Predicated region
      $region33: #{res_block_forward.3} parent=15 // pred_check
        %p273 = pneg %p138
      $region34: #{res_block_forward.3} parent=15 // pred_check_branch
        %275 = sbr.rel (%p273) target = $region36
      $region35: #{res_block_forward.3} parent=15 // pred_region
        %p276 = scmp.lt.s32.totalorder %s14, 1
        %s277 = scalar_select %p276, %s14, 1
        %s278 = scalar_lea.vmem %s4, %s277
      $region36: #{res_block_forward.3} parent=15 // pred_fallthru
        _
      // Predicated region
      $region37: #{res_block_forward.3} parent=15 // pred_check
        %p279 = pneg %p164
      $region38: #{res_block_forward.3} parent=15 // pred_check_branch
        %281 = sbr.rel (%p279) target = $region40
      $region39: #{res_block_forward.3} parent=15 // pred_region
        %p282 = scmp.lt.s32.totalorder %s14, 1
        %s283 = scalar_select %p282, %s14, 1
        %s284 = scalar_lea.vmem %s5, %s283
      $region40: #{res_block_forward.3} parent=15 // pred_fallthru
        _
    $region16: #{res_block_forward.3} parent=5 // pred_fallthru
      _
    %p285 = scmp.le.s32.totalorder 1, %s14
    %p286 = scmp.lt.s32.totalorder %s14, 3
    %p287 = pnand %p285, %p286
    %p288 = pneg %p287
    // Predicated region
    $region41: #{res_block_forward.3} parent=5 // pred_check
      _
    $region42: #{res_block_forward.3} parent=5 // pred_check_branch
      %290 = sbr.rel (%p287) target = $region44
    $region43: #{res_block_forward.3} parent=5 // pred_region
      %s291 = ssub.s32 %s14, 1
      %p292 = scmp.lt.s32.totalorder %s19, 1
      %s293 = scalar_select %p292, %s19, 1
      %s294 = smul.addr %s293, 8
      %s295 = smul.addr %s294, 8
      %s296 = scalar_lea.vmem %s0, %s295
      %p297 = pneg %p40
      %p298 = pneg %p37
      %p299 = scmp.lt.s32.totalorder %s19, 1
      %s300 = scalar_select %p299, %s19, 1
      %s301 = smul.addr %s300, 8
      %s302 = smul.addr %s301, 8
      %s303 = scalar_lea.vmem %s1, %s302
      %p304 = pneg %p66
      %p305 = pneg %p63
      %p306 = scmp.lt.s32.totalorder %s19, 1
      %s307 = scalar_select %p306, %s19, 1
      %s308 = smul.addr %s307, 8
      %s309 = smul.addr %s308, 8
      %s310 = scalar_lea.vmem %s2, %s309
      %p311 = pneg %p92
      %p312 = pneg %p89
      %p313 = scmp.lt.s32.totalorder %s19, 1
      %s314 = scalar_select %p313, %s19, 1
      %s315 = smul.addr %s314, 8
      %s316 = smul.addr %s315, 8
      %s317 = scalar_lea.vmem %s3, %s316
      %p318 = pneg %p118
      %p319 = pneg %p115
      %p320 = scmp.lt.s32.totalorder %s19, 1
      %s321 = scalar_select %p320, %s19, 1
      %s322 = scalar_lea.vmem %s4, %s321
      %p323 = pneg %p144
      %p324 = pneg %p141
      %p325 = scmp.lt.s32.totalorder %s19, 1
      %s326 = scalar_select %p325, %s19, 1
      %s327 = scalar_lea.vmem %s5, %s326
      %p328 = pneg %p170
      %p329 = pneg %p167
      %p330 = pneg %p196
      %p331 = pneg %p193
      %p332 = scmp.lt.s32.totalorder %s19, 1
      %s333 = scalar_select %p332, %s19, 1
      %s334 = smul.addr %s333, 20
      %s335 = smul.addr %s334, 4
      %s336 = scalar_lea.vmem %s6, %s335
      %p337 = pneg %p222
      %p338 = pneg %p219
      %p339 = scmp.lt.s32.totalorder %s19, 1
      %s340 = scalar_select %p339, %s19, 1
      %s341 = smul.addr %s340, 8
      %s342 = smul.addr %s341, 8
      %s343 = scalar_lea.vmem %s7, %s342
      %p344 = scmp.lt.s32.totalorder %s19, 1
      %s345 = scalar_select %p344, %s19, 1
      %s346 = smul.addr %s345, 8
      %s347 = smul.addr %s346, 8
      %s348 = scalar_lea.vmem %s0, %s347
      %p349 = scmp.lt.s32.totalorder %s19, 1
      %s350 = scalar_select %p349, %s19, 1
      %s351 = smul.addr %s350, 8
      %s352 = smul.addr %s351, 8
      %s353 = scalar_lea.vmem %s1, %s352
      %p354 = scmp.lt.s32.totalorder %s19, 1
      %s355 = scalar_select %p354, %s19, 1
      %s356 = smul.addr %s355, 8
      %s357 = smul.addr %s356, 8
      %s358 = scalar_lea.vmem %s2, %s357
      %p359 = scmp.lt.s32.totalorder %s19, 1
      %s360 = scalar_select %p359, %s19, 1
      %s361 = smul.addr %s360, 8
      %s362 = smul.addr %s361, 8
      %s363 = scalar_lea.vmem %s3, %s362
      %p364 = scmp.lt.s32.totalorder %s19, 1
      %s365 = scalar_select %p364, %s19, 1
      %s366 = scalar_lea.vmem %s4, %s365
      %p367 = scmp.lt.s32.totalorder %s19, 1
      %s368 = scalar_select %p367, %s19, 1
      %s369 = scalar_lea.vmem %s5, %s368
      %p370 = scmp.lt.s32.totalorder %s19, 1
      %s371 = scalar_select %p370, %s19, 1
      %s372 = smul.addr %s371, 20
      %s373 = smul.addr %s372, 4
      %s374 = scalar_lea.vmem %s6, %s373
      %p375 = scmp.lt.s32.totalorder %s19, 1
      %s376 = scalar_select %p375, %s19, 1
      %s377 = smul.addr %s376, 8
      %s378 = smul.addr %s377, 8
      %s379 = scalar_lea.vmem %s7, %s378
      %v381 = vld [vmem:[%s348] sm:$0xff]
      %v382 = vld [vmem:[%s348 + $0x8] sm:$0xff]
      %v383 = vld [vmem:[%s348 + $0x10] sm:$0xff]
      %v384 = vld [vmem:[%s348 + $0x18] sm:$0xff]
      %v385 = vld [vmem:[%s348 + $0x20] sm:$0xff]
      %v386 = vld [vmem:[%s348 + $0x28] sm:$0xff]
      %v387 = vld [vmem:[%s348 + $0x30] sm:$0xff]
      %v388 = vld [vmem:[%s348 + $0x38] sm:$0xff]
      %v389 = vld [vmem:[%s353] sm:$0xff]
      %v390 = vld [vmem:[%s353 + $0x8] sm:$0xff]
      %v391 = vld [vmem:[%s353 + $0x10] sm:$0xff]
      %v392 = vld [vmem:[%s353 + $0x18] sm:$0xff]
      %v393 = vld [vmem:[%s353 + $0x20] sm:$0xff]
      %v394 = vld [vmem:[%s353 + $0x28] sm:$0xff]
      %v395 = vld [vmem:[%s353 + $0x30] sm:$0xff]
      %v396 = vld [vmem:[%s353 + $0x38] sm:$0xff]
      %v397 = vld [vmem:[%s358] sm:$0xff]
      %v398 = vld [vmem:[%s358 + $0x8] sm:$0xff]
      %v399 = vld [vmem:[%s358 + $0x10] sm:$0xff]
      %v400 = vld [vmem:[%s358 + $0x18] sm:$0xff]
      %v401 = vld [vmem:[%s358 + $0x20] sm:$0xff]
      %v402 = vld [vmem:[%s358 + $0x28] sm:$0xff]
      %v403 = vld [vmem:[%s358 + $0x30] sm:$0xff]
      %v404 = vld [vmem:[%s358 + $0x38] sm:$0xff]
      %v405 = vld [vmem:[%s363] sm:$0xff]
      %v406 = vld [vmem:[%s363 + $0x8] sm:$0xff]
      %v407 = vld [vmem:[%s363 + $0x10] sm:$0xff]
      %v408 = vld [vmem:[%s363 + $0x18] sm:$0xff]
      %v409 = vld [vmem:[%s363 + $0x20] sm:$0xff]
      %v410 = vld [vmem:[%s363 + $0x28] sm:$0xff]
      %v411 = vld [vmem:[%s363 + $0x30] sm:$0xff]
      %v412 = vld [vmem:[%s363 + $0x38] sm:$0xff]
      %vm413 = vcmask 261120
      %v414 = vsel %vm413, %v381, 0.0
      %v415 = vsel %vm413, %v382, 0.0
      %v416 = vadd.f32 %v414, %v415
      %v417 = vsel %vm413, %v383, 0.0
      %v418 = vadd.f32 %v416, %v417
      %v419 = vsel %vm413, %v384, 0.0
      %v420 = vadd.f32 %v418, %v419
      %v421 = vsel %vm413, %v385, 0.0
      %v422 = vadd.f32 %v420, %v421
      %v423 = vsel %vm413, %v386, 0.0
      %v424 = vadd.f32 %v422, %v423
      %v425 = vsel %vm413, %v387, 0.0
      %v426 = vadd.f32 %v424, %v425
      %v427 = vsel %vm413, %v388, 0.0
      %v428 = vadd.f32 %v426, %v427
      %v429 = vrot.slane %v428, 4
      %v430 = vadd.f32 %v428, %v429
      %v431 = vrot.slane %v430, 2
      %v432 = vadd.f32 %v430, %v431
      %v433 = vrot.slane %v432, 1
      %v434 = vadd.f32 %v432, %v433
      %v435 = vadd.f32 %v434, 0.0
      %v436 = vsel %vm413, %v389, 0.0
      %v437 = vsel %vm413, %v390, 0.0
      %v438 = vadd.f32 %v436, %v437
      %v439 = vsel %vm413, %v391, 0.0
      %v440 = vadd.f32 %v438, %v439
      %v441 = vsel %vm413, %v392, 0.0
      %v442 = vadd.f32 %v440, %v441
      %v443 = vsel %vm413, %v393, 0.0
      %v444 = vadd.f32 %v442, %v443
      %v445 = vsel %vm413, %v394, 0.0
      %v446 = vadd.f32 %v444, %v445
      %v447 = vsel %vm413, %v395, 0.0
      %v448 = vadd.f32 %v446, %v447
      %v449 = vsel %vm413, %v396, 0.0
      %v450 = vadd.f32 %v448, %v449
      %v451 = vrot.slane %v450, 4
      %v452 = vadd.f32 %v450, %v451
      %v453 = vrot.slane %v452, 2
      %v454 = vadd.f32 %v452, %v453
      %v455 = vrot.slane %v454, 1
      %v456 = vadd.f32 %v454, %v455
      %v457 = vadd.f32 %v435, %v456
      %v458 = vsel %vm413, %v397, 0.0
      %v459 = vsel %vm413, %v398, 0.0
      %v460 = vadd.f32 %v458, %v459
      %v461 = vsel %vm413, %v399, 0.0
      %v462 = vadd.f32 %v460, %v461
      %v463 = vsel %vm413, %v400, 0.0
      %v464 = vadd.f32 %v462, %v463
      %v465 = vsel %vm413, %v401, 0.0
      %v466 = vadd.f32 %v464, %v465
      %v467 = vsel %vm413, %v402, 0.0
      %v468 = vadd.f32 %v466, %v467
      %v469 = vsel %vm413, %v403, 0.0
      %v470 = vadd.f32 %v468, %v469
      %v471 = vsel %vm413, %v404, 0.0
      %v472 = vadd.f32 %v470, %v471
      %v473 = vrot.slane %v472, 4
      %v474 = vadd.f32 %v472, %v473
      %v475 = vrot.slane %v474, 2
      %v476 = vadd.f32 %v474, %v475
      %v477 = vrot.slane %v476, 1
      %v478 = vadd.f32 %v476, %v477
      %v479 = vadd.f32 %v457, %v478
      %v480 = vsel %vm413, %v405, 0.0
      %v481 = vsel %vm413, %v406, 0.0
      %v482 = vadd.f32 %v480, %v481
      %v483 = vsel %vm413, %v407, 0.0
      %v484 = vadd.f32 %v482, %v483
      %v485 = vsel %vm413, %v408, 0.0
      %v486 = vadd.f32 %v484, %v485
      %v487 = vsel %vm413, %v409, 0.0
      %v488 = vadd.f32 %v486, %v487
      %v489 = vsel %vm413, %v410, 0.0
      %v490 = vadd.f32 %v488, %v489
      %v491 = vsel %vm413, %v411, 0.0
      %v492 = vadd.f32 %v490, %v491
      %v493 = vsel %vm413, %v412, 0.0
      %v494 = vadd.f32 %v492, %v493
      %v495 = vrot.slane %v494, 4
      %v496 = vadd.f32 %v494, %v495
      %v497 = vrot.slane %v496, 2
      %v498 = vadd.f32 %v496, %v497
      %v499 = vrot.slane %v498, 1
      %v500 = vadd.f32 %v498, %v499
      %v501 = vadd.f32 %v479, %v500
      %v502 = vrcp.pop 256.0
      %v503 = vmul.f32 %v501, %v502
      %v504 = vsub.f32 %v381, %v503
      %v505 = vsub.f32 %v382, %v503
      %v506 = vsub.f32 %v383, %v503
      %v507 = vsub.f32 %v384, %v503
      %v508 = vsub.f32 %v385, %v503
      %v509 = vsub.f32 %v386, %v503
      %v510 = vsub.f32 %v387, %v503
      %v511 = vsub.f32 %v388, %v503
      %v512 = vmul.f32 %v504, %v504
      %v513 = vmul.f32 %v505, %v505
      %v514 = vmul.f32 %v506, %v506
      %v515 = vmul.f32 %v507, %v507
      %v516 = vmul.f32 %v508, %v508
      %v517 = vmul.f32 %v509, %v509
      %v518 = vmul.f32 %v510, %v510
      %v519 = vmul.f32 %v511, %v511
      %v520 = vsel %vm413, %v512, 0.0
      %v521 = vsel %vm413, %v513, 0.0
      %v522 = vadd.f32 %v520, %v521
      %v523 = vsel %vm413, %v514, 0.0
      %v524 = vadd.f32 %v522, %v523
      %v525 = vsel %vm413, %v515, 0.0
      %v526 = vadd.f32 %v524, %v525
      %v527 = vsel %vm413, %v516, 0.0
      %v528 = vadd.f32 %v526, %v527
      %v529 = vsel %vm413, %v517, 0.0
      %v530 = vadd.f32 %v528, %v529
      %v531 = vsel %vm413, %v518, 0.0
      %v532 = vadd.f32 %v530, %v531
      %v533 = vsel %vm413, %v519, 0.0
      %v534 = vadd.f32 %v532, %v533
      %v535 = vrot.slane %v534, 4
      %v536 = vadd.f32 %v534, %v535
      %v537 = vrot.slane %v536, 2
      %v538 = vadd.f32 %v536, %v537
      %v539 = vrot.slane %v538, 1
      %v540 = vadd.f32 %v538, %v539
      %v541 = vadd.f32 %v540, 0.0
      %v542 = vsub.f32 %v389, %v503
      %v543 = vsub.f32 %v390, %v503
      %v544 = vsub.f32 %v391, %v503
      %v545 = vsub.f32 %v392, %v503
      %v546 = vsub.f32 %v393, %v503
      %v547 = vsub.f32 %v394, %v503
      %v548 = vsub.f32 %v395, %v503
      %v549 = vsub.f32 %v396, %v503
      %v550 = vmul.f32 %v542, %v542
      %v551 = vmul.f32 %v543, %v543
      %v552 = vmul.f32 %v544, %v544
      %v553 = vmul.f32 %v545, %v545
      %v554 = vmul.f32 %v546, %v546
      %v555 = vmul.f32 %v547, %v547
      %v556 = vmul.f32 %v548, %v548
      %v557 = vmul.f32 %v549, %v549
      %v558 = vsel %vm413, %v550, 0.0
      %v559 = vsel %vm413, %v551, 0.0
      %v560 = vadd.f32 %v558, %v559
      %v561 = vsel %vm413, %v552, 0.0
      %v562 = vadd.f32 %v560, %v561
      %v563 = vsel %vm413, %v553, 0.0
      %v564 = vadd.f32 %v562, %v563
      %v565 = vsel %vm413, %v554, 0.0
      %v566 = vadd.f32 %v564, %v565
      %v567 = vsel %vm413, %v555, 0.0
      %v568 = vadd.f32 %v566, %v567
      %v569 = vsel %vm413, %v556, 0.0
      %v570 = vadd.f32 %v568, %v569
      %v571 = vsel %vm413, %v557, 0.0
      %v572 = vadd.f32 %v570, %v571
      %v573 = vrot.slane %v572, 4
      %v574 = vadd.f32 %v572, %v573
      %v575 = vrot.slane %v574, 2
      %v576 = vadd.f32 %v574, %v575
      %v577 = vrot.slane %v576, 1
      %v578 = vadd.f32 %v576, %v577
      %v579 = vadd.f32 %v541, %v578
      %v580 = vsub.f32 %v397, %v503
      %v581 = vsub.f32 %v398, %v503
      %v582 = vsub.f32 %v399, %v503
      %v583 = vsub.f32 %v400, %v503
      %v584 = vsub.f32 %v401, %v503
      %v585 = vsub.f32 %v402, %v503
      %v586 = vsub.f32 %v403, %v503
      %v587 = vsub.f32 %v404, %v503
      %v588 = vmul.f32 %v580, %v580
      %v589 = vmul.f32 %v581, %v581
      %v590 = vmul.f32 %v582, %v582
      %v591 = vmul.f32 %v583, %v583
      %v592 = vmul.f32 %v584, %v584
      %v593 = vmul.f32 %v585, %v585
      %v594 = vmul.f32 %v586, %v586
      %v595 = vmul.f32 %v587, %v587
      %v596 = vsel %vm413, %v588, 0.0
      %v597 = vsel %vm413, %v589, 0.0
      %v598 = vadd.f32 %v596, %v597
      %v599 = vsel %vm413, %v590, 0.0
      %v600 = vadd.f32 %v598, %v599
      %v601 = vsel %vm413, %v591, 0.0
      %v602 = vadd.f32 %v600, %v601
      %v603 = vsel %vm413, %v592, 0.0
      %v604 = vadd.f32 %v602, %v603
      %v605 = vsel %vm413, %v593, 0.0
      %v606 = vadd.f32 %v604, %v605
      %v607 = vsel %vm413, %v594, 0.0
      %v608 = vadd.f32 %v606, %v607
      %v609 = vsel %vm413, %v595, 0.0
      %v610 = vadd.f32 %v608, %v609
      %v611 = vrot.slane %v610, 4
      %v612 = vadd.f32 %v610, %v611
      %v613 = vrot.slane %v612, 2
      %v614 = vadd.f32 %v612, %v613
      %v615 = vrot.slane %v614, 1
      %v616 = vadd.f32 %v614, %v615
      %v617 = vadd.f32 %v579, %v616
      %v618 = vsub.f32 %v405, %v503
      %v619 = vsub.f32 %v406, %v503
      %v620 = vsub.f32 %v407, %v503
      %v621 = vsub.f32 %v408, %v503
      %v622 = vsub.f32 %v409, %v503
      %v623 = vsub.f32 %v410, %v503
      %v624 = vsub.f32 %v411, %v503
      %v625 = vsub.f32 %v412, %v503
      %v626 = vmul.f32 %v618, %v618
      %v627 = vmul.f32 %v619, %v619
      %v628 = vmul.f32 %v620, %v620
      %v629 = vmul.f32 %v621, %v621
      %v630 = vmul.f32 %v622, %v622
      %v631 = vmul.f32 %v623, %v623
      %v632 = vmul.f32 %v624, %v624
      %v633 = vmul.f32 %v625, %v625
      %v634 = vsel %vm413, %v626, 0.0
      %v635 = vsel %vm413, %v627, 0.0
      %v636 = vadd.f32 %v634, %v635
      %v637 = vsel %vm413, %v628, 0.0
      %v638 = vadd.f32 %v636, %v637
      %v639 = vsel %vm413, %v629, 0.0
      %v640 = vadd.f32 %v638, %v639
      %v641 = vsel %vm413, %v630, 0.0
      %v642 = vadd.f32 %v640, %v641
      %v643 = vsel %vm413, %v631, 0.0
      %v644 = vadd.f32 %v642, %v643
      %v645 = vsel %vm413, %v632, 0.0
      %v646 = vadd.f32 %v644, %v645
      %v647 = vsel %vm413, %v633, 0.0
      %v648 = vadd.f32 %v646, %v647
      %v649 = vrot.slane %v648, 4
      %v650 = vadd.f32 %v648, %v649
      %v651 = vrot.slane %v650, 2
      %v652 = vadd.f32 %v650, %v651
      %v653 = vrot.slane %v652, 1
      %v654 = vadd.f32 %v652, %v653
      %v655 = vadd.f32 %v617, %v654
      %v656 = vmul.f32 %v655, %v502
      %v657 = vadd.f32 %v656, 1e-05
      %v658 = vrsqrt.pop %v657
      %v659 = vld [vmem:[%s366] sm:$0x1]
      %v660 = vld [vmem:[%s369] sm:$0x1]
      %v661 = vmul.f32 %v658, %v659
      %v662 = vmul.f32 %v503, %v661
      %v663 = vsub.f32 %v660, %v662
      %v664 = vlaneseq
      %v665 = vshrl.u32 %v664, 7
      %v666 = vsub.s32 0, %v665
      %v667 = vrot.slane %v661, %v666
      %v668 = vmul.f32 %v381, %v667
      %v669 = vmul.f32 %v382, %v667
      %v670 = vmul.f32 %v383, %v667
      %v671 = vmul.f32 %v384, %v667
      %v672 = vmul.f32 %v385, %v667
      %v673 = vmul.f32 %v386, %v667
      %v674 = vmul.f32 %v387, %v667
      %v675 = vmul.f32 %v388, %v667
      %v677 = vlaneseq
      %v678 = vshrl.u32 %v677, 7
      %v679 = vsub.s32 0, %v678
      %v680 = vrot.slane %v663, %v679
      %v682 = vadd.f32 %v668, %v680
      %v683 = vadd.f32 %v669, %v680
      %v684 = vadd.f32 %v670, %v680
      %v685 = vadd.f32 %v671, %v680
      %v686 = vadd.f32 %v672, %v680
      %v687 = vadd.f32 %v673, %v680
      %v688 = vadd.f32 %v674, %v680
      %v689 = vadd.f32 %v675, %v680
      %vm690 = vcmp.gt.f32.partialorder %v682, 0.0
      %vm691 = vcmp.gt.f32.partialorder %v683, 0.0
      %vm692 = vcmp.gt.f32.partialorder %v684, 0.0
      %vm693 = vcmp.gt.f32.partialorder %v685, 0.0
      %vm694 = vcmp.gt.f32.partialorder %v686, 0.0
      %vm695 = vcmp.gt.f32.partialorder %v687, 0.0
      %vm696 = vcmp.gt.f32.partialorder %v688, 0.0
      %vm697 = vcmp.gt.f32.partialorder %v689, 0.0
      %v698 = vmul.f32 %v682, 0.2
      %v699 = vmul.f32 %v683, 0.2
      %v700 = vmul.f32 %v684, 0.2
      %v701 = vmul.f32 %v685, 0.2
      %v702 = vmul.f32 %v686, 0.2
      %v703 = vmul.f32 %v687, 0.2
      %v704 = vmul.f32 %v688, 0.2
      %v705 = vmul.f32 %v689, 0.2
      %v706 = vsel %vm690, %v682, %v698
      %v707 = vsel %vm691, %v683, %v699
      %v708 = vsel %vm692, %v684, %v700
      %v709 = vsel %vm693, %v685, %v701
      %v710 = vsel %vm694, %v686, %v702
      %v711 = vsel %vm695, %v687, %v703
      %v712 = vsel %vm696, %v688, %v704
      %v713 = vsel %vm697, %v689, %v705
      %v714 = vmul.f32 %v389, %v667
      %v715 = vmul.f32 %v390, %v667
      %v716 = vmul.f32 %v391, %v667
      %v717 = vmul.f32 %v392, %v667
      %v718 = vmul.f32 %v393, %v667
      %v719 = vmul.f32 %v394, %v667
      %v720 = vmul.f32 %v395, %v667
      %v721 = vmul.f32 %v396, %v667
      %v722 = vadd.f32 %v714, %v680
      %v723 = vadd.f32 %v715, %v680
      %v724 = vadd.f32 %v716, %v680
      %v725 = vadd.f32 %v717, %v680
      %v726 = vadd.f32 %v718, %v680
      %v727 = vadd.f32 %v719, %v680
      %v728 = vadd.f32 %v720, %v680
      %v729 = vadd.f32 %v721, %v680
      %vm730 = vcmp.gt.f32.partialorder %v722, 0.0
      %vm731 = vcmp.gt.f32.partialorder %v723, 0.0
      %vm732 = vcmp.gt.f32.partialorder %v724, 0.0
      %vm733 = vcmp.gt.f32.partialorder %v725, 0.0
      %vm734 = vcmp.gt.f32.partialorder %v726, 0.0
      %vm735 = vcmp.gt.f32.partialorder %v727, 0.0
      %vm736 = vcmp.gt.f32.partialorder %v728, 0.0
      %vm737 = vcmp.gt.f32.partialorder %v729, 0.0
      %v738 = vmul.f32 %v722, 0.2
      %v739 = vmul.f32 %v723, 0.2
      %v740 = vmul.f32 %v724, 0.2
      %v741 = vmul.f32 %v725, 0.2
      %v742 = vmul.f32 %v726, 0.2
      %v743 = vmul.f32 %v727, 0.2
      %v744 = vmul.f32 %v728, 0.2
      %v745 = vmul.f32 %v729, 0.2
      %v746 = vsel %vm730, %v722, %v738
      %v747 = vsel %vm731, %v723, %v739
      %v748 = vsel %vm732, %v724, %v740
      %v749 = vsel %vm733, %v725, %v741
      %v750 = vsel %vm734, %v726, %v742
      %v751 = vsel %vm735, %v727, %v743
      %v752 = vsel %vm736, %v728, %v744
      %v753 = vsel %vm737, %v729, %v745
      %v754 = vadd.f32 %v706, %v746
      %v755 = vadd.f32 %v707, %v747
      %v756 = vadd.f32 %v708, %v748
      %v757 = vadd.f32 %v709, %v749
      %v758 = vadd.f32 %v710, %v750
      %v759 = vadd.f32 %v711, %v751
      %v760 = vadd.f32 %v712, %v752
      %v761 = vadd.f32 %v713, %v753
      %v762 = vmul.f32 %v397, %v667
      %v763 = vmul.f32 %v398, %v667
      %v764 = vmul.f32 %v399, %v667
      %v765 = vmul.f32 %v400, %v667
      %v766 = vmul.f32 %v401, %v667
      %v767 = vmul.f32 %v402, %v667
      %v768 = vmul.f32 %v403, %v667
      %v769 = vmul.f32 %v404, %v667
      %v770 = vadd.f32 %v762, %v680
      %v771 = vadd.f32 %v763, %v680
      %v772 = vadd.f32 %v764, %v680
      %v773 = vadd.f32 %v765, %v680
      %v774 = vadd.f32 %v766, %v680
      %v775 = vadd.f32 %v767, %v680
      %v776 = vadd.f32 %v768, %v680
      %v777 = vadd.f32 %v769, %v680
      %vm778 = vcmp.gt.f32.partialorder %v770, 0.0
      %vm779 = vcmp.gt.f32.partialorder %v771, 0.0
      %vm780 = vcmp.gt.f32.partialorder %v772, 0.0
      %vm781 = vcmp.gt.f32.partialorder %v773, 0.0
      %vm782 = vcmp.gt.f32.partialorder %v774, 0.0
      %vm783 = vcmp.gt.f32.partialorder %v775, 0.0
      %vm784 = vcmp.gt.f32.partialorder %v776, 0.0
      %vm785 = vcmp.gt.f32.partialorder %v777, 0.0
      %v786 = vmul.f32 %v770, 0.2
      %v787 = vmul.f32 %v771, 0.2
      %v788 = vmul.f32 %v772, 0.2
      %v789 = vmul.f32 %v773, 0.2
      %v790 = vmul.f32 %v774, 0.2
      %v791 = vmul.f32 %v775, 0.2
      %v792 = vmul.f32 %v776, 0.2
      %v793 = vmul.f32 %v777, 0.2
      %v794 = vsel %vm778, %v770, %v786
      %v795 = vsel %vm779, %v771, %v787
      %v796 = vsel %vm780, %v772, %v788
      %v797 = vsel %vm781, %v773, %v789
      %v798 = vsel %vm782, %v774, %v790
      %v799 = vsel %vm783, %v775, %v791
      %v800 = vsel %vm784, %v776, %v792
      %v801 = vsel %vm785, %v777, %v793
      %v802 = vadd.f32 %v754, %v794
      %v803 = vadd.f32 %v755, %v795
      %v804 = vadd.f32 %v756, %v796
      %v805 = vadd.f32 %v757, %v797
      %v806 = vadd.f32 %v758, %v798
      %v807 = vadd.f32 %v759, %v799
      %v808 = vadd.f32 %v760, %v800
      %v809 = vadd.f32 %v761, %v801
      %v810 = vmul.f32 %v405, %v667
      %v811 = vmul.f32 %v406, %v667
      %v812 = vmul.f32 %v407, %v667
      %v813 = vmul.f32 %v408, %v667
      %v814 = vmul.f32 %v409, %v667
      %v815 = vmul.f32 %v410, %v667
      %v816 = vmul.f32 %v411, %v667
      %v817 = vmul.f32 %v412, %v667
      %v818 = vadd.f32 %v810, %v680
      %v819 = vadd.f32 %v811, %v680
      %v820 = vadd.f32 %v812, %v680
      %v821 = vadd.f32 %v813, %v680
      %v822 = vadd.f32 %v814, %v680
      %v823 = vadd.f32 %v815, %v680
      %v824 = vadd.f32 %v816, %v680
      %v825 = vadd.f32 %v817, %v680
      %vm826 = vcmp.gt.f32.partialorder %v818, 0.0
      %vm827 = vcmp.gt.f32.partialorder %v819, 0.0
      %vm828 = vcmp.gt.f32.partialorder %v820, 0.0
      %vm829 = vcmp.gt.f32.partialorder %v821, 0.0
      %vm830 = vcmp.gt.f32.partialorder %v822, 0.0
      %vm831 = vcmp.gt.f32.partialorder %v823, 0.0
      %vm832 = vcmp.gt.f32.partialorder %v824, 0.0
      %vm833 = vcmp.gt.f32.partialorder %v825, 0.0
      %v834 = vmul.f32 %v818, 0.2
      %v835 = vmul.f32 %v819, 0.2
      %v836 = vmul.f32 %v820, 0.2
      %v837 = vmul.f32 %v821, 0.2
      %v838 = vmul.f32 %v822, 0.2
      %v839 = vmul.f32 %v823, 0.2
      %v840 = vmul.f32 %v824, 0.2
      %v841 = vmul.f32 %v825, 0.2
      %v842 = vsel %vm826, %v818, %v834
      %v843 = vsel %vm827, %v819, %v835
      %v844 = vsel %vm828, %v820, %v836
      %v845 = vsel %vm829, %v821, %v837
      %v846 = vsel %vm830, %v822, %v838
      %v847 = vsel %vm831, %v823, %v839
      %v848 = vsel %vm832, %v824, %v840
      %v849 = vsel %vm833, %v825, %v841
      %v850 = vadd.f32 %v802, %v842
      %v851 = vadd.f32 %v803, %v843
      %v852 = vadd.f32 %v804, %v844
      %v853 = vadd.f32 %v805, %v845
      %v854 = vadd.f32 %v806, %v846
      %v855 = vadd.f32 %v807, %v847
      %v856 = vadd.f32 %v808, %v848
      %v857 = vadd.f32 %v809, %v849
      %v858 = vmul.f32 %v850, 0.25
      %v859 = vmul.f32 %v851, 0.25
      %v860 = vmul.f32 %v852, 0.25
      %v861 = vmul.f32 %v853, 0.25
      %v862 = vmul.f32 %v854, 0.25
      %v863 = vmul.f32 %v855, 0.25
      %v864 = vmul.f32 %v856, 0.25
      %v865 = vmul.f32 %v857, 0.25
      %v866 = vadd.f32 %v381, %v389
      %v867 = vadd.f32 %v382, %v390
      %v868 = vadd.f32 %v383, %v391
      %v869 = vadd.f32 %v384, %v392
      %v870 = vadd.f32 %v385, %v393
      %v871 = vadd.f32 %v386, %v394
      %v872 = vadd.f32 %v387, %v395
      %v873 = vadd.f32 %v388, %v396
      %v874 = vadd.f32 %v866, %v397
      %v875 = vadd.f32 %v867, %v398
      %v876 = vadd.f32 %v868, %v399
      %v877 = vadd.f32 %v869, %v400
      %v878 = vadd.f32 %v870, %v401
      %v879 = vadd.f32 %v871, %v402
      %v880 = vadd.f32 %v872, %v403
      %v881 = vadd.f32 %v873, %v404
      %v882 = vadd.f32 %v874, %v405
      %v883 = vadd.f32 %v875, %v406
      %v884 = vadd.f32 %v876, %v407
      %v885 = vadd.f32 %v877, %v408
      %v886 = vadd.f32 %v878, %v409
      %v887 = vadd.f32 %v879, %v410
      %v888 = vadd.f32 %v880, %v411
      %v889 = vadd.f32 %v881, %v412
      %v890 = vmul.f32 %v882, 0.25
      %v891 = vmul.f32 %v883, 0.25
      %v892 = vmul.f32 %v884, 0.25
      %v893 = vmul.f32 %v885, 0.25
      %v894 = vmul.f32 %v886, 0.25
      %v895 = vmul.f32 %v887, 0.25
      %v896 = vmul.f32 %v888, 0.25
      %v897 = vmul.f32 %v889, 0.25
      %898 = vst.msk [vmem:[%s379] sm:$0xff] %vm413, %v890
      %899 = vst.msk [vmem:[%s379 + $0x8] sm:$0xff] %vm413, %v891
      %900 = vst.msk [vmem:[%s379 + $0x10] sm:$0xff] %vm413, %v892
      %901 = vst.msk [vmem:[%s379 + $0x18] sm:$0xff] %vm413, %v893
      %902 = vst.msk [vmem:[%s379 + $0x20] sm:$0xff] %vm413, %v894
      %903 = vst.msk [vmem:[%s379 + $0x28] sm:$0xff] %vm413, %v895
      %904 = vst.msk [vmem:[%s379 + $0x30] sm:$0xff] %vm413, %v896
      %905 = vst.msk [vmem:[%s379 + $0x38] sm:$0xff] %vm413, %v897
      %v906 = vpack.c.bf16 %v858, %v858
      %v907 = vpack.c.bf16 %v859, %v859
      %v908 = vpack.c.bf16 %v860, %v860
      %v909 = vpack.c.bf16 %v861, %v861
      %v910 = vpack.c.bf16 %v862, %v862
      %v911 = vpack.c.bf16 %v863, %v863
      %v912 = vpack.c.bf16 %v864, %v864
      %v913 = vpack.c.bf16 %v865, %v865
      %vm914 = vcmask 257024
      %915 = vst.msk [vmem:[%s374] sm:$0xf] %vm914, 0
      %vm916 = vcmask 253952
      %917 = vst.msk [vmem:[%s374 + $0x4] sm:$0x1] %vm916, 0
      %s918 = scalar_lea.vmem %s374, 72
      %919 = vst.msk [vmem:[%s918] sm:$0xf] %vm914, 0
      %920 = vst.msk [vmem:[%s918 + $0x4] sm:$0x1] %vm916, 0
      %s921 = scalar_lea.vmem %s374, 8
      %vm922 = vcmask 253952
      %vm923 = vsmask.f32 256
      %vm924 = vmand %vm922, %vm923
      %v925 = vld [vmem:[%s921] sm:$0x1]
      %v926 = vsel %vm924, 0, %v925
      %927 = vst [vmem:[%s921] sm:$0x1] %v926
      %v928 = vld [vmem:[%s921 + $0x8] sm:$0x1]
      %v929 = vsel %vm924, 0, %v928
      %930 = vst [vmem:[%s921 + $0x8] sm:$0x1] %v929
      %v931 = vld [vmem:[%s921 + $0x10] sm:$0x1]
      %v932 = vsel %vm924, 0, %v931
      %933 = vst [vmem:[%s921 + $0x10] sm:$0x1] %v932
      %v934 = vld [vmem:[%s921 + $0x18] sm:$0x1]
      %v935 = vsel %vm924, 0, %v934
      %936 = vst [vmem:[%s921 + $0x18] sm:$0x1] %v935
      %v937 = vld [vmem:[%s921 + $0x20] sm:$0x1]
      %v938 = vsel %vm924, 0, %v937
      %939 = vst [vmem:[%s921 + $0x20] sm:$0x1] %v938
      %v940 = vld [vmem:[%s921 + $0x28] sm:$0x1]
      %v941 = vsel %vm924, 0, %v940
      %942 = vst [vmem:[%s921 + $0x28] sm:$0x1] %v941
      %v943 = vld [vmem:[%s921 + $0x30] sm:$0x1]
      %v944 = vsel %vm924, 0, %v943
      %945 = vst [vmem:[%s921 + $0x30] sm:$0x1] %v944
      %v946 = vld [vmem:[%s921 + $0x38] sm:$0x1]
      %v947 = vsel %vm924, 0, %v946
      %948 = vst [vmem:[%s921 + $0x38] sm:$0x1] %v947
      %vm949 = vsmask.f32 7938
      %vm950 = vmand %vm922, %vm949
      %v951 = vld [vmem:[%s921 + $0x4] sm:$0x1]
      %v952 = vsel %vm950, 0, %v951
      %953 = vst [vmem:[%s921 + $0x4] sm:$0x1] %v952
      %v954 = vld [vmem:[%s921 + $0xc] sm:$0x1]
      %v955 = vsel %vm950, 0, %v954
      %956 = vst [vmem:[%s921 + $0xc] sm:$0x1] %v955
      %v957 = vld [vmem:[%s921 + $0x14] sm:$0x1]
      %v958 = vsel %vm950, 0, %v957
      %959 = vst [vmem:[%s921 + $0x14] sm:$0x1] %v958
      %v960 = vld [vmem:[%s921 + $0x1c] sm:$0x1]
      %v961 = vsel %vm950, 0, %v960
      %962 = vst [vmem:[%s921 + $0x1c] sm:$0x1] %v961
      %v963 = vld [vmem:[%s921 + $0x24] sm:$0x1]
      %v964 = vsel %vm950, 0, %v963
      %965 = vst [vmem:[%s921 + $0x24] sm:$0x1] %v964
      %v966 = vld [vmem:[%s921 + $0x2c] sm:$0x1]
      %v967 = vsel %vm950, 0, %v966
      %968 = vst [vmem:[%s921 + $0x2c] sm:$0x1] %v967
      %v969 = vld [vmem:[%s921 + $0x34] sm:$0x1]
      %v970 = vsel %vm950, 0, %v969
      %971 = vst [vmem:[%s921 + $0x34] sm:$0x1] %v970
      %v972 = vld [vmem:[%s921 + $0x3c] sm:$0x1]
      %v973 = vsel %vm950, 0, %v972
      %974 = vst [vmem:[%s921 + $0x3c] sm:$0x1] %v973
      %v983 = vunpack.c.l.b16 %v906
      %v984 = vunpack.c.l.b16 %v907
      %v985 = vunpack.c.l.b16 %v908
      %v986 = vunpack.c.l.b16 %v909
      %v987 = vunpack.c.l.b16 %v910
      %v988 = vunpack.c.l.b16 %v911
      %v989 = vunpack.c.l.b16 %v912
      %v990 = vunpack.c.l.b16 %v913
      %v991 = vpack.c.b16 %v983, %v983
      %v992 = vpack.c.b16 %v984, %v984
      %v993 = vpack.c.b16 %v985, %v985
      %v994 = vpack.c.b16 %v986, %v986
      %v995 = vpack.c.b16 %v987, %v987
      %v996 = vpack.c.b16 %v988, %v988
      %v997 = vpack.c.b16 %v989, %v989
      %v998 = vpack.c.b16 %v990, %v990
      %v1000 = vshrl.u32 %v991, 16
      %v1002 = vrot.slane %v1000, 7
      %v1003 = vshll.u32 %v991, 16
      %v1005 = vor.u32 %v1002, %v1003
      %v1006 = vrot.slane %v1002, 4
      %v1008 = vshrl.u32 %v992, 16
      %v1010 = vrot.slane %v1008, 7
      %v1011 = vshll.u32 %v992, 16
      %v1013 = vor.u32 %v1010, %v1011
      %v1014 = vrot.slane %v1010, 4
      %v1016 = vshrl.u32 %v993, 16
      %v1018 = vrot.slane %v1016, 7
      %v1019 = vshll.u32 %v993, 16
      %v1021 = vor.u32 %v1018, %v1019
      %v1022 = vrot.slane %v1018, 4
      %v1024 = vshrl.u32 %v994, 16
      %v1026 = vrot.slane %v1024, 7
      %v1027 = vshll.u32 %v994, 16
      %v1029 = vor.u32 %v1026, %v1027
      %v1030 = vrot.slane %v1026, 4
      %v1032 = vshrl.u32 %v995, 16
      %v1034 = vrot.slane %v1032, 7
      %v1035 = vshll.u32 %v995, 16
      %v1037 = vor.u32 %v1034, %v1035
      %v1038 = vrot.slane %v1034, 4
      %v1040 = vshrl.u32 %v996, 16
      %v1042 = vrot.slane %v1040, 7
      %v1043 = vshll.u32 %v996, 16
      %v1045 = vor.u32 %v1042, %v1043
      %v1046 = vrot.slane %v1042, 4
      %v1048 = vshrl.u32 %v997, 16
      %v1050 = vrot.slane %v1048, 7
      %v1051 = vshll.u32 %v997, 16
      %v1053 = vor.u32 %v1050, %v1051
      %v1054 = vrot.slane %v1050, 4
      %v1056 = vshrl.u32 %v998, 16
      %v1058 = vrot.slane %v1056, 7
      %v1059 = vshll.u32 %v998, 16
      %v1061 = vor.u32 %v1058, %v1059
      %v1062 = vrot.slane %v1058, 4
      %vm1079 = vcmask 257024
      %vm1080 = vmand %vm1079, %vm949
      %v1081 = vld [vmem:[%s921] sm:$0xf]
      %v1082 = vsel %vm1080, %v1005, %v1081
      %1083 = vst [vmem:[%s921] sm:$0xf] %v1082
      %v1084 = vld [vmem:[%s921 + $0x4] sm:$0x1]
      %v1085 = vsel %vm924, %v1006, %v1084
      %1086 = vst [vmem:[%s921 + $0x4] sm:$0x1] %v1085
      %v1087 = vld [vmem:[%s921 + $0x8] sm:$0xf]
      %v1088 = vsel %vm1080, %v1013, %v1087
      %1089 = vst [vmem:[%s921 + $0x8] sm:$0xf] %v1088
      %v1090 = vld [vmem:[%s921 + $0xc] sm:$0x1]
      %v1091 = vsel %vm924, %v1014, %v1090
      %1092 = vst [vmem:[%s921 + $0xc] sm:$0x1] %v1091
      %v1093 = vld [vmem:[%s921 + $0x10] sm:$0xf]
      %v1094 = vsel %vm1080, %v1021, %v1093
      %1095 = vst [vmem:[%s921 + $0x10] sm:$0xf] %v1094
      %v1096 = vld [vmem:[%s921 + $0x14] sm:$0x1]
      %v1097 = vsel %vm924, %v1022, %v1096
      %1098 = vst [vmem:[%s921 + $0x14] sm:$0x1] %v1097
      %v1099 = vld [vmem:[%s921 + $0x18] sm:$0xf]
      %v1100 = vsel %vm1080, %v1029, %v1099
      %1101 = vst [vmem:[%s921 + $0x18] sm:$0xf] %v1100
      %v1102 = vld [vmem:[%s921 + $0x1c] sm:$0x1]
      %v1103 = vsel %vm924, %v1030, %v1102
      %1104 = vst [vmem:[%s921 + $0x1c] sm:$0x1] %v1103
      %v1105 = vld [vmem:[%s921 + $0x20] sm:$0xf]
      %v1106 = vsel %vm1080, %v1037, %v1105
      %1107 = vst [vmem:[%s921 + $0x20] sm:$0xf] %v1106
      %v1108 = vld [vmem:[%s921 + $0x24] sm:$0x1]
      %v1109 = vsel %vm924, %v1038, %v1108
      %1110 = vst [vmem:[%s921 + $0x24] sm:$0x1] %v1109
      %v1111 = vld [vmem:[%s921 + $0x28] sm:$0xf]
      %v1112 = vsel %vm1080, %v1045, %v1111
      %1113 = vst [vmem:[%s921 + $0x28] sm:$0xf] %v1112
      %v1114 = vld [vmem:[%s921 + $0x2c] sm:$0x1]
      %v1115 = vsel %vm924, %v1046, %v1114
      %1116 = vst [vmem:[%s921 + $0x2c] sm:$0x1] %v1115
      %v1117 = vld [vmem:[%s921 + $0x30] sm:$0xf]
      %v1118 = vsel %vm1080, %v1053, %v1117
      %1119 = vst [vmem:[%s921 + $0x30] sm:$0xf] %v1118
      %v1120 = vld [vmem:[%s921 + $0x34] sm:$0x1]
      %v1121 = vsel %vm924, %v1054, %v1120
      %1122 = vst [vmem:[%s921 + $0x34] sm:$0x1] %v1121
      %v1123 = vld [vmem:[%s921 + $0x38] sm:$0xf]
      %v1124 = vsel %vm1080, %v1061, %v1123
      %1125 = vst [vmem:[%s921 + $0x38] sm:$0xf] %v1124
      %v1126 = vld [vmem:[%s921 + $0x3c] sm:$0x1]
      %v1127 = vsel %vm924, %v1062, %v1126
      %1128 = vst [vmem:[%s921 + $0x3c] sm:$0x1] %v1127
      %p1129 = scmp.lt.s32.totalorder %s19, 1
      %s1130 = scalar_select %p1129, %s19, 1
      %s1131 = smul.addr %s1130, 20
      %s1132 = smul.addr %s1131, 4
      %s1133 = scalar_lea.vmem %s6, %s1132
      %p1134 = scmp.lt.s32.totalorder %s19, 1
      %s1135 = scalar_select %p1134, %s19, 1
      %s1136 = smul.addr %s1135, 8
      %s1137 = smul.addr %s1136, 8
      %s1138 = scalar_lea.vmem %s7, %s1137
      // Predicated region
      $region45: #{res_block_forward.3} parent=43 // pred_check
        %p1139 = pneg %p193
      $region46: #{res_block_forward.3} parent=43 // pred_check_branch
        %1141 = sbr.rel (%p1139) target = $region48
      $region47: #{res_block_forward.3} parent=43 // pred_region
        _
      $region48: #{res_block_forward.3} parent=43 // pred_fallthru
        _
      // Predicated region
      $region49: #{res_block_forward.3} parent=43 // pred_check
        %p1142 = pneg %p219
      $region50: #{res_block_forward.3} parent=43 // pred_check_branch
        %1144 = sbr.rel (%p1142) target = $region52
      $region51: #{res_block_forward.3} parent=43 // pred_region
        _
      $region52: #{res_block_forward.3} parent=43 // pred_fallthru
        _
    $region44: #{res_block_forward.3} parent=5 // pred_fallthru
      _
    %p1145 = scmp.le.s32.totalorder 2, %s14
    // Predicated region
    $region53: #{res_block_forward.3} parent=5 // pred_check
      %p1146 = pneg %p1145
    $region54: #{res_block_forward.3} parent=5 // pred_check_branch
      %1148 = sbr.rel (%p1146) target = $region56
    $region55: #{res_block_forward.3} parent=5 // pred_region
      %s1149 = ssub.s32 %s14, 2
      // Predicated region
      $region57: #{res_block_forward.3} parent=55 // pred_check
        %p1150 = pneg %p199
      $region58: #{res_block_forward.3} parent=55 // pred_check_branch
        %1152 = sbr.rel (%p1150) target = $region60
      $region59: #{res_block_forward.3} parent=55 // pred_region
        %p1153 = scmp.lt.s32.totalorder %s20, 1
        %s1154 = scalar_select %p1153, %s20, 1
        %s1155 = smul.addr %s1154, 20
        %s1156 = smul.addr %s1155, 4
        %s1157 = scalar_lea.vmem %s6, %s1156
      $region60: #{res_block_forward.3} parent=55 // pred_fallthru
        _
      // Predicated region
      $region61: #{res_block_forward.3} parent=55 // pred_check
        %p1158 = pneg %p225
      $region62: #{res_block_forward.3} parent=55 // pred_check_branch
        %1160 = sbr.rel (%p1158) target = $region64
      $region63: #{res_block_forward.3} parent=55 // pred_region
        %p1161 = scmp.lt.s32.totalorder %s20, 1
        %s1162 = scalar_select %p1161, %s20, 1
        %s1163 = smul.addr %s1162, 8
        %s1164 = smul.addr %s1163, 8
        %s1165 = scalar_lea.vmem %s7, %s1164
      $region64: #{res_block_forward.3} parent=55 // pred_fallthru
        _
    $region56: #{res_block_forward.3} parent=5 // pred_fallthru
      _
  $region6: #{res_block_forward.3} parent=0 // loop_footer
    %s18 = sadd.s32 1, %s14
  $region7: #{res_block_forward.3} parent=0 // loop_footer_branch
    %13 = sbr.rel target = $region3
  $region8: #{res_block_forward.3} parent=0 // loop_exit
    _

// kernel: res_block_forward.5
$region0: #{res_block_forward.5}
  #allocation0 [shape = 'u32[]', space=smem, size = 0x4, offset = 0x4, fixed_abs, tag = 'smem constant byte address 0x4 - core index']
  #allocation1 [shape = 'u32[144,128]{1,0:T(1,128)}', space=vmem, size = 0x12000, scoped, tag = 'internal scratch']
  %s0 = inlined_call_operand.vmem [shape: bf16[2,10,10,32], index: 0, kind: input, shape index: {}]
  %s1 = inlined_call_operand.vmem [shape: bf16[288,64], index: 1, kind: input, shape index: {}]
  %s2 = inlined_call_operand.vmem [shape: f32[1,64], index: 2, kind: input, shape index: {}]
  %s3 = inlined_call_operand.vmem [shape: f32[2,64,32], index: 3, kind: input, shape index: {}]
  %s4 = inlined_call_operand.vmem [shape: bf16[32,64], index: 4, kind: input, shape index: {}]
  %s5 = inlined_call_operand.hbm [shape: f32[2,64,64], index: 5, kind: output, shape index: {}]
  %s6 = sld [smem:[#allocation0]]
  $region53: #{res_block_forward.5} parent=0
    _
  %s8 = ssub.s32 1, %s6
  %s9 = scalar_select 0, %s8, %s6
  $region1: #{res_block_forward.5} parent=0
    #allocation2 [shape = 'u8[65536]{0}', space=vmem, size = 0x10000, scoped, tag = 'output window, operand 0']
    #allocation3 [shape = 's32[2]{0}', space=sflag, size = 0x8, scoped, tag = 'scoped memory for res_block_forward.5']
    %10 = vsyncpa [#allocation3], 0
    %s11 = scalar_lea.sflag [#allocation3], 1
    %12 = vsyncpa %s11, 0
    loop: start=0, step=1, limit=4
    $region2: #{res_block_forward.5} parent=1 // loop_pre_header
      _
    $region3: #{res_block_forward.5} parent=1 // loop_header
      %s14 = sphi 0, %s18
      %p15 = scmp.ge.s32.totalorder %s14, 4
      %s21 = sphi 0, %s33
      %s22 = sphi 0, %s29
      %s23 = sphi 0, %s21
      %s24 = sphi 0, %s22
      %s25 = sphi 0, %s23
      %s26 = sphi 0, %s24
      %s36 = sphi 0, %s38
      %s39 = sphi 0, %s36
      %s40 = sphi 0, %s39
      %s56 = sphi 0, %s40
      %s62 = sphi 0, %s64
      %s65 = sphi 0, %s62
      %s66 = sphi 0, %s65
      %s82 = sphi 0, %s66
      %s88 = sphi 0, %s90
      %s91 = sphi 0, %s88
      %s92 = sphi 0, %s91
      %s108 = sphi 0, %s92
      %s114 = sphi 0, %s116
      %s117 = sphi 0, %s114
      %s118 = sphi 0, %s117
      %s134 = sphi 0, %s118
      %s140 = sphi 0, %s142
      %s143 = sphi 0, %s140
      %s144 = sphi 0, %s143
      %s160 = sphi 0, %s144
      %s168 = sphi 0, %s170
      %s171 = sphi 0, %s168
      %s172 = sphi 0, %s171
      %s188 = sphi 0, %s172
    $region4: #{res_block_forward.5} parent=1 // loop_header_branch
      %17 = sbr.rel (%p15) target = $region8
    $region5: #{res_block_forward.5} parent=1 // loop_body
      %s19 = ssub.s32 %s14, 1
      %s20 = ssub.s32 %s14, 2
      %s27 = sadd.s32 1, %s22
      %p28 = scmp.ge.s32.totalorder %s27, 1
      %s29 = scalar_select %p28, 0, %s27
      %s30 = sadd.s32 1, %s21
      %s31 = scalar_select %p28, %s30, %s21
      %p32 = scmp.ge.s32.totalorder %s31, 2
      %s33 = scalar_select %p32, 0, %s31
      %s34 = ssub.s32 %s21, %s33
      %p35 = scmp.eq.s32.totalorder %s34, 0
      %s37 = sadd.s32 %s36, 1
      %s38 = scalar_select %p35, %s36, %s37
      %p41 = pneg %p35
      %p42 = scmp.eq.s32.totalorder %s14, 1
      %p43 = por %p41, %p42
      %p44 = scmp.ne.s32.totalorder %s36, %s39
      %p45 = scmp.eq.s32.totalorder %s14, 0
      %p46 = por %p44, %p45
      %p47 = scmp.ne.s32.totalorder %s36, %s39
      %p48 = scmp.eq.s32.totalorder %s19, 1
      %p49 = por %p47, %p48
      %p50 = scmp.ne.s32.totalorder %s39, %s40
      %p51 = scmp.eq.s32.totalorder %s19, 0
      %p52 = por %p50, %p51
      %p53 = scmp.ne.s32.totalorder %s39, %s40
      %p54 = scmp.eq.s32.totalorder %s20, 1
      %p55 = por %p53, %p54
      %p57 = scmp.ne.s32.totalorder %s40, %s56
      %p58 = scmp.eq.s32.totalorder %s20, 0
      %p59 = por %p57, %p58
      %s60 = ssub.s32 %s22, %s29
      %p61 = scmp.eq.s32.totalorder %s60, 0
      %s63 = sadd.s32 %s62, 1
      %s64 = scalar_select %p61, %s62, %s63
      %p67 = pneg %p61
      %p68 = scmp.eq.s32.totalorder %s14, 1
      %p69 = por %p67, %p68
      %p70 = scmp.ne.s32.totalorder %s62, %s65
      %p71 = scmp.eq.s32.totalorder %s14, 0
      %p72 = por %p70, %p71
      %p73 = scmp.ne.s32.totalorder %s62, %s65
      %p74 = scmp.eq.s32.totalorder %s19, 1
      %p75 = por %p73, %p74
      %p76 = scmp.ne.s32.totalorder %s65, %s66
      %p77 = scmp.eq.s32.totalorder %s19, 0
      %p78 = por %p76, %p77
      %p79 = scmp.ne.s32.totalorder %s65, %s66
      %p80 = scmp.eq.s32.totalorder %s20, 1
      %p81 = por %p79, %p80
      %p83 = scmp.ne.s32.totalorder %s66, %s82
      %p84 = scmp.eq.s32.totalorder %s20, 0
      %p85 = por %p83, %p84
      %s86 = ssub.s32 %s22, %s29
      %p87 = scmp.eq.s32.totalorder %s86, 0
      %s89 = sadd.s32 %s88, 1
      %s90 = scalar_select %p87, %s88, %s89
      %p93 = pneg %p87
      %p94 = scmp.eq.s32.totalorder %s14, 1
      %p95 = por %p93, %p94
      %p96 = scmp.ne.s32.totalorder %s88, %s91
      %p97 = scmp.eq.s32.totalorder %s14, 0
      %p98 = por %p96, %p97
      %p99 = scmp.ne.s32.totalorder %s88, %s91
      %p100 = scmp.eq.s32.totalorder %s19, 1
      %p101 = por %p99, %p100
      %p102 = scmp.ne.s32.totalorder %s91, %s92
      %p103 = scmp.eq.s32.totalorder %s19, 0
      %p104 = por %p102, %p103
      %p105 = scmp.ne.s32.totalorder %s91, %s92
      %p106 = scmp.eq.s32.totalorder %s20, 1
      %p107 = por %p105, %p106
      %p109 = scmp.ne.s32.totalorder %s92, %s108
      %p110 = scmp.eq.s32.totalorder %s20, 0
      %p111 = por %p109, %p110
      %s112 = ssub.s32 %s21, %s33
      %p113 = scmp.eq.s32.totalorder %s112, 0
      %s115 = sadd.s32 %s114, 1
      %s116 = scalar_select %p113, %s114, %s115
      %p119 = pneg %p113
      %p120 = scmp.eq.s32.totalorder %s14, 1
      %p121 = por %p119, %p120
      %p122 = scmp.ne.s32.totalorder %s114, %s117
      %p123 = scmp.eq.s32.totalorder %s14, 0
      %p124 = por %p122, %p123
      %p125 = scmp.ne.s32.totalorder %s114, %s117
      %p126 = scmp.eq.s32.totalorder %s19, 1
      %p127 = por %p125, %p126
      %p128 = scmp.ne.s32.totalorder %s117, %s118
      %p129 = scmp.eq.s32.totalorder %s19, 0
      %p130 = por %p128, %p129
      %p131 = scmp.ne.s32.totalorder %s117, %s118
      %p132 = scmp.eq.s32.totalorder %s20, 1
      %p133 = por %p131, %p132
      %p135 = scmp.ne.s32.totalorder %s118, %s134
      %p136 = scmp.eq.s32.totalorder %s20, 0
      %p137 = por %p135, %p136
      %s138 = ssub.s32 %s22, %s29
      %p139 = scmp.eq.s32.totalorder %s138, 0
      %s141 = sadd.s32 %s140, 1
      %s142 = scalar_select %p139, %s140, %s141
      %p145 = pneg %p139
      %p146 = scmp.eq.s32.totalorder %s14, 1
      %p147 = por %p145, %p146
      %p148 = scmp.ne.s32.totalorder %s140, %s143
      %p149 = scmp.eq.s32.totalorder %s14, 0
      %p150 = por %p148, %p149
      %p151 = scmp.ne.s32.totalorder %s140, %s143
      %p152 = scmp.eq.s32.totalorder %s19, 1
      %p153 = por %p151, %p152
      %p154 = scmp.ne.s32.totalorder %s143, %s144
      %p155 = scmp.eq.s32.totalorder %s19, 0
      %p156 = por %p154, %p155
      %p157 = scmp.ne.s32.totalorder %s143, %s144
      %p158 = scmp.eq.s32.totalorder %s20, 1
      %p159 = por %p157, %p158
      %p161 = scmp.ne.s32.totalorder %s144, %s160
      %p162 = scmp.eq.s32.totalorder %s20, 0
      %p163 = por %p161, %p162
      %s164 = ssub.s32 %s21, %s33
      %s165 = ssub.s32 %s22, %s29
      %s166 = sor.u32 %s164, %s165
      %p167 = scmp.eq.s32.totalorder %s166, 0
      %s169 = sadd.s32 %s168, 1
      %s170 = scalar_select %p167, %s168, %s169
      %p173 = pneg %p167
      %p174 = scmp.eq.s32.totalorder %s14, 1
      %p175 = por %p173, %p174
      %p176 = scmp.ne.s32.totalorder %s168, %s171
      %p177 = scmp.eq.s32.totalorder %s14, 0
      %p178 = por %p176, %p177
      %p179 = scmp.ne.s32.totalorder %s168, %s171
      %p180 = scmp.eq.s32.totalorder %s19, 1
      %p181 = por %p179, %p180
      %p182 = scmp.ne.s32.totalorder %s171, %s172
      %p183 = scmp.eq.s32.totalorder %s19, 0
      %p184 = por %p182, %p183
      %p185 = scmp.ne.s32.totalorder %s171, %s172
      %p186 = scmp.eq.s32.totalorder %s20, 1
      %p187 = por %p185, %p186
      %p189 = scmp.ne.s32.totalorder %s172, %s188
      %p190 = scmp.eq.s32.totalorder %s20, 0
      %p191 = por %p189, %p190
      %p192 = scmp.le.s32.totalorder 1, %s14
      %p193 = scmp.lt.s32.totalorder %s14, 3
      %p194 = pnand %p192, %p193
      %p195 = pneg %p194
      // Predicated region
      $region9: #{res_block_forward.5} parent=5 // pred_check
        _
      $region10: #{res_block_forward.5} parent=5 // pred_check_branch
        %197 = sbr.rel (%p194) target = $region12
      $region11: #{res_block_forward.5} parent=5 // pred_region
        %s198 = ssub.s32 %s14, 1
        // Predicated region
        $region13: #{res_block_forward.5} parent=11 // pred_check
          %p199 = pneg %p78
        $region14: #{res_block_forward.5} parent=11 // pred_check_branch
          %201 = sbr.rel (%p199) target = $region16
        $region15: #{res_block_forward.5} parent=11 // pred_region
          %p202 = scmp.lt.s32.totalorder %s24, 0
          %s203 = scalar_select %p202, %s24, 0
          %s204 = smul.addr %s203, 4
          %s205 = scalar_lea.vmem %s1, %s204
        $region16: #{res_block_forward.5} parent=11 // pred_fallthru
          _
        // Predicated region
        $region17: #{res_block_forward.5} parent=11 // pred_check
          %p206 = pneg %p104
        $region18: #{res_block_forward.5} parent=11 // pred_check_branch
          %208 = sbr.rel (%p206) target = $region20
        $region19: #{res_block_forward.5} parent=11 // pred_region
          %p209 = scmp.lt.s32.totalorder %s24, 0
          %s210 = scalar_select %p209, %s24, 0
          %s211 = scalar_lea.vmem %s2, %s210
        $region20: #{res_block_forward.5} parent=11 // pred_fallthru
          _
        // Predicated region
        $region21: #{res_block_forward.5} parent=11 // pred_check
          %p212 = pneg %p156
        $region22: #{res_block_forward.5} parent=11 // pred_check_branch
          %214 = sbr.rel (%p212) target = $region24
        $region23: #{res_block_forward.5} parent=11 // pred_region
          %p215 = scmp.lt.s32.totalorder %s24, 0
          %s216 = scalar_select %p215, %s24, 0
          %s217 = smul.addr %s216, 4
          %s218 = scalar_lea.vmem %s4, %s217
        $region24: #{res_block_forward.5} parent=11 // pred_fallthru
          _
      $region12: #{res_block_forward.5} parent=5 // pred_fallthru
        _
      %p219 = scmp.lt.s32.totalorder %s14, 2
      // Predicated region
      $region25: #{res_block_forward.5} parent=5 // pred_check
        %p220 = pneg %p219
      $region26: #{res_block_forward.5} parent=5 // pred_check_branch
        %222 = sbr.rel (%p220) target = $region28
      $region27: #{res_block_forward.5} parent=5 // pred_region
        // Predicated region
        $region29: #{res_block_forward.5} parent=27 // pred_check
          %p223 = pneg %p46
        $region30: #{res_block_forward.5} parent=27 // pred_check_branch
          %225 = sbr.rel (%p223) target = $region32
        $region31: #{res_block_forward.5} parent=27 // pred_region
          %p226 = scmp.lt.s32.totalorder %s21, 1
          %s227 = scalar_select %p226, %s21, 1
          %s228 = smul.addr %s227, 20
          %s229 = smul.addr %s228, 4
          %s230 = scalar_lea.vmem %s0, %s229
        $region32: #{res_block_forward.5} parent=27 // pred_fallthru
          _
        // Predicated region
        $region33: #{res_block_forward.5} parent=27 // pred_check
          %p231 = pneg %p124
        $region34: #{res_block_forward.5} parent=27 // pred_check_branch
          %233 = sbr.rel (%p231) target = $region36
        $region35: #{res_block_forward.5} parent=27 // pred_region
          %p234 = scmp.lt.s32.totalorder %s21, 1
          %s235 = scalar_select %p234, %s21, 1
          %s236 = smul.addr %s235, 8
          %s237 = smul.addr %s236, 8
          %s238 = scalar_lea.vmem %s3, %s237
        $region36: #{res_block_forward.5} parent=27 // pred_fallthru
          _
      $region28: #{res_block_forward.5} parent=5 // pred_fallthru
        _
      %p239 = scmp.le.s32.totalorder 1, %s14
      %p240 = scmp.lt.s32.totalorder %s14, 3
      %p241 = pnand %p239, %p240
      %p242 = pneg %p241
      // Predicated region
      $region37: #{res_block_forward.5} parent=5 // pred_check
        _
      $region38: #{res_block_forward.5} parent=5 // pred_check_branch
        %244 = sbr.rel (%p241) target = $region40
      $region39: #{res_block_forward.5} parent=5 // pred_region
        %s245 = ssub.s32 %s14, 1
        %p246 = scmp.lt.s32.totalorder %s23, 1
        %s247 = scalar_select %p246, %s23, 1
        %s248 = smul.addr %s247, 20
        %s249 = smul.addr %s248, 4
        %s250 = scalar_lea.vmem %s0, %s249
        %p251 = pneg %p52
        %p252 = pneg %p49
        %p253 = scmp.lt.s32.totalorder %s24, 0
        %s254 = scalar_select %p253, %s24, 0
        %s255 = smul.addr %s254, 4
        %s256 = scalar_lea.vmem %s1, %s255
        %p257 = pneg %p78
        %p258 = pneg %p75
        %p259 = scmp.lt.s32.totalorder %s24, 0
        %s260 = scalar_select %p259, %s24, 0
        %s261 = scalar_lea.vmem %s2, %s260
        %p262 = pneg %p104
        %p263 = pneg %p101
        %p264 = scmp.lt.s32.totalorder %s23, 1
        %s265 = scalar_select %p264, %s23, 1
        %s266 = smul.addr %s265, 8
        %s267 = smul.addr %s266, 8
        %s268 = scalar_lea.vmem %s3, %s267
        %p269 = pneg %p130
        %p270 = pneg %p127
        %p271 = scmp.lt.s32.totalorder %s24, 0
        %s272 = scalar_select %p271, %s24, 0
        %s273 = smul.addr %s272, 4
        %s274 = scalar_lea.vmem %s4, %s273
        %p275 = pneg %p156
        %p276 = pneg %p153
        %p277 = pneg %p184
        %p278 = pneg %p181
        %s279 = sand.u32 %s171, 1
        %s280 = scalar_lea.sflag [#allocation3], %s279
        %s281 = sand.u32 %s171, 1
        %s282 = smul.addr %s281, 64
        %s283 = scalar_lea.vmem [#allocation2], %s282
        %p284 = scmp.lt.s32.totalorder %s23, 1
        %s285 = scalar_select %p284, %s23, 1
        %s286 = smul.addr %s285, 20
        %s287 = smul.addr %s286, 4
        %s288 = scalar_lea.vmem %s0, %s287
        %p289 = scmp.lt.s32.totalorder %s24, 0
        %s290 = scalar_select %p289, %s24, 0
        %s291 = smul.addr %s290, 4
        %s292 = scalar_lea.vmem %s1, %s291
        %p293 = scmp.lt.s32.totalorder %s24, 0
        %s294 = scalar_select %p293, %s24, 0
        %s295 = scalar_lea.vmem %s2, %s294
        %p296 = scmp.lt.s32.totalorder %s23, 1
        %s297 = scalar_select %p296, %s23, 1
        %s298 = smul.addr %s297, 8
        %s299 = smul.addr %s298, 8
        %s300 = scalar_lea.vmem %s3, %s299
        %p301 = scmp.lt.s32.totalorder %s24, 0
        %s302 = scalar_select %p301, %s24, 0
        %s303 = smul.addr %s302, 4
        %s304 = scalar_lea.vmem %s4, %s303
        %v306 = vld [vmem:[%s288] sm:$0xf]
        %v307 = vld [vmem:[%s288 + $0x4] sm:$0x1]
        %v308 = vld [vmem:[%s288 + $0x8] sm:$0xf]
        %v309 = vld [vmem:[%s288 + $0xc] sm:$0x1]
        %v310 = vld [vmem:[%s288 + $0x10] sm:$0xf]
        %v311 = vld [vmem:[%s288 + $0x14] sm:$0x1]
        %v312 = vld [vmem:[%s288 + $0x18] sm:$0xf]
        %v313 = vld [vmem:[%s288 + $0x1c] sm:$0x1]
        %v314 = vld [vmem:[%s288 + $0x20] sm:$0xf]
        %v315 = vld [vmem:[%s288 + $0x24] sm:$0x1]
        %v316 = vld [vmem:[%s288 + $0x28] sm:$0xf]
        %v317 = vld [vmem:[%s288 + $0x2c] sm:$0x1]
        %v318 = vld [vmem:[%s288 + $0x30] sm:$0xf]
        %v319 = vld [vmem:[%s288 + $0x34] sm:$0x1]
        %v320 = vld [vmem:[%s288 + $0x38] sm:$0xf]
        %v321 = vld [vmem:[%s288 + $0x3c] sm:$0x1]
        %v322 = vld [vmem:[%s288 + $0x40] sm:$0xf]
        %v323 = vld [vmem:[%s288 + $0x44] sm:$0x1]
        %v324 = vld [vmem:[%s288 + $0x48] sm:$0xf]
        %v325 = vld [vmem:[%s288 + $0x4c] sm:$0x1]
        %vm326 = vsmask.f32 3328
        %vm327 = vsmask.f32 7440
        %vm328 = vmor %vm326, %vm327
        %v330 = vshrl.u32 %v306, 16
        %v332 = vrot.slane %v330, 4
        %v333 = vshll.u32 %v306, 16
        %v335 = vrot.slane %v333, 5
        %v336 = vor.u32 %v332, %v335
        %v337 = vrot.slane %v336, 4
        %v339 = vshll.u32 %v307, 16
        %v341 = vrot.slane %v339, 5
        %v342 = vsel %vm328, %v337, %v341
        %v344 = vshrl.u32 %v308, 16
        %v346 = vrot.slane %v344, 4
        %v347 = vshll.u32 %v308, 16
        %v349 = vrot.slane %v347, 5
        %v350 = vor.u32 %v346, %v349
        %v351 = vrot.slane %v350, 4
        %v353 = vshll.u32 %v309, 16
        %v355 = vrot.slane %v353, 5
        %v356 = vsel %vm328, %v351, %v355
        %v358 = vshrl.u32 %v310, 16
        %v360 = vrot.slane %v358, 4
        %v361 = vshll.u32 %v310, 16
        %v363 = vrot.slane %v361, 5
        %v364 = vor.u32 %v360, %v363
        %v365 = vrot.slane %v364, 4
        %v367 = vshll.u32 %v311, 16
        %v369 = vrot.slane %v367, 5
        %v370 = vsel %vm328, %v365, %v369
        %v372 = vshrl.u32 %v312, 16
        %v374 = vrot.slane %v372, 4
        %v375 = vshll.u32 %v312, 16
        %v377 = vrot.slane %v375, 5
        %v378 = vor.u32 %v374, %v377
        %v379 = vrot.slane %v378, 4
        %v381 = vshll.u32 %v313, 16
        %v383 = vrot.slane %v381, 5
        %v384 = vsel %vm328, %v379, %v383
        %v386 = vshrl.u32 %v314, 16
        %v388 = vrot.slane %v386, 4
        %v389 = vshll.u32 %v314, 16
        %v391 = vrot.slane %v389, 5
        %v392 = vor.u32 %v388, %v391
        %v393 = vrot.slane %v392, 4
        %v395 = vshll.u32 %v315, 16
        %v397 = vrot.slane %v395, 5
        %v398 = vsel %vm328, %v393, %v397
        %v400 = vshrl.u32 %v316, 16
        %v402 = vrot.slane %v400, 4
        %v403 = vshll.u32 %v316, 16
        %v405 = vrot.slane %v403, 5
        %v406 = vor.u32 %v402, %v405
        %v407 = vrot.slane %v406, 4
        %v409 = vshll.u32 %v317, 16
        %v411 = vrot.slane %v409, 5
        %v412 = vsel %vm328, %v407, %v411
        %v414 = vshrl.u32 %v318, 16
        %v416 = vrot.slane %v414, 4
        %v417 = vshll.u32 %v318, 16
        %v419 = vrot.slane %v417, 5
        %v420 = vor.u32 %v416, %v419
        %v421 = vrot.slane %v420, 4
        %v423 = vshll.u32 %v319, 16
        %v425 = vrot.slane %v423, 5
        %v426 = vsel %vm328, %v421, %v425
        %v428 = vshrl.u32 %v320, 16
        %v430 = vrot.slane %v428, 4
        %v431 = vshll.u32 %v320, 16
        %v433 = vrot.slane %v431, 5
        %v434 = vor.u32 %v430, %v433
        %v435 = vrot.slane %v434, 4
        %v437 = vshll.u32 %v321, 16
        %v439 = vrot.slane %v437, 5
        %v440 = vsel %vm328, %v435, %v439
        %vm457 = vcmask 1042432
        %vm458 = vcmask 1046532
        %vm459 = vmor %vm457, %vm458
        %v460 = vrot.slane %v306, 5
        %v461 = vrot.slane %v460, 4
        %v462 = vrot.slane %v307, 5
        %v463 = vsel %vm459, %v461, %v462
        %v464 = vrot.slane %v308, 5
        %v465 = vrot.slane %v464, 4
        %v466 = vrot.slane %v309, 5
        %v467 = vsel %vm459, %v465, %v466
        %v468 = vrot.slane %v310, 5
        %v469 = vrot.slane %v468, 4
        %v470 = vrot.slane %v311, 5
        %v471 = vsel %vm459, %v469, %v470
        %v472 = vrot.slane %v312, 5
        %v473 = vrot.slane %v472, 4
        %v474 = vrot.slane %v313, 5
        %v475 = vsel %vm459, %v473, %v474
        %v476 = vrot.slane %v314, 5
        %v477 = vrot.slane %v476, 4
        %v478 = vrot.slane %v315, 5
        %v479 = vsel %vm459, %v477, %v478
        %v480 = vrot.slane %v316, 5
        %v481 = vrot.slane %v480, 4
        %v482 = vrot.slane %v317, 5
        %v483 = vsel %vm459, %v481, %v482
        %v484 = vrot.slane %v318, 5
        %v485 = vrot.slane %v484, 4
        %v486 = vrot.slane %v319, 5
        %v487 = vsel %vm459, %v485, %v486
        %v488 = vrot.slane %v320, 5
        %v489 = vrot.slane %v488, 4
        %v490 = vrot.slane %v321, 5
        %v491 = vsel %vm459, %v489, %v490
        %v493 = vshrl.u32 %v322, 16
        %v495 = vrot.slane %v493, 4
        %v496 = vshll.u32 %v322, 16
        %v498 = vrot.slane %v496, 5
        %v499 = vor.u32 %v495, %v498
        %v500 = vrot.slane %v499, 4
        %v502 = vshll.u32 %v323, 16
        %v504 = vrot.slane %v502, 5
        %v505 = vsel %vm328, %v500, %v504
        %v508 = vrot.slane %v322, 5
        %v509 = vrot.slane %v508, 4
        %v510 = vrot.slane %v323, 5
        %v511 = vsel %vm459, %v509, %v510
        %v513 = vshrl.u32 %v324, 16
        %v515 = vrot.slane %v513, 4
        %v516 = vshll.u32 %v324, 16
        %v518 = vrot.slane %v516, 5
        %v519 = vor.u32 %v515, %v518
        %v520 = vrot.slane %v519, 4
        %v522 = vshll.u32 %v325, 16
        %v524 = vrot.slane %v522, 5
        %v525 = vsel %vm328, %v520, %v524
        %v528 = vrot.slane %v324, 5
        %v529 = vrot.slane %v528, 4
        %v530 = vrot.slane %v325, 5
        %v531 = vsel %vm459, %v529, %v530
        %v532 = vunpack.c.l.b16 %v306
        %v533 = vunpack.c.l.b16 %v308
        %v534 = vunpack.c.l.b16 %v310
        %v535 = vunpack.c.l.b16 %v312
        %v536 = vunpack.c.l.b16 %v314
        %v537 = vunpack.c.l.b16 %v316
        %v538 = vunpack.c.l.b16 %v318
        %v539 = vunpack.c.l.b16 %v320
        %v540 = vpack.c.b16 %v533, %v532
        %v541 = vpack.c.b16 %v535, %v534
        %v542 = vpack.c.b16 %v537, %v536
        %v543 = vpack.c.b16 %v539, %v538
        %v544 = vunpack.c.l.b16 %v342
        %v545 = vunpack.c.l.b16 %v356
        %v546 = vunpack.c.l.b16 %v370
        %v547 = vunpack.c.l.b16 %v384
        %v548 = vunpack.c.l.b16 %v398
        %v549 = vunpack.c.l.b16 %v412
        %v550 = vunpack.c.l.b16 %v426
        %v551 = vunpack.c.l.b16 %v440
        %v552 = vpack.c.b16 %v545, %v544
        %v553 = vpack.c.b16 %v547, %v546
        %v554 = vpack.c.b16 %v549, %v548
        %v555 = vpack.c.b16 %v551, %v550
        %556 = vrot.lane.b32.xlu0 %v552, 32
        %v557 = vpop.permute.xlu0 %556
        %558 = vrot.lane.b32.xlu0 %v553, 32
        %v559 = vpop.permute.xlu0 %558
        %560 = vrot.lane.b32.xlu0 %v554, 32
        %v561 = vpop.permute.xlu0 %560
        %562 = vrot.lane.b32.xlu0 %v555, 32
        %v563 = vpop.permute.xlu0 %562
        %v564 = vunpack.c.l.b16 %v463
        %v565 = vunpack.c.l.b16 %v467
        %v566 = vunpack.c.l.b16 %v471
        %v567 = vunpack.c.l.b16 %v475
        %v568 = vunpack.c.l.b16 %v479
        %v569 = vunpack.c.l.b16 %v483
        %v570 = vunpack.c.l.b16 %v487
        %v571 = vunpack.c.l.b16 %v491
        %v572 = vpack.c.b16 %v565, %v564
        %v573 = vpack.c.b16 %v567, %v566
        %v574 = vpack.c.b16 %v569, %v568
        %v575 = vpack.c.b16 %v571, %v570
        %576 = vrot.lane.b32.xlu0 %v572, 64
        %v577 = vpop.permute.xlu0 %576
        %578 = vrot.lane.b32.xlu0 %v573, 64
        %v579 = vpop.permute.xlu0 %578
        %580 = vrot.lane.b32.xlu0 %v574, 64
        %v581 = vpop.permute.xlu0 %580
        %582 = vrot.lane.b32.xlu0 %v575, 64
        %v583 = vpop.permute.xlu0 %582
        %v584 = vunpack.c.l.b16 %v322
        %v585 = vpack.c.b16 %v534, %v533
        %v586 = vpack.c.b16 %v536, %v535
        %v587 = vpack.c.b16 %v538, %v537
        %v588 = vpack.c.b16 %v584, %v539
        %589 = vrot.lane.b32.xlu0 %v585, 96
        %v590 = vpop.permute.xlu0 %589
        %591 = vrot.lane.b32.xlu0 %v586, 96
        %v592 = vpop.permute.xlu0 %591
        %593 = vrot.lane.b32.xlu0 %v587, 96
        %v594 = vpop.permute.xlu0 %593
        %595 = vrot.lane.b32.xlu0 %v588, 96
        %v596 = vpop.permute.xlu0 %595
        %v597 = vunpack.c.l.b16 %v505
        %v598 = vpack.c.b16 %v546, %v545
        %v599 = vpack.c.b16 %v548, %v547
        %v600 = vpack.c.b16 %v550, %v549
        %v601 = vpack.c.b16 %v597, %v551
        %v602 = vunpack.c.l.b16 %v511
        %v603 = vpack.c.b16 %v566, %v565
        %v604 = vpack.c.b16 %v568, %v567
        %v605 = vpack.c.b16 %v570, %v569
        %v606 = vpack.c.b16 %v602, %v571
        %607 = vrot.lane.b32.xlu0 %v603, 32
        %v608 = vpop.permute.xlu0 %607
        %609 = vrot.lane.b32.xlu0 %v604, 32
        %v610 = vpop.permute.xlu0 %609
        %611 = vrot.lane.b32.xlu0 %v605, 32
        %v612 = vpop.permute.xlu0 %611
        %613 = vrot.lane.b32.xlu0 %v606, 32
        %v614 = vpop.permute.xlu0 %613
        %v615 = vunpack.c.l.b16 %v324
        %v616 = vpack.c.b16 %v615, %v584
        %617 = vrot.lane.b32.xlu0 %v541, 64
        %v618 = vpop.permute.xlu0 %617
        %619 = vrot.lane.b32.xlu0 %v542, 64
        %v620 = vpop.permute.xlu0 %619
        %621 = vrot.lane.b32.xlu0 %v543, 64
        %v622 = vpop.permute.xlu0 %621
        %623 = vrot.lane.b32.xlu0 %v616, 64
        %v624 = vpop.permute.xlu0 %623
        %v625 = vunpack.c.l.b16 %v525
        %v626 = vpack.c.b16 %v625, %v597
        %627 = vrot.lane.b32.xlu0 %v553, 96
        %v628 = vpop.permute.xlu0 %627
        %629 = vrot.lane.b32.xlu0 %v554, 96
        %v630 = vpop.permute.xlu0 %629
        %631 = vrot.lane.b32.xlu0 %v555, 96
        %v632 = vpop.permute.xlu0 %631
        %633 = vrot.lane.b32.xlu0 %v626, 96
        %v634 = vpop.permute.xlu0 %633
        %v635 = vunpack.c.l.b16 %v531
        %v636 = vpack.c.b16 %v635, %v602
        %vm637 = vcmask 261120
        %v640 = vsel %vm637, %v540, %v557
        %v643 = vsel %vm637, %v541, %v559
        %v646 = vsel %vm637, %v542, %v561
        %v649 = vsel %vm637, %v543, %v563
        %vm650 = vcmask 523264
        %v652 = vsel %vm650, %v640, %v577
        %v654 = vsel %vm650, %v643, %v579
        %v656 = vsel %vm650, %v646, %v581
        %v658 = vsel %vm650, %v649, %v583
        %vm659 = vcmask 785408
        %v661 = vsel %vm659, %v652, %v590
        %v664 = vsel %vm659, %v654, %v592
        %v667 = vsel %vm659, %v656, %v594
        %v670 = vsel %vm659, %v658, %v596
        %v674 = vsel %vm637, %v598, %v608
        %v677 = vsel %vm637, %v599, %v610
        %v680 = vsel %vm637, %v600, %v612
        %v683 = vsel %vm637, %v601, %v614
        %v685 = vsel %vm650, %v674, %v618
        %v687 = vsel %vm650, %v677, %v620
        %v689 = vsel %vm650, %v680, %v622
        %v691 = vsel %vm650, %v683, %v624
        %v693 = vsel %vm659, %v685, %v628
        %v696 = vsel %vm659, %v687, %v630
        %v699 = vsel %vm659, %v689, %v632
        %v702 = vsel %vm659, %v691, %v634
        %v704 = vld [vmem:[%s292] sm:$0xf]
        %v705 = vld [vmem:[%s292 + $0x4] sm:$0xf]
        %v706 = vld [vmem:[%s292 + $0x8] sm:$0xf]
        %v707 = vld [vmem:[%s292 + $0xc] sm:$0xf]
        %v708 = vld [vmem:[%s292 + $0x10] sm:$0xf]
        %v709 = vld [vmem:[%s292 + $0x14] sm:$0xf]
        %v710 = vld [vmem:[%s292 + $0x18] sm:$0xf]
        %v711 = vld [vmem:[%s292 + $0x1c] sm:$0xf]
        %v712 = vld [vmem:[%s292 + $0x20] sm:$0xf]
        %v713 = vld [vmem:[%s292 + $0x24] sm:$0xf]
        %v714 = vld [vmem:[%s292 + $0x28] sm:$0xf]
        %v715 = vld [vmem:[%s292 + $0x2c] sm:$0xf]
        %v716 = vld [vmem:[%s292 + $0x30] sm:$0xf]
        %v717 = vld [vmem:[%s292 + $0x34] sm:$0xf]
        %v718 = vld [vmem:[%s292 + $0x38] sm:$0xf]
        %v719 = vld [vmem:[%s292 + $0x3c] sm:$0xf]
        %v720 = vld [vmem:[%s292 + $0x40] sm:$0xf]
        %v721 = vld [vmem:[%s292 + $0x44] sm:$0xf]
        %v722 = vld [vmem:[%s292 + $0x48] sm:$0xf]
        %v723 = vld [vmem:[%s292 + $0x4c] sm:$0xf]
        %v724 = vld [vmem:[%s292 + $0x50] sm:$0xf]
        %v725 = vld [vmem:[%s292 + $0x54] sm:$0xf]
        %v726 = vld [vmem:[%s292 + $0x58] sm:$0xf]
        %v727 = vld [vmem:[%s292 + $0x5c] sm:$0xf]
        %v728 = vld [vmem:[%s292 + $0x60] sm:$0xf]
        %v729 = vld [vmem:[%s292 + $0x64] sm:$0xf]
        %v730 = vld [vmem:[%s292 + $0x68] sm:$0xf]
        %v731 = vld [vmem:[%s292 + $0x6c] sm:$0xf]
        %v732 = vld [vmem:[%s292 + $0x70] sm:$0xf]
        %v733 = vld [vmem:[%s292 + $0x74] sm:$0xf]
        %v734 = vld [vmem:[%s292 + $0x78] sm:$0xf]
        %v735 = vld [vmem:[%s292 + $0x7c] sm:$0xf]
        %v736 = vld [vmem:[%s292 + $0x80] sm:$0xf]
        %v737 = vld [vmem:[%s292 + $0x84] sm:$0xf]
        %v738 = vld [vmem:[%s292 + $0x88] sm:$0xf]
        %v739 = vld [vmem:[%s292 + $0x8c] sm:$0xf]
        %v740 = vld [vmem:[%s295] sm:$0x1]
        %v742 = vlaneseq
        %v743 = vshrl.u32 %v742, 7
        %v744 = vsub.s32 0, %v743
        %v745 = vrot.slane %v740, %v744
        %v783 = vunpack.c.l.b16 %v704
        %v784 = vunpack.c.l.b16 %v705
        %v785 = vunpack.c.l.b16 %v706
        %v786 = vunpack.c.l.b16 %v707
        %v787 = vunpack.c.l.b16 %v708
        %v788 = vunpack.c.l.b16 %v709
        %v789 = vunpack.c.l.b16 %v710
        %v790 = vunpack.c.l.b16 %v711
        %v791 = vunpack.c.l.b16 %v712
        %v792 = vunpack.c.l.b16 %v713
        %v793 = vunpack.c.l.b16 %v714
        %v794 = vunpack.c.l.b16 %v715
        %v795 = vunpack.c.l.b16 %v716
        %v796 = vunpack.c.l.b16 %v717
        %v797 = vunpack.c.l.b16 %v718
        %v798 = vunpack.c.l.b16 %v719
        %v799 = vunpack.c.l.b16 %v720
        %v800 = vunpack.c.l.b16 %v721
        %v801 = vunpack.c.l.b16 %v722
        %v802 = vunpack.c.l.b16 %v723
        %v803 = vunpack.c.l.b16 %v724
        %v804 = vunpack.c.l.b16 %v725
        %v805 = vunpack.c.l.b16 %v726
        %v806 = vunpack.c.l.b16 %v727
        %v807 = vunpack.c.l.b16 %v728
        %v808 = vunpack.c.l.b16 %v729
        %v809 = vunpack.c.l.b16 %v730
        %v810 = vunpack.c.l.b16 %v731
        %v811 = vunpack.c.l.b16 %v732
        %v812 = vunpack.c.l.b16 %v733
        %v813 = vunpack.c.l.b16 %v734
        %v814 = vunpack.c.l.b16 %v735
        %v815 = vunpack.c.l.b16 %v736
        %v816 = vunpack.c.l.b16 %v737
        %v817 = vunpack.c.l.b16 %v738
        %v818 = vunpack.c.l.b16 %v739
        %v819 = vpack.c.b16 %v784, %v783
        %v820 = vpack.c.b16 %v786, %v785
        %v821 = vpack.c.b16 %v788, %v787
        %v822 = vpack.c.b16 %v790, %v789
        %v823 = vpack.c.b16 %v792, %v791
        %v824 = vpack.c.b16 %v794, %v793
        %v825 = vpack.c.b16 %v796, %v795
        %v826 = vpack.c.b16 %v798, %v797
        %v827 = vpack.c.b16 %v800, %v799
        %v828 = vpack.c.b16 %v802, %v801
        %v829 = vpack.c.b16 %v804, %v803
        %v830 = vpack.c.b16 %v806, %v805
        %v831 = vpack.c.b16 %v808, %v807
        %v832 = vpack.c.b16 %v810, %v809
        %v833 = vpack.c.b16 %v812, %v811
        %v834 = vpack.c.b16 %v814, %v813
        %v835 = vpack.c.b16 %v816, %v815
        %v836 = vpack.c.b16 %v818, %v817
        %v856 = vsel %vm637, %v573, 0
        %v859 = vsel %vm637, %v574, 0
        %v862 = vsel %vm637, %v575, 0
        %v865 = vsel %vm637, %v636, 0
        %867 = vmatprep.subr.bf16.mxu0 0
        %868 = vmatpush1.bf16.msra.mxu0 %v826
        %869 = vmatprep.subr.bf16.mxu0 0
        %870 = vmatpush1.bf16.msra.mxu0 %v825
        %871 = vmatprep.subr.bf16.mxu0 0
        %872 = vmatpush1.bf16.msra.mxu0 %v824
        %873 = vmatprep.subr.bf16.mxu0 0
        %874 = vmatpush1.bf16.msra.mxu0 %v823
        %875 = vmatprep.subr.bf16.mxu0 0
        %876 = vmatpush1.bf16.msra.mxu0 %v822
        %877 = vmatprep.subr.bf16.mxu0 0
        %878 = vmatpush1.bf16.msra.mxu0 %v821
        %879 = vmatprep.subr.bf16.mxu0 0
        %880 = vmatpush1.bf16.msra.mxu0 %v820
        %881 = vmatprep.subr.bf16.mxu0 0
        %882 = vmatpush1.bf16.msra.mxu0 %v819
        %883 = vmatprep.subr.bf16.mxu0 0
        %884 = vmatpush2.bf16.msra.mxu0 %v834
        %885 = vmatprep.subr.bf16.mxu0 0
        %886 = vmatpush2.bf16.msra.mxu0 %v833
        %887 = vmatprep.subr.bf16.mxu0 0
        %888 = vmatpush2.bf16.msra.mxu0 %v832
        %889 = vmatprep.subr.bf16.mxu0 0
        %890 = vmatpush2.bf16.msra.mxu0 %v831
        %891 = vmatprep.subr.bf16.mxu0 0
        %892 = vmatpush2.bf16.msra.mxu0 %v830
        %893 = vmatprep.subr.bf16.mxu0 0
        %894 = vmatpush2.bf16.msra.mxu0 %v829
        %895 = vmatprep.subr.bf16.mxu0 0
        %896 = vmatpush2.bf16.msra.mxu0 %v828
        %897 = vmatprep.subr.bf16.mxu0 0
        %898 = vmatpush2.bf16.msra.mxu0 %v827
        %899 = vmatprep.mubr.bf16.mxu0 %v693
        %900 = vmatmul.mubr.bf16.gmra.mxu0 %v661
        %v901 = vpop.f32.mrf.mxu0
        %v902 = vadd.f32 %v745, %v901
        %v903 = vpop.f32.mrf.mxu0
        %v904 = vpop.f32.mrf.mxu0
        %v905 = vadd.f32 %v745, %v904
        %v906 = vpop.f32.mrf.mxu0
        %907 = vmatprep.mubr.bf16.mxu0 %v696
        %908 = vmatmul.mubr.bf16.gmra.mxu0 %v664
        %v909 = vpop.f32.mrf.mxu0
        %v910 = vadd.f32 %v745, %v909
        %v911 = vpop.f32.mrf.mxu0
        %v912 = vpop.f32.mrf.mxu0
        %v913 = vadd.f32 %v745, %v912
        %v914 = vpop.f32.mrf.mxu0
        %915 = vmatprep.mubr.bf16.mxu0 %v699
        %916 = vmatmul.mubr.bf16.gmra.mxu0 %v667
        %v917 = vpop.f32.mrf.mxu0
        %v918 = vadd.f32 %v745, %v917
        %v919 = vpop.f32.mrf.mxu0
        %v920 = vpop.f32.mrf.mxu0
        %v921 = vadd.f32 %v745, %v920
        %v922 = vpop.f32.mrf.mxu0
        %923 = vmatprep.mubr.bf16.mxu0 %v702
        %924 = vmatmul.mubr.bf16.gmra.mxu0 %v670
        %v925 = vpop.f32.mrf.mxu0
        %v926 = vadd.f32 %v745, %v925
        %v927 = vpop.f32.mrf.mxu0
        %v928 = vpop.f32.mrf.mxu0
        %v929 = vadd.f32 %v745, %v928
        %v930 = vpop.f32.mrf.mxu0
        %931 = vdwg.mxu0
        %932 = vmatprep.subr.bf16.mxu0 0
        %933 = vmatpush1.bf16.msra.mxu0 0
        %934 = vmatprep.subr.bf16.mxu0 0
        %935 = vmatpush1.bf16.msra.mxu0 0
        %936 = vmatprep.subr.bf16.mxu0 0
        %937 = vmatpush1.bf16.msra.mxu0 0
        %938 = vmatprep.subr.bf16.mxu0 0
        %939 = vmatpush1.bf16.msra.mxu0 0
        %940 = vmatprep.subr.bf16.mxu0 0
        %941 = vmatpush1.bf16.msra.mxu0 0
        %942 = vmatprep.subr.bf16.mxu0 0
        %943 = vmatpush1.bf16.msra.mxu0 0
        %944 = vmatprep.subr.bf16.mxu0 0
        %945 = vmatpush1.bf16.msra.mxu0 %v836
        %946 = vmatprep.subr.bf16.mxu0 0
        %947 = vmatpush1.bf16.msra.mxu0 %v835
        %948 = vmatprep.subr.bf16.mxu0 0
        %949 = vmatpush2.bf16.msra.mxu0 0
        %950 = vmatprep.subr.bf16.mxu0 0
        %951 = vmatpush2.bf16.msra.mxu0 0
        %952 = vmatprep.subr.bf16.mxu0 0
        %953 = vmatpush2.bf16.msra.mxu0 0
        %954 = vmatprep.subr.bf16.mxu0 0
        %955 = vmatpush2.bf16.msra.mxu0 0
        %956 = vmatprep.subr.bf16.mxu0 0
        %957 = vmatpush2.bf16.msra.mxu0 0
        %958 = vmatprep.subr.bf16.mxu0 0
        %959 = vmatpush2.bf16.msra.mxu0 0
        %960 = vmatprep.subr.bf16.mxu0 0
        %961 = vmatpush2.bf16.msra.mxu0 0
        %962 = vmatprep.subr.bf16.mxu0 0
        %963 = vmatpush2.bf16.msra.mxu0 0
        %964 = vmatprep.mubr.bf16.mxu0 0
        %965 = vmatmul.mubr.bf16.gmra.mxu0 %v856
        %v966 = vpop.f32.mrf.mxu0
        %v967 = vadd.f32 %v902, %v966
        %v968 = vpop.f32.mrf.mxu0
        %v969 = vpop.f32.mrf.mxu0
        %v970 = vadd.f32 %v905, %v969
        %v971 = vpop.f32.mrf.mxu0
        %972 = vmatprep.mubr.bf16.mxu0 0
        %973 = vmatmul.mubr.bf16.gmra.mxu0 %v859
        %v974 = vpop.f32.mrf.mxu0
        %v975 = vadd.f32 %v910, %v974
        %v976 = vpop.f32.mrf.mxu0
        %v977 = vpop.f32.mrf.mxu0
        %v978 = vadd.f32 %v913, %v977
        %v979 = vpop.f32.mrf.mxu0
        %980 = vmatprep.mubr.bf16.mxu0 0
        %981 = vmatmul.mubr.bf16.gmra.mxu0 %v862
        %v982 = vpop.f32.mrf.mxu0
        %v983 = vadd.f32 %v918, %v982
        %v984 = vpop.f32.mrf.mxu0
        %v985 = vpop.f32.mrf.mxu0
        %v986 = vadd.f32 %v921, %v985
        %v987 = vpop.f32.mrf.mxu0
        %988 = vmatprep.mubr.bf16.mxu0 0
        %989 = vmatmul.mubr.bf16.gmra.mxu0 %v865
        %v990 = vpop.f32.mrf.mxu0
        %v991 = vadd.f32 %v926, %v990
        %v992 = vpop.f32.mrf.mxu0
        %v993 = vpop.f32.mrf.mxu0
        %v994 = vadd.f32 %v929, %v993
        %v995 = vpop.f32.mrf.mxu0
        %996 = vdwg.mxu0
        %v997 = vld [vmem:[%s300] sm:$0xff]
        %v998 = vld [vmem:[%s300 + $0x8] sm:$0xff]
        %v999 = vld [vmem:[%s300 + $0x10] sm:$0xff]
        %v1000 = vld [vmem:[%s300 + $0x18] sm:$0xff]
        %v1001 = vld [vmem:[%s300 + $0x20] sm:$0xff]
        %v1002 = vld [vmem:[%s300 + $0x28] sm:$0xff]
        %v1003 = vld [vmem:[%s300 + $0x30] sm:$0xff]
        %v1004 = vld [vmem:[%s300 + $0x38] sm:$0xff]
        %v1005 = vpack.c.bf16 %v998, %v997
        %v1006 = vpack.c.bf16 %v1000, %v999
        %v1007 = vpack.c.bf16 %v1002, %v1001
        %v1008 = vpack.c.bf16 %v1004, %v1003
        %v1009 = vld [vmem:[%s304] sm:$0xf]
        %v1010 = vld [vmem:[%s304 + $0x4] sm:$0xf]
        %v1011 = vld [vmem:[%s304 + $0x8] sm:$0xf]
        %v1012 = vld [vmem:[%s304 + $0xc] sm:$0xf]
        %v1017 = vunpack.c.l.b16 %v1009
        %v1018 = vunpack.c.l.b16 %v1010
        %v1019 = vunpack.c.l.b16 %v1011
        %v1020 = vunpack.c.l.b16 %v1012
        %v1021 = vpack.c.b16 %v1018, %v1017
        %v1022 = vpack.c.b16 %v1020, %v1019
        %v1026 = vsel %vm637, %v1005, 0
        %v1029 = vsel %vm637, %v1006, 0
        %v1032 = vsel %vm637, %v1007, 0
        %v1035 = vsel %vm637, %v1008, 0
        %1037 = vmatprep.subr.bf16.mxu0 0
        %1038 = vmatpush1.bf16.msra.mxu0 0
        %1039 = vmatprep.subr.bf16.mxu0 0
        %1040 = vmatpush1.bf16.msra.mxu0 0
        %1041 = vmatprep.subr.bf16.mxu0 0
        %1042 = vmatpush1.bf16.msra.mxu0 0
        %1043 = vmatprep.subr.bf16.mxu0 0
        %1044 = vmatpush1.bf16.msra.mxu0 0
        %1045 = vmatprep.subr.bf16.mxu0 0
        %1046 = vmatpush1.bf16.msra.mxu0 0
        %1047 = vmatprep.subr.bf16.mxu0 0
        %1048 = vmatpush1.bf16.msra.mxu0 0
        %1049 = vmatprep.subr.bf16.mxu0 0
        %1050 = vmatpush1.bf16.msra.mxu0 %v1022
        %1051 = vmatprep.subr.bf16.mxu0 0
        %1052 = vmatpush1.bf16.msra.mxu0 %v1021
        %1053 = vmatprep.subr.bf16.mxu0 0
        %1054 = vmatpush2.bf16.msra.mxu0 0
        %1055 = vmatprep.subr.bf16.mxu0 0
        %1056 = vmatpush2.bf16.msra.mxu0 0
        %1057 = vmatprep.subr.bf16.mxu0 0
        %1058 = vmatpush2.bf16.msra.mxu0 0
        %1059 = vmatprep.subr.bf16.mxu0 0
        %1060 = vmatpush2.bf16.msra.mxu0 0
        %1061 = vmatprep.subr.bf16.mxu0 0
        %1062 = vmatpush2.bf16.msra.mxu0 0
        %1063 = vmatprep.subr.bf16.mxu0 0
        %1064 = vmatpush2.bf16.msra.mxu0 0
        %1065 = vmatprep.subr.bf16.mxu0 0
        %1066 = vmatpush2.bf16.msra.mxu0 0
        %1067 = vmatprep.subr.bf16.mxu0 0
        %1068 = vmatpush2.bf16.msra.mxu0 0
        %1069 = vmatprep.mubr.bf16.mxu0 0
        %1070 = vmatmul.mubr.bf16.gmra.mxu0 %v1026
        %v1071 = vpop.f32.mrf.mxu0
        %v1072 = vadd.f32 0.0, %v1071
        %v1073 = vpop.f32.mrf.mxu0
        %v1074 = vpop.f32.mrf.mxu0
        %v1075 = vadd.f32 0.0, %v1074
        %v1076 = vpop.f32.mrf.mxu0
        %1077 = vmatprep.mubr.bf16.mxu0 0
        %1078 = vmatmul.mubr.bf16.gmra.mxu0 %v1029
        %v1079 = vpop.f32.mrf.mxu0
        %v1080 = vadd.f32 0.0, %v1079
        %v1081 = vpop.f32.mrf.mxu0
        %v1082 = vpop.f32.mrf.mxu0
        %v1083 = vadd.f32 0.0, %v1082
        %v1084 = vpop.f32.mrf.mxu0
        %1085 = vmatprep.mubr.bf16.mxu0 0
        %1086 = vmatmul.mubr.bf16.gmra.mxu0 %v1032
        %v1087 = vpop.f32.mrf.mxu0
        %v1088 = vadd.f32 0.0, %v1087
        %v1089 = vpop.f32.mrf.mxu0
        %v1090 = vpop.f32.mrf.mxu0
        %v1091 = vadd.f32 0.0, %v1090
        %v1092 = vpop.f32.mrf.mxu0
        %1093 = vmatprep.mubr.bf16.mxu0 0
        %1094 = vmatmul.mubr.bf16.gmra.mxu0 %v1035
        %v1095 = vpop.f32.mrf.mxu0
        %v1096 = vadd.f32 0.0, %v1095
        %v1097 = vpop.f32.mrf.mxu0
        %v1098 = vpop.f32.mrf.mxu0
        %v1099 = vadd.f32 0.0, %v1098
        %v1100 = vpop.f32.mrf.mxu0
        %1101 = vdwg.mxu0
        %v1102 = vadd.f32 %v967, %v1072
        %v1103 = vadd.f32 %v970, %v1075
        %v1104 = vadd.f32 %v975, %v1080
        %v1105 = vadd.f32 %v978, %v1083
        %v1106 = vadd.f32 %v983, %v1088
        %v1107 = vadd.f32 %v986, %v1091
        %v1108 = vadd.f32 %v991, %v1096
        %v1109 = vadd.f32 %v994, %v1099
        %v1110 = vrcp.pop 1.41421
        %v1111 = vmul.f32 %v1102, %v1110
        %v1112 = vmul.f32 %v1103, %v1110
        %v1113 = vmul.f32 %v1104, %v1110
        %v1114 = vmul.f32 %v1105, %v1110
        %v1115 = vmul.f32 %v1106, %v1110
        %v1116 = vmul.f32 %v1107, %v1110
        %v1117 = vmul.f32 %v1108, %v1110
        %v1118 = vmul.f32 %v1109, %v1110
        %1119 = vst.msk [vmem:[%s283] sm:$0xff] %vm650, %v1111
        %1120 = vst.msk [vmem:[%s283 + $0x8] sm:$0xff] %vm650, %v1112
        %1121 = vst.msk [vmem:[%s283 + $0x10] sm:$0xff] %vm650, %v1113
        %1122 = vst.msk [vmem:[%s283 + $0x18] sm:$0xff] %vm650, %v1114
        %1123 = vst.msk [vmem:[%s283 + $0x20] sm:$0xff] %vm650, %v1115
        %1124 = vst.msk [vmem:[%s283 + $0x28] sm:$0xff] %vm650, %v1116
        %1125 = vst.msk [vmem:[%s283 + $0x30] sm:$0xff] %vm650, %v1117
        %1126 = vst.msk [vmem:[%s283 + $0x38] sm:$0xff] %vm650, %v1118
        %s1127 = sand.u32 %s171, 1
        %s1128 = scalar_lea.sflag [#allocation3], %s1127
        %s1129 = sand.u32 %s171, 1
        %s1130 = smul.addr %s1129, 64
        %s1131 = scalar_lea.vmem [#allocation2], %s1130
        // Predicated region
        $region41: #{res_block_forward.5} parent=39 // pred_check
          %p1132 = pneg %p181
        $region42: #{res_block_forward.5} parent=39 // pred_check_branch
          %1134 = sbr.rel (%p1132) target = $region44
        $region43: #{res_block_forward.5} parent=39 // pred_region
          %s1136 = ssub.s32 1024, 1024
          %1137 = vsyncadd %s1128, %s1136
          %s1138 = smul.addr %s23, 8
          %s1139 = sadd.s32 %s24, %s1138
          %s1140 = smul.addr %s1139, 128
          %s1141 = scalar_lea.hbm %s5, %s1140
          %s1142 = sshll.u32 %s1131, 4
          %s1143 = int_to_ptr.vmem [resolvable:$true] %s1142
          %1148 = dma.vmem_to_hbm [thread:$0]  %s1143, 1024, %s1141, %s1128, 128, 128, 8
        $region44: #{res_block_forward.5} parent=39 // pred_fallthru
          _
      $region40: #{res_block_forward.5} parent=5 // pred_fallthru
        _
      %p1149 = scmp.le.s32.totalorder 2, %s14
      // Predicated region
      $region45: #{res_block_forward.5} parent=5 // pred_check
        %p1150 = pneg %p1149
      $region46: #{res_block_forward.5} parent=5 // pred_check_branch
        %1152 = sbr.rel (%p1150) target = $region48
      $region47: #{res_block_forward.5} parent=5 // pred_region
        %s1153 = ssub.s32 %s14, 2
        // Predicated region
        $region49: #{res_block_forward.5} parent=47 // pred_check
          %p1154 = pneg %p187
        $region50: #{res_block_forward.5} parent=47 // pred_check_branch
          %1156 = sbr.rel (%p1154) target = $region52
        $region51: #{res_block_forward.5} parent=47 // pred_region
          %s1157 = sand.u32 %s172, 1
          %s1158 = scalar_lea.sflag [#allocation3], %s1157
          %s1159 = sand.u32 %s172, 1
          %s1160 = smul.addr %s1159, 64
          %s1161 = scalar_lea.vmem [#allocation2], %s1160
          %1162 = dma.done %s1158, 1024
        $region52: #{res_block_forward.5} parent=47 // pred_fallthru
          _
      $region48: #{res_block_forward.5} parent=5 // pred_fallthru
        _
    $region6: #{res_block_forward.5} parent=1 // loop_footer
      %s18 = sadd.s32 1, %s14
    $region7: #{res_block_forward.5} parent=1 // loop_footer_branch
      %13 = sbr.rel target = $region3
    $region8: #{res_block_forward.5} parent=1 // loop_exit
      _
    %1163 = vsyncpa [#allocation3], 1
    %s1164 = scalar_lea.sflag [#allocation3], 1
    %1165 = vsyncpa %s1164, 1

// kernel: res_block_forward.4
$region0: #{res_block_forward.4}
  #allocation0 [shape = 'u32[]', space=smem, size = 0x4, offset = 0x4, fixed_abs, tag = 'smem constant byte address 0x4 - core index']
  #allocation1 [shape = 'u32[144,128]{1,0:T(1,128)}', space=vmem, size = 0x12000, scoped, tag = 'internal scratch']
  %s0 = inlined_call_operand.vmem [shape: bf16[2,10,10,32], index: 0, kind: input, shape index: {}]
  %s1 = inlined_call_operand.vmem [shape: bf16[288,32], index: 1, kind: input, shape index: {}]
  %s2 = inlined_call_operand.vmem [shape: f32[1,32], index: 2, kind: input, shape index: {}]
  %s3 = inlined_call_operand.vmem [shape: f32[2,1,32], index: 3, kind: input, shape index: {}]
  %s4 = inlined_call_operand.vmem [shape: f32[2,1,32], index: 4, kind: input, shape index: {}]
  %s5 = inlined_call_operand.vmem [shape: bf16[2,10,10,32], index: 5, kind: output, shape index: {}]
  %s6 = sld [smem:[#allocation0]]
  $region53: #{res_block_forward.4} parent=0
    _
  %s8 = ssub.s32 1, %s6
  %s9 = scalar_select 0, %s8, %s6
  loop: start=0, step=1, limit=4
  $region2: #{res_block_forward.4} parent=0 // loop_pre_header
    _
  $region3: #{res_block_forward.4} parent=0 // loop_header
    %s11 = sphi 0, %s15
    %p12 = scmp.ge.s32.totalorder %s11, 4
    %s21 = sphi 0, %s23
    %s24 = sphi 0, %s21
    %s25 = sphi 0, %s24
    %s41 = sphi 0, %s25
    %s45 = sphi 0, %s45
    %s47 = sphi 0, %s45
    %s48 = sphi 0, %s47
    %s62 = sphi 0, %s48
    %s66 = sphi 0, %s66
    %s68 = sphi 0, %s66
    %s69 = sphi 0, %s68
    %s83 = sphi 0, %s69
    %s89 = sphi 0, %s91
    %s92 = sphi 0, %s89
    %s93 = sphi 0, %s92
    %s109 = sphi 0, %s93
    %s115 = sphi 0, %s117
    %s118 = sphi 0, %s115
    %s119 = sphi 0, %s118
    %s135 = sphi 0, %s119
    %s141 = sphi 0, %s143
    %s144 = sphi 0, %s141
    %s145 = sphi 0, %s144
    %s161 = sphi 0, %s145
  $region4: #{res_block_forward.4} parent=0 // loop_header_branch
    %14 = sbr.rel (%p12) target = $region8
  $region5: #{res_block_forward.4} parent=0 // loop_body
    %s16 = ssub.s32 %s11, 1
    %s17 = ssub.s32 %s11, 2
    %s18 = sadd.s32 %s11, 1
    %s19 = ssub.s32 %s11, %s18
    %p20 = scmp.eq.s32.totalorder %s19, 0
    %s22 = sadd.s32 %s21, 1
    %s23 = scalar_select %p20, %s21, %s22
    %p26 = pneg %p20
    %p27 = scmp.eq.s32.totalorder %s11, 1
    %p28 = por %p26, %p27
    %p29 = scmp.ne.s32.totalorder %s21, %s24
    %p30 = scmp.eq.s32.totalorder %s11, 0
    %p31 = por %p29, %p30
    %p32 = scmp.ne.s32.totalorder %s21, %s24
    %p33 = scmp.eq.s32.totalorder %s16, 1
    %p34 = por %p32, %p33
    %p35 = scmp.ne.s32.totalorder %s24, %s25
    %p36 = scmp.eq.s32.totalorder %s16, 0
    %p37 = por %p35, %p36
    %p38 = scmp.ne.s32.totalorder %s24, %s25
    %p39 = scmp.eq.s32.totalorder %s17, 1
    %p40 = por %p38, %p39
    %p42 = scmp.ne.s32.totalorder %s25, %s41
    %p43 = scmp.eq.s32.totalorder %s17, 0
    %p44 = por %p42, %p43
    %s46 = sadd.s32 %s45, 1
    %p49 = scmp.eq.s32.totalorder %s11, 1
    %p50 = scmp.ne.s32.totalorder %s45, %s47
    %p51 = scmp.eq.s32.totalorder %s11, 0
    %p52 = por %p50, %p51
    %p53 = scmp.ne.s32.totalorder %s45, %s47
    %p54 = scmp.eq.s32.totalorder %s16, 1
    %p55 = por %p53, %p54
    %p56 = scmp.ne.s32.totalorder %s47, %s48
    %p57 = scmp.eq.s32.totalorder %s16, 0
    %p58 = por %p56, %p57
    %p59 = scmp.ne.s32.totalorder %s47, %s48
    %p60 = scmp.eq.s32.totalorder %s17, 1
    %p61 = por %p59, %p60
    %p63 = scmp.ne.s32.totalorder %s48, %s62
    %p64 = scmp.eq.s32.totalorder %s17, 0
    %p65 = por %p63, %p64
    %s67 = sadd.s32 %s66, 1
    %p70 = scmp.eq.s32.totalorder %s11, 1
    %p71 = scmp.ne.s32.totalorder %s66, %s68
    %p72 = scmp.eq.s32.totalorder %s11, 0
    %p73 = por %p71, %p72
    %p74 = scmp.ne.s32.totalorder %s66, %s68
    %p75 = scmp.eq.s32.totalorder %s16, 1
    %p76 = por %p74, %p75
    %p77 = scmp.ne.s32.totalorder %s68, %s69
    %p78 = scmp.eq.s32.totalorder %s16, 0
    %p79 = por %p77, %p78
    %p80 = scmp.ne.s32.totalorder %s68, %s69
    %p81 = scmp.eq.s32.totalorder %s17, 1
    %p82 = por %p80, %p81
    %p84 = scmp.ne.s32.totalorder %s69, %s83
    %p85 = scmp.eq.s32.totalorder %s17, 0
    %p86 = por %p84, %p85
    %s87 = ssub.s32 %s11, %s18
    %p88 = scmp.eq.s32.totalorder %s87, 0
    %s90 = sadd.s32 %s89, 1
    %s91 = scalar_select %p88, %s89, %s90
    %p94 = pneg %p88
    %p95 = scmp.eq.s32.totalorder %s11, 1
    %p96 = por %p94, %p95
    %p97 = scmp.ne.s32.totalorder %s89, %s92
    %p98 = scmp.eq.s32.totalorder %s11, 0
    %p99 = por %p97, %p98
    %p100 = scmp.ne.s32.totalorder %s89, %s92
    %p101 = scmp.eq.s32.totalorder %s16, 1
    %p102 = por %p100, %p101
    %p103 = scmp.ne.s32.totalorder %s92, %s93
    %p104 = scmp.eq.s32.totalorder %s16, 0
    %p105 = por %p103, %p104
    %p106 = scmp.ne.s32.totalorder %s92, %s93
    %p107 = scmp.eq.s32.totalorder %s17, 1
    %p108 = por %p106, %p107
    %p110 = scmp.ne.s32.totalorder %s93, %s109
    %p111 = scmp.eq.s32.totalorder %s17, 0
    %p112 = por %p110, %p111
    %s113 = ssub.s32 %s11, %s18
    %p114 = scmp.eq.s32.totalorder %s113, 0
    %s116 = sadd.s32 %s115, 1
    %s117 = scalar_select %p114, %s115, %s116
    %p120 = pneg %p114
    %p121 = scmp.eq.s32.totalorder %s11, 1
    %p122 = por %p120, %p121
    %p123 = scmp.ne.s32.totalorder %s115, %s118
    %p124 = scmp.eq.s32.totalorder %s11, 0
    %p125 = por %p123, %p124
    %p126 = scmp.ne.s32.totalorder %s115, %s118
    %p127 = scmp.eq.s32.totalorder %s16, 1
    %p128 = por %p126, %p127
    %p129 = scmp.ne.s32.totalorder %s118, %s119
    %p130 = scmp.eq.s32.totalorder %s16, 0
    %p131 = por %p129, %p130
    %p132 = scmp.ne.s32.totalorder %s118, %s119
    %p133 = scmp.eq.s32.totalorder %s17, 1
    %p134 = por %p132, %p133
    %p136 = scmp.ne.s32.totalorder %s119, %s135
    %p137 = scmp.eq.s32.totalorder %s17, 0
    %p138 = por %p136, %p137
    %s139 = ssub.s32 %s11, %s18
    %p140 = scmp.eq.s32.totalorder %s139, 0
    %s142 = sadd.s32 %s141, 1
    %s143 = scalar_select %p140, %s141, %s142
    %p146 = pneg %p140
    %p147 = scmp.eq.s32.totalorder %s11, 1
    %p148 = por %p146, %p147
    %p149 = scmp.ne.s32.totalorder %s141, %s144
    %p150 = scmp.eq.s32.totalorder %s11, 0
    %p151 = por %p149, %p150
    %p152 = scmp.ne.s32.totalorder %s141, %s144
    %p153 = scmp.eq.s32.totalorder %s16, 1
    %p154 = por %p152, %p153
    %p155 = scmp.ne.s32.totalorder %s144, %s145
    %p156 = scmp.eq.s32.totalorder %s16, 0
    %p157 = por %p155, %p156
    %p158 = scmp.ne.s32.totalorder %s144, %s145
    %p159 = scmp.eq.s32.totalorder %s17, 1
    %p160 = por %p158, %p159
    %p162 = scmp.ne.s32.totalorder %s145, %s161
    %p163 = scmp.eq.s32.totalorder %s17, 0
    %p164 = por %p162, %p163
    %p165 = scmp.le.s32.totalorder 1, %s11
    %p166 = scmp.lt.s32.totalorder %s11, 3
    %p167 = pnand %p165, %p166
    %p168 = pneg %p167
    // Predicated region
    $region9: #{res_block_forward.4} parent=5 // pred_check
      _
    $region10: #{res_block_forward.4} parent=5 // pred_check_branch
      %170 = sbr.rel (%p167) target = $region12
    $region11: #{res_block_forward.4} parent=5 // pred_region
      %s171 = ssub.s32 %s11, 1
      // Predicated region
      $region13: #{res_block_forward.4} parent=11 // pred_check
        %p172 = pneg %p58
      $region14: #{res_block_forward.4} parent=11 // pred_check_branch
        %174 = sbr.rel (%p172) target = $region16
      $region15: #{res_block_forward.4} parent=11 // pred_region
        _
      $region16: #{res_block_forward.4} parent=11 // pred_fallthru
        _
      // Predicated region
      $region17: #{res_block_forward.4} parent=11 // pred_check
        %p175 = pneg %p79
      $region18: #{res_block_forward.4} parent=11 // pred_check_branch
        %177 = sbr.rel (%p175) target = $region20
      $region19: #{res_block_forward.4} parent=11 // pred_region
        _
      $region20: #{res_block_forward.4} parent=11 // pred_fallthru
        _
    $region12: #{res_block_forward.4} parent=5 // pred_fallthru
      _
    %p178 = scmp.lt.s32.totalorder %s11, 2
    // Predicated region
    $region21: #{res_block_forward.4} parent=5 // pred_check
      %p179 = pneg %p178
    $region22: #{res_block_forward.4} parent=5 // pred_check_branch
      %181 = sbr.rel (%p179) target = $region24
    $region23: #{res_block_forward.4} parent=5 // pred_region
      // Predicated region
      $region25: #{res_block_forward.4} parent=23 // pred_check
        %p182 = pneg %p31
      $region26: #{res_block_forward.4} parent=23 // pred_check_branch
        %184 = sbr.rel (%p182) target = $region28
      $region27: #{res_block_forward.4} parent=23 // pred_region
        %p185 = scmp.lt.s32.totalorder %s11, 1
        %s186 = scalar_select %p185, %s11, 1
        %s187 = smul.addr %s186, 20
        %s188 = smul.addr %s187, 4
        %s189 = scalar_lea.vmem %s0, %s188
      $region28: #{res_block_forward.4} parent=23 // pred_fallthru
        _
      // Predicated region
      $region29: #{res_block_forward.4} parent=23 // pred_check
        %p190 = pneg %p99
      $region30: #{res_block_forward.4} parent=23 // pred_check_branch
        %192 = sbr.rel (%p190) target = $region32
      $region31: #{res_block_forward.4} parent=23 // pred_region
        %p193 = scmp.lt.s32.totalorder %s11, 1
        %s194 = scalar_select %p193, %s11, 1
        %s195 = scalar_lea.vmem %s3, %s194
      $region32: #{res_block_forward.4} parent=23 // pred_fallthru
        _
      // Predicated region
      $region33: #{res_block_forward.4} parent=23 // pred_check
        %p196 = pneg %p125
      $region34: #{res_block_forward.4} parent=23 // pred_check_branch
        %198 = sbr.rel (%p196) target = $region36
      $region35: #{res_block_forward.4} parent=23 // pred_region
        %p199 = scmp.lt.s32.totalorder %s11, 1
        %s200 = scalar_select %p199, %s11, 1
        %s201 = scalar_lea.vmem %s4, %s200
      $region36: #{res_block_forward.4} parent=23 // pred_fallthru
        _
    $region24: #{res_block_forward.4} parent=5 // pred_fallthru
      _
    %p202 = scmp.le.s32.totalorder 1, %s11
    %p203 = scmp.lt.s32.totalorder %s11, 3
    %p204 = pnand %p202, %p203
    %p205 = pneg %p204
    // Predicated region
    $region37: #{res_block_forward.4} parent=5 // pred_check
      _
    $region38: #{res_block_forward.4} parent=5 // pred_check_branch
      %207 = sbr.rel (%p204) target = $region40
    $region39: #{res_block_forward.4} parent=5 // pred_region
      %s208 = ssub.s32 %s11, 1
      %p209 = scmp.lt.s32.totalorder %s16, 1
      %s210 = scalar_select %p209, %s16, 1
      %s211 = smul.addr %s210, 20
      %s212 = smul.addr %s211, 4
      %s213 = scalar_lea.vmem %s0, %s212
      %p214 = pneg %p37
      %p215 = pneg %p34
      %p216 = pneg %p58
      %p217 = pneg %p55
      %p218 = pneg %p79
      %p219 = pneg %p76
      %p220 = scmp.lt.s32.totalorder %s16, 1
      %s221 = scalar_select %p220, %s16, 1
      %s222 = scalar_lea.vmem %s3, %s221
      %p223 = pneg %p105
      %p224 = pneg %p102
      %p225 = scmp.lt.s32.totalorder %s16, 1
      %s226 = scalar_select %p225, %s16, 1
      %s227 = scalar_lea.vmem %s4, %s226
      %p228 = pneg %p131
      %p229 = pneg %p128
      %p230 = pneg %p157
      %p231 = pneg %p154
      %p232 = scmp.lt.s32.totalorder %s16, 1
      %s233 = scalar_select %p232, %s16, 1
      %s234 = smul.addr %s233, 20
      %s235 = smul.addr %s234, 4
      %s236 = scalar_lea.vmem %s5, %s235
      %p237 = scmp.lt.s32.totalorder %s16, 1
      %s238 = scalar_select %p237, %s16, 1
      %s239 = smul.addr %s238, 20
      %s240 = smul.addr %s239, 4
      %s241 = scalar_lea.vmem %s0, %s240
      %p242 = scmp.lt.s32.totalorder %s16, 1
      %s243 = scalar_select %p242, %s16, 1
      %s244 = scalar_lea.vmem %s3, %s243
      %p245 = scmp.lt.s32.totalorder %s16, 1
      %s246 = scalar_select %p245, %s16, 1
      %s247 = scalar_lea.vmem %s4, %s246
      %p248 = scmp.lt.s32.totalorder %s16, 1
      %s249 = scalar_select %p248, %s16, 1
      %s250 = smul.addr %s249, 20
      %s251 = smul.addr %s250, 4
      %s252 = scalar_lea.vmem %s5, %s251
      %v254 = vld [vmem:[%s241] sm:$0xf]
      %v255 = vld [vmem:[%s241 + $0x4] sm:$0x1]
      %v256 = vld [vmem:[%s241 + $0x8] sm:$0xf]
      %v257 = vld [vmem:[%s241 + $0xc] sm:$0x1]
      %v258 = vld [vmem:[%s241 + $0x10] sm:$0xf]
      %v259 = vld [vmem:[%s241 + $0x14] sm:$0x1]
      %v260 = vld [vmem:[%s241 + $0x18] sm:$0xf]
      %v261 = vld [vmem:[%s241 + $0x1c] sm:$0x1]
      %v262 = vld [vmem:[%s241 + $0x20] sm:$0xf]
      %v263 = vld [vmem:[%s241 + $0x24] sm:$0x1]
      %v264 = vld [vmem:[%s241 + $0x28] sm:$0xf]
      %v265 = vld [vmem:[%s241 + $0x2c] sm:$0x1]
      %v266 = vld [vmem:[%s241 + $0x30] sm:$0xf]
      %v267 = vld [vmem:[%s241 + $0x34] sm:$0x1]
      %v268 = vld [vmem:[%s241 + $0x38] sm:$0xf]
      %v269 = vld [vmem:[%s241 + $0x3c] sm:$0x1]
      %v270 = vld [vmem:[%s241 + $0x40] sm:$0xf]
      %v271 = vld [vmem:[%s241 + $0x44] sm:$0x1]
      %v272 = vld [vmem:[%s241 + $0x48] sm:$0xf]
      %v273 = vld [vmem:[%s241 + $0x4c] sm:$0x1]
      %vm274 = vsmask.f32 3328
      %vm275 = vsmask.f32 7440
      %vm276 = vmor %vm274, %vm275
      %v278 = vshrl.u32 %v254, 16
      %v280 = vrot.slane %v278, 4
      %v281 = vshll.u32 %v254, 16
      %v283 = vrot.slane %v281, 5
      %v284 = vor.u32 %v280, %v283
      %v285 = vrot.slane %v284, 4
      %v287 = vshll.u32 %v255, 16
      %v289 = vrot.slane %v287, 5
      %v290 = vsel %vm276, %v285, %v289
      %v292 = vshrl.u32 %v256, 16
      %v294 = vrot.slane %v292, 4
      %v295 = vshll.u32 %v256, 16
      %v297 = vrot.slane %v295, 5
      %v298 = vor.u32 %v294, %v297
      %v299 = vrot.slane %v298, 4
      %v301 = vshll.u32 %v257, 16
      %v303 = vrot.slane %v301, 5
      %v304 = vsel %vm276, %v299, %v303
      %v306 = vshrl.u32 %v258, 16
      %v308 = vrot.slane %v306, 4
      %v309 = vshll.u32 %v258, 16
      %v311 = vrot.slane %v309, 5
      %v312 = vor.u32 %v308, %v311
      %v313 = vrot.slane %v312, 4
      %v315 = vshll.u32 %v259, 16
      %v317 = vrot.slane %v315, 5
      %v318 = vsel %vm276, %v313, %v317
      %v320 = vshrl.u32 %v260, 16
      %v322 = vrot.slane %v320, 4
      %v323 = vshll.u32 %v260, 16
      %v325 = vrot.slane %v323, 5
      %v326 = vor.u32 %v322, %v325
      %v327 = vrot.slane %v326, 4
      %v329 = vshll.u32 %v261, 16
      %v331 = vrot.slane %v329, 5
      %v332 = vsel %vm276, %v327, %v331
      %v334 = vshrl.u32 %v262, 16
      %v336 = vrot.slane %v334, 4
      %v337 = vshll.u32 %v262, 16
      %v339 = vrot.slane %v337, 5
      %v340 = vor.u32 %v336, %v339
      %v341 = vrot.slane %v340, 4
      %v343 = vshll.u32 %v263, 16
      %v345 = vrot.slane %v343, 5
      %v346 = vsel %vm276, %v341, %v345
      %v348 = vshrl.u32 %v264, 16
      %v350 = vrot.slane %v348, 4
      %v351 = vshll.u32 %v264, 16
      %v353 = vrot.slane %v351, 5
      %v354 = vor.u32 %v350, %v353
      %v355 = vrot.slane %v354, 4
      %v357 = vshll.u32 %v265, 16
      %v359 = vrot.slane %v357, 5
      %v360 = vsel %vm276, %v355, %v359
      %v362 = vshrl.u32 %v266, 16
      %v364 = vrot.slane %v362, 4
      %v365 = vshll.u32 %v266, 16
      %v367 = vrot.slane %v365, 5
      %v368 = vor.u32 %v364, %v367
      %v369 = vrot.slane %v368, 4
      %v371 = vshll.u32 %v267, 16
      %v373 = vrot.slane %v371, 5
      %v374 = vsel %vm276, %v369, %v373
      %v376 = vshrl.u32 %v268, 16
      %v378 = vrot.slane %v376, 4
      %v379 = vshll.u32 %v268, 16
      %v381 = vrot.slane %v379, 5
      %v382 = vor.u32 %v378, %v381
      %v383 = vrot.slane %v382, 4
      %v385 = vshll.u32 %v269, 16
      %v387 = vrot.slane %v385, 5
      %v388 = vsel %vm276, %v383, %v387
      %vm405 = vcmask 1042432
      %vm406 = vcmask 1046532
      %vm407 = vmor %vm405, %vm406
      %v408 = vrot.slane %v254, 5
      %v409 = vrot.slane %v408, 4
      %v410 = vrot.slane %v255, 5
      %v411 = vsel %vm407, %v409, %v410
      %v412 = vrot.slane %v256, 5
      %v413 = vrot.slane %v412, 4
      %v414 = vrot.slane %v257, 5
      %v415 = vsel %vm407, %v413, %v414
      %v416 = vrot.slane %v258, 5
      %v417 = vrot.slane %v416, 4
      %v418 = vrot.slane %v259, 5
      %v419 = vsel %vm407, %v417, %v418
      %v420 = vrot.slane %v260, 5
      %v421 = vrot.slane %v420, 4
      %v422 = vrot.slane %v261, 5
      %v423 = vsel %vm407, %v421, %v422
      %v424 = vrot.slane %v262, 5
      %v425 = vrot.slane %v424, 4
      %v426 = vrot.slane %v263, 5
      %v427 = vsel %vm407, %v425, %v426
      %v428 = vrot.slane %v264, 5
      %v429 = vrot.slane %v428, 4
      %v430 = vrot.slane %v265, 5
      %v431 = vsel %vm407, %v429, %v430
      %v432 = vrot.slane %v266, 5
      %v433 = vrot.slane %v432, 4
      %v434 = vrot.slane %v267, 5
      %v435 = vsel %vm407, %v433, %v434
      %v436 = vrot.slane %v268, 5
      %v437 = vrot.slane %v436, 4
      %v438 = vrot.slane %v269, 5
      %v439 = vsel %vm407, %v437, %v438
      %v441 = vshrl.u32 %v270, 16
      %v443 = vrot.slane %v441, 4
      %v444 = vshll.u32 %v270, 16
      %v446 = vrot.slane %v444, 5
      %v447 = vor.u32 %v443, %v446
      %v448 = vrot.slane %v447, 4
      %v450 = vshll.u32 %v271, 16
      %v452 = vrot.slane %v450, 5
      %v453 = vsel %vm276, %v448, %v452
      %v456 = vrot.slane %v270, 5
      %v457 = vrot.slane %v456, 4
      %v458 = vrot.slane %v271, 5
      %v459 = vsel %vm407, %v457, %v458
      %v461 = vshrl.u32 %v272, 16
      %v463 = vrot.slane %v461, 4
      %v464 = vshll.u32 %v272, 16
      %v466 = vrot.slane %v464, 5
      %v467 = vor.u32 %v463, %v466
      %v468 = vrot.slane %v467, 4
      %v470 = vshll.u32 %v273, 16
      %v472 = vrot.slane %v470, 5
      %v473 = vsel %vm276, %v468, %v472
      %v476 = vrot.slane %v272, 5
      %v477 = vrot.slane %v476, 4
      %v478 = vrot.slane %v273, 5
      %v479 = vsel %vm407, %v477, %v478
      %v480 = vunpack.c.l.b16 %v254
      %v481 = vunpack.c.l.b16 %v256
      %v482 = vunpack.c.l.b16 %v258
      %v483 = vunpack.c.l.b16 %v260
      %v484 = vunpack.c.l.b16 %v262
      %v485 = vunpack.c.l.b16 %v264
      %v486 = vunpack.c.l.b16 %v266
      %v487 = vunpack.c.l.b16 %v268
      %v488 = vpack.c.b16 %v481, %v480
      %v489 = vpack.c.b16 %v483, %v482
      %v490 = vpack.c.b16 %v485, %v484
      %v491 = vpack.c.b16 %v487, %v486
      %v492 = vunpack.c.l.b16 %v290
      %v493 = vunpack.c.l.b16 %v304
      %v494 = vunpack.c.l.b16 %v318
      %v495 = vunpack.c.l.b16 %v332
      %v496 = vunpack.c.l.b16 %v346
      %v497 = vunpack.c.l.b16 %v360
      %v498 = vunpack.c.l.b16 %v374
      %v499 = vunpack.c.l.b16 %v388
      %v500 = vpack.c.b16 %v493, %v492
      %v501 = vpack.c.b16 %v495, %v494
      %v502 = vpack.c.b16 %v497, %v496
      %v503 = vpack.c.b16 %v499, %v498
      %504 = vrot.lane.b32.xlu0 %v500, 32
      %v505 = vpop.permute.xlu0 %504
      %506 = vrot.lane.b32.xlu0 %v501, 32
      %v507 = vpop.permute.xlu0 %506
      %508 = vrot.lane.b32.xlu0 %v502, 32
      %v509 = vpop.permute.xlu0 %508
      %510 = vrot.lane.b32.xlu0 %v503, 32
      %v511 = vpop.permute.xlu0 %510
      %v512 = vunpack.c.l.b16 %v411
      %v513 = vunpack.c.l.b16 %v415
      %v514 = vunpack.c.l.b16 %v419
      %v515 = vunpack.c.l.b16 %v423
      %v516 = vunpack.c.l.b16 %v427
      %v517 = vunpack.c.l.b16 %v431
      %v518 = vunpack.c.l.b16 %v435
      %v519 = vunpack.c.l.b16 %v439
      %v520 = vpack.c.b16 %v513, %v512
      %v521 = vpack.c.b16 %v515, %v514
      %v522 = vpack.c.b16 %v517, %v516
      %v523 = vpack.c.b16 %v519, %v518
      %524 = vrot.lane.b32.xlu0 %v520, 64
      %v525 = vpop.permute.xlu0 %524
      %526 = vrot.lane.b32.xlu0 %v521, 64
      %v527 = vpop.permute.xlu0 %526
      %528 = vrot.lane.b32.xlu0 %v522, 64
      %v529 = vpop.permute.xlu0 %528
      %530 = vrot.lane.b32.xlu0 %v523, 64
      %v531 = vpop.permute.xlu0 %530
      %v532 = vunpack.c.l.b16 %v270
      %v533 = vpack.c.b16 %v482, %v481
      %v534 = vpack.c.b16 %v484, %v483
      %v535 = vpack.c.b16 %v486, %v485
      %v536 = vpack.c.b16 %v532, %v487
      %537 = vrot.lane.b32.xlu0 %v533, 96
      %v538 = vpop.permute.xlu0 %537
      %539 = vrot.lane.b32.xlu0 %v534, 96
      %v540 = vpop.permute.xlu0 %539
      %541 = vrot.lane.b32.xlu0 %v535, 96
      %v542 = vpop.permute.xlu0 %541
      %543 = vrot.lane.b32.xlu0 %v536, 96
      %v544 = vpop.permute.xlu0 %543
      %v545 = vunpack.c.l.b16 %v453
      %v546 = vpack.c.b16 %v494, %v493
      %v547 = vpack.c.b16 %v496, %v495
      %v548 = vpack.c.b16 %v498, %v497
      %v549 = vpack.c.b16 %v545, %v499
      %v550 = vunpack.c.l.b16 %v459
      %v551 = vpack.c.b16 %v514, %v513
      %v552 = vpack.c.b16 %v516, %v515
      %v553 = vpack.c.b16 %v518, %v517
      %v554 = vpack.c.b16 %v550, %v519
      %555 = vrot.lane.b32.xlu0 %v551, 32
      %v556 = vpop.permute.xlu0 %555
      %557 = vrot.lane.b32.xlu0 %v552, 32
      %v558 = vpop.permute.xlu0 %557
      %559 = vrot.lane.b32.xlu0 %v553, 32
      %v560 = vpop.permute.xlu0 %559
      %561 = vrot.lane.b32.xlu0 %v554, 32
      %v562 = vpop.permute.xlu0 %561
      %v563 = vunpack.c.l.b16 %v272
      %v564 = vpack.c.b16 %v563, %v532
      %565 = vrot.lane.b32.xlu0 %v489, 64
      %v566 = vpop.permute.xlu0 %565
      %567 = vrot.lane.b32.xlu0 %v490, 64
      %v568 = vpop.permute.xlu0 %567
      %569 = vrot.lane.b32.xlu0 %v491, 64
      %v570 = vpop.permute.xlu0 %569
      %571 = vrot.lane.b32.xlu0 %v564, 64
      %v572 = vpop.permute.xlu0 %571
      %v573 = vunpack.c.l.b16 %v473
      %v574 = vpack.c.b16 %v573, %v545
      %575 = vrot.lane.b32.xlu0 %v501, 96
      %v576 = vpop.permute.xlu0 %575
      %577 = vrot.lane.b32.xlu0 %v502, 96
      %v578 = vpop.permute.xlu0 %577
      %579 = vrot.lane.b32.xlu0 %v503, 96
      %v580 = vpop.permute.xlu0 %579
      %581 = vrot.lane.b32.xlu0 %v574, 96
      %v582 = vpop.permute.xlu0 %581
      %v583 = vunpack.c.l.b16 %v479
      %v584 = vpack.c.b16 %v583, %v550
      %vm585 = vcmask 261120
      %v588 = vsel %vm585, %v488, %v505
      %v591 = vsel %vm585, %v489, %v507
      %v594 = vsel %vm585, %v490, %v509
      %v597 = vsel %vm585, %v491, %v511
      %vm598 = vcmask 523264
      %v600 = vsel %vm598, %v588, %v525
      %v602 = vsel %vm598, %v591, %v527
      %v604 = vsel %vm598, %v594, %v529
      %v606 = vsel %vm598, %v597, %v531
      %vm607 = vcmask 785408
      %v609 = vsel %vm607, %v600, %v538
      %v612 = vsel %vm607, %v602, %v540
      %v615 = vsel %vm607, %v604, %v542
      %v618 = vsel %vm607, %v606, %v544
      %v622 = vsel %vm585, %v546, %v556
      %v625 = vsel %vm585, %v547, %v558
      %v628 = vsel %vm585, %v548, %v560
      %v631 = vsel %vm585, %v549, %v562
      %v633 = vsel %vm598, %v622, %v566
      %v635 = vsel %vm598, %v625, %v568
      %v637 = vsel %vm598, %v628, %v570
      %v639 = vsel %vm598, %v631, %v572
      %v641 = vsel %vm607, %v633, %v576
      %v644 = vsel %vm607, %v635, %v578
      %v647 = vsel %vm607, %v637, %v580
      %v650 = vsel %vm607, %v639, %v582
      %v652 = vld [vmem:[%s1] sm:$0xf]
      %v653 = vld [vmem:[%s1 + $0x4] sm:$0xf]
      %v654 = vld [vmem:[%s1 + $0x8] sm:$0xf]
      %v655 = vld [vmem:[%s1 + $0xc] sm:$0xf]
      %v656 = vld [vmem:[%s1 + $0x10] sm:$0xf]
      %v657 = vld [vmem:[%s1 + $0x14] sm:$0xf]
      %v658 = vld [vmem:[%s1 + $0x18] sm:$0xf]
      %v659 = vld [vmem:[%s1 + $0x1c] sm:$0xf]
      %v660 = vld [vmem:[%s1 + $0x20] sm:$0xf]
      %v661 = vld [vmem:[%s1 + $0x24] sm:$0xf]
      %v662 = vld [vmem:[%s1 + $0x28] sm:$0xf]
      %v663 = vld [vmem:[%s1 + $0x2c] sm:$0xf]
      %v664 = vld [vmem:[%s1 + $0x30] sm:$0xf]
      %v665 = vld [vmem:[%s1 + $0x34] sm:$0xf]
      %v666 = vld [vmem:[%s1 + $0x38] sm:$0xf]
      %v667 = vld [vmem:[%s1 + $0x3c] sm:$0xf]
      %v668 = vld [vmem:[%s1 + $0x40] sm:$0xf]
      %v669 = vld [vmem:[%s1 + $0x44] sm:$0xf]
      %v670 = vld [vmem:[%s1 + $0x48] sm:$0xf]
      %v671 = vld [vmem:[%s1 + $0x4c] sm:$0xf]
      %v672 = vld [vmem:[%s1 + $0x50] sm:$0xf]
      %v673 = vld [vmem:[%s1 + $0x54] sm:$0xf]
      %v674 = vld [vmem:[%s1 + $0x58] sm:$0xf]
      %v675 = vld [vmem:[%s1 + $0x5c] sm:$0xf]
      %v676 = vld [vmem:[%s1 + $0x60] sm:$0xf]
      %v677 = vld [vmem:[%s1 + $0x64] sm:$0xf]
      %v678 = vld [vmem:[%s1 + $0x68] sm:$0xf]
      %v679 = vld [vmem:[%s1 + $0x6c] sm:$0xf]
      %v680 = vld [vmem:[%s1 + $0x70] sm:$0xf]
      %v681 = vld [vmem:[%s1 + $0x74] sm:$0xf]
      %v682 = vld [vmem:[%s1 + $0x78] sm:$0xf]
      %v683 = vld [vmem:[%s1 + $0x7c] sm:$0xf]
      %v684 = vld [vmem:[%s1 + $0x80] sm:$0xf]
      %v685 = vld [vmem:[%s1 + $0x84] sm:$0xf]
      %v686 = vld [vmem:[%s1 + $0x88] sm:$0xf]
      %v687 = vld [vmem:[%s1 + $0x8c] sm:$0xf]
      %v688 = vld [vmem:[%s2] sm:$0x1]
      %v690 = vlaneseq
      %v691 = vshrl.u32 %v690, 7
      %v692 = vsub.s32 0, %v691
      %v693 = vrot.slane %v688, %v692
      %v731 = vunpack.c.l.b16 %v652
      %v732 = vunpack.c.l.b16 %v653
      %v733 = vunpack.c.l.b16 %v654
      %v734 = vunpack.c.l.b16 %v655
      %v735 = vunpack.c.l.b16 %v656
      %v736 = vunpack.c.l.b16 %v657
      %v737 = vunpack.c.l.b16 %v658
      %v738 = vunpack.c.l.b16 %v659
      %v739 = vunpack.c.l.b16 %v660
      %v740 = vunpack.c.l.b16 %v661
      %v741 = vunpack.c.l.b16 %v662
      %v742 = vunpack.c.l.b16 %v663
      %v743 = vunpack.c.l.b16 %v664
      %v744 = vunpack.c.l.b16 %v665
      %v745 = vunpack.c.l.b16 %v666
      %v746 = vunpack.c.l.b16 %v667
      %v747 = vunpack.c.l.b16 %v668
      %v748 = vunpack.c.l.b16 %v669
      %v749 = vunpack.c.l.b16 %v670
      %v750 = vunpack.c.l.b16 %v671
      %v751 = vunpack.c.l.b16 %v672
      %v752 = vunpack.c.l.b16 %v673
      %v753 = vunpack.c.l.b16 %v674
      %v754 = vunpack.c.l.b16 %v675
      %v755 = vunpack.c.l.b16 %v676
      %v756 = vunpack.c.l.b16 %v677
      %v757 = vunpack.c.l.b16 %v678
      %v758 = vunpack.c.l.b16 %v679
      %v759 = vunpack.c.l.b16 %v680
      %v760 = vunpack.c.l.b16 %v681
      %v761 = vunpack.c.l.b16 %v682
      %v762 = vunpack.c.l.b16 %v683
      %v763 = vunpack.c.l.b16 %v684
      %v764 = vunpack.c.l.b16 %v685
      %v765 = vunpack.c.l.b16 %v686
      %v766 = vunpack.c.l.b16 %v687
      %v767 = vpack.c.b16 %v732, %v731
      %v768 = vpack.c.b16 %v734, %v733
      %v769 = vpack.c.b16 %v736, %v735
      %v770 = vpack.c.b16 %v738, %v737
      %v771 = vpack.c.b16 %v740, %v739
      %v772 = vpack.c.b16 %v742, %v741
      %v773 = vpack.c.b16 %v744, %v743
      %v774 = vpack.c.b16 %v746, %v745
      %v775 = vpack.c.b16 %v748, %v747
      %v776 = vpack.c.b16 %v750, %v749
      %v777 = vpack.c.b16 %v752, %v751
      %v778 = vpack.c.b16 %v754, %v753
      %v779 = vpack.c.b16 %v756, %v755
      %v780 = vpack.c.b16 %v758, %v757
      %v781 = vpack.c.b16 %v760, %v759
      %v782 = vpack.c.b16 %v762, %v761
      %v783 = vpack.c.b16 %v764, %v763
      %v784 = vpack.c.b16 %v766, %v765
      %v804 = vsel %vm585, %v521, 0
      %v807 = vsel %vm585, %v522, 0
      %v810 = vsel %vm585, %v523, 0
      %v813 = vsel %vm585, %v584, 0
      %815 = vmatprep.subr.bf16.mxu0 0
      %816 = vmatpush1.bf16.msra.mxu0 %v774
      %817 = vmatprep.subr.bf16.mxu0 0
      %818 = vmatpush1.bf16.msra.mxu0 %v773
      %819 = vmatprep.subr.bf16.mxu0 0
      %820 = vmatpush1.bf16.msra.mxu0 %v772
      %821 = vmatprep.subr.bf16.mxu0 0
      %822 = vmatpush1.bf16.msra.mxu0 %v771
      %823 = vmatprep.subr.bf16.mxu0 0
      %824 = vmatpush1.bf16.msra.mxu0 %v770
      %825 = vmatprep.subr.bf16.mxu0 0
      %826 = vmatpush1.bf16.msra.mxu0 %v769
      %827 = vmatprep.subr.bf16.mxu0 0
      %828 = vmatpush1.bf16.msra.mxu0 %v768
      %829 = vmatprep.subr.bf16.mxu0 0
      %830 = vmatpush1.bf16.msra.mxu0 %v767
      %831 = vmatprep.subr.bf16.mxu0 0
      %832 = vmatpush2.bf16.msra.mxu0 %v782
      %833 = vmatprep.subr.bf16.mxu0 0
      %834 = vmatpush2.bf16.msra.mxu0 %v781
      %835 = vmatprep.subr.bf16.mxu0 0
      %836 = vmatpush2.bf16.msra.mxu0 %v780
      %837 = vmatprep.subr.bf16.mxu0 0
      %838 = vmatpush2.bf16.msra.mxu0 %v779
      %839 = vmatprep.subr.bf16.mxu0 0
      %840 = vmatpush2.bf16.msra.mxu0 %v778
      %841 = vmatprep.subr.bf16.mxu0 0
      %842 = vmatpush2.bf16.msra.mxu0 %v777
      %843 = vmatprep.subr.bf16.mxu0 0
      %844 = vmatpush2.bf16.msra.mxu0 %v776
      %845 = vmatprep.subr.bf16.mxu0 0
      %846 = vmatpush2.bf16.msra.mxu0 %v775
      %847 = vmatprep.mubr.bf16.mxu0 %v641
      %848 = vmatmul.mubr.bf16.gmra.mxu0 %v609
      %v849 = vpop.f32.mrf.mxu0
      %v850 = vadd.f32 %v693, %v849
      %v851 = vpop.f32.mrf.mxu0
      %v852 = vpop.f32.mrf.mxu0
      %v853 = vadd.f32 %v693, %v852
      %v854 = vpop.f32.mrf.mxu0
      %855 = vmatprep.mubr.bf16.mxu0 %v644
      %856 = vmatmul.mubr.bf16.gmra.mxu0 %v612
      %v857 = vpop.f32.mrf.mxu0
      %v858 = vadd.f32 %v693, %v857
      %v859 = vpop.f32.mrf.mxu0
      %v860 = vpop.f32.mrf.mxu0
      %v861 = vadd.f32 %v693, %v860
      %v862 = vpop.f32.mrf.mxu0
      %863 = vmatprep.mubr.bf16.mxu0 %v647
      %864 = vmatmul.mubr.bf16.gmra.mxu0 %v615
      %v865 = vpop.f32.mrf.mxu0
      %v866 = vadd.f32 %v693, %v865
      %v867 = vpop.f32.mrf.mxu0
      %v868 = vpop.f32.mrf.mxu0
      %v869 = vadd.f32 %v693, %v868
      %v870 = vpop.f32.mrf.mxu0
      %871 = vmatprep.mubr.bf16.mxu0 %v650
      %872 = vmatmul.mubr.bf16.gmra.mxu0 %v618
      %v873 = vpop.f32.mrf.mxu0
      %v874 = vadd.f32 %v693, %v873
      %v875 = vpop.f32.mrf.mxu0
      %v876 = vpop.f32.mrf.mxu0
      %v877 = vadd.f32 %v693, %v876
      %v878 = vpop.f32.mrf.mxu0
      %879 = vdwg.mxu0
      %880 = vmatprep.subr.bf16.mxu0 0
      %881 = vmatpush1.bf16.msra.mxu0 0
      %882 = vmatprep.subr.bf16.mxu0 0
      %883 = vmatpush1.bf16.msra.mxu0 0
      %884 = vmatprep.subr.bf16.mxu0 0
      %885 = vmatpush1.bf16.msra.mxu0 0
      %886 = vmatprep.subr.bf16.mxu0 0
      %887 = vmatpush1.bf16.msra.mxu0 0
      %888 = vmatprep.subr.bf16.mxu0 0
      %889 = vmatpush1.bf16.msra.mxu0 0
      %890 = vmatprep.subr.bf16.mxu0 0
      %891 = vmatpush1.bf16.msra.mxu0 0
      %892 = vmatprep.subr.bf16.mxu0 0
      %893 = vmatpush1.bf16.msra.mxu0 %v784
      %894 = vmatprep.subr.bf16.mxu0 0
      %895 = vmatpush1.bf16.msra.mxu0 %v783
      %896 = vmatprep.subr.bf16.mxu0 0
      %897 = vmatpush2.bf16.msra.mxu0 0
      %898 = vmatprep.subr.bf16.mxu0 0
      %899 = vmatpush2.bf16.msra.mxu0 0
      %900 = vmatprep.subr.bf16.mxu0 0
      %901 = vmatpush2.bf16.msra.mxu0 0
      %902 = vmatprep.subr.bf16.mxu0 0
      %903 = vmatpush2.bf16.msra.mxu0 0
      %904 = vmatprep.subr.bf16.mxu0 0
      %905 = vmatpush2.bf16.msra.mxu0 0
      %906 = vmatprep.subr.bf16.mxu0 0
      %907 = vmatpush2.bf16.msra.mxu0 0
      %908 = vmatprep.subr.bf16.mxu0 0
      %909 = vmatpush2.bf16.msra.mxu0 0
      %910 = vmatprep.subr.bf16.mxu0 0
      %911 = vmatpush2.bf16.msra.mxu0 0
      %912 = vmatprep.mubr.bf16.mxu0 0
      %913 = vmatmul.mubr.bf16.gmra.mxu0 %v804
      %v914 = vpop.f32.mrf.mxu0
      %v915 = vadd.f32 %v850, %v914
      %v916 = vpop.f32.mrf.mxu0
      %v917 = vpop.f32.mrf.mxu0
      %v918 = vadd.f32 %v853, %v917
      %v919 = vpop.f32.mrf.mxu0
      %920 = vmatprep.mubr.bf16.mxu0 0
      %921 = vmatmul.mubr.bf16.gmra.mxu0 %v807
      %v922 = vpop.f32.mrf.mxu0
      %v923 = vadd.f32 %v858, %v922
      %v924 = vpop.f32.mrf.mxu0
      %v925 = vpop.f32.mrf.mxu0
      %v926 = vadd.f32 %v861, %v925
      %v927 = vpop.f32.mrf.mxu0
      %928 = vmatprep.mubr.bf16.mxu0 0
      %929 = vmatmul.mubr.bf16.gmra.mxu0 %v810
      %v930 = vpop.f32.mrf.mxu0
      %v931 = vadd.f32 %v866, %v930
      %v932 = vpop.f32.mrf.mxu0
      %v933 = vpop.f32.mrf.mxu0
      %v934 = vadd.f32 %v869, %v933
      %v935 = vpop.f32.mrf.mxu0
      %936 = vmatprep.mubr.bf16.mxu0 0
      %937 = vmatmul.mubr.bf16.gmra.mxu0 %v813
      %v938 = vpop.f32.mrf.mxu0
      %v939 = vadd.f32 %v874, %v938
      %v940 = vpop.f32.mrf.mxu0
      %v941 = vpop.f32.mrf.mxu0
      %v942 = vadd.f32 %v877, %v941
      %v943 = vpop.f32.mrf.mxu0
      %944 = vdwg.mxu0
      %v945 = vsel %vm585, %v915, 0.0
      %v946 = vsel %vm585, %v918, 0.0
      %v947 = vadd.f32 %v945, %v946
      %v948 = vsel %vm585, %v923, 0.0
      %v949 = vadd.f32 %v947, %v948
      %v950 = vsel %vm585, %v926, 0.0
      %v951 = vadd.f32 %v949, %v950
      %v952 = vsel %vm585, %v931, 0.0
      %v953 = vadd.f32 %v951, %v952
      %v954 = vsel %vm585, %v934, 0.0
      %v955 = vadd.f32 %v953, %v954
      %v956 = vsel %vm585, %v939, 0.0
      %v957 = vadd.f32 %v955, %v956
      %v958 = vsel %vm585, %v942, 0.0
      %v959 = vadd.f32 %v957, %v958
      %v960 = vrot.slane %v959, 4
      %v961 = vadd.f32 %v959, %v960
      %v962 = vrot.slane %v961, 2
      %v963 = vadd.f32 %v961, %v962
      %v964 = vrot.slane %v963, 1
      %v965 = vadd.f32 %v963, %v964
      %v966 = vrcp.pop 64.0
      %v967 = vmul.f32 %v965, %v966
      %v968 = vsub.f32 %v915, %v967
      %v969 = vsub.f32 %v918, %v967
      %v970 = vsub.f32 %v923, %v967
      %v971 = vsub.f32 %v926, %v967
      %v972 = vsub.f32 %v931, %v967
      %v973 = vsub.f32 %v934, %v967
      %v974 = vsub.f32 %v939, %v967
      %v975 = vsub.f32 %v942, %v967
      %v976 = vmul.f32 %v968, %v968
      %v977 = vmul.f32 %v969, %v969
      %v978 = vmul.f32 %v970, %v970
      %v979 = vmul.f32 %v971, %v971
      %v980 = vmul.f32 %v972, %v972
      %v981 = vmul.f32 %v973, %v973
      %v982 = vmul.f32 %v974, %v974
      %v983 = vmul.f32 %v975, %v975
      %v984 = vsel %vm585, %v976, 0.0
      %v985 = vsel %vm585, %v977, 0.0
      %v986 = vadd.f32 %v984, %v985
      %v987 = vsel %vm585, %v978, 0.0
      %v988 = vadd.f32 %v986, %v987
      %v989 = vsel %vm585, %v979, 0.0
      %v990 = vadd.f32 %v988, %v989
      %v991 = vsel %vm585, %v980, 0.0
      %v992 = vadd.f32 %v990, %v991
      %v993 = vsel %vm585, %v981, 0.0
      %v994 = vadd.f32 %v992, %v993
      %v995 = vsel %vm585, %v982, 0.0
      %v996 = vadd.f32 %v994, %v995
      %v997 = vsel %vm585, %v983, 0.0
      %v998 = vadd.f32 %v996, %v997
      %v999 = vrot.slane %v998, 4
      %v1000 = vadd.f32 %v998, %v999
      %v1001 = vrot.slane %v1000, 2
      %v1002 = vadd.f32 %v1000, %v1001
      %v1003 = vrot.slane %v1002, 1
      %v1004 = vadd.f32 %v1002, %v1003
      %v1005 = vmul.f32 %v1004, %v966
      %v1006 = vadd.f32 %v1005, 1e-05
      %v1007 = vrsqrt.pop %v1006
      %v1008 = vld [vmem:[%s244] sm:$0x1]
      %v1009 = vmul.f32 %v1007, %v1008
      %v1010 = vld [vmem:[%s247] sm:$0x1]
      %v1011 = vmul.f32 %v967, %v1009
      %v1012 = vsub.f32 %v1010, %v1011
      %v1013 = vlaneseq
      %v1014 = vshrl.u32 %v1013, 7
      %v1015 = vsub.s32 0, %v1014
      %v1016 = vrot.slane %v1009, %v1015
      %v1017 = vmul.f32 %v915, %v1016
      %v1018 = vmul.f32 %v918, %v1016
      %v1019 = vmul.f32 %v923, %v1016
      %v1020 = vmul.f32 %v926, %v1016
      %v1021 = vmul.f32 %v931, %v1016
      %v1022 = vmul.f32 %v934, %v1016
      %v1023 = vmul.f32 %v939, %v1016
      %v1024 = vmul.f32 %v942, %v1016
      %v1026 = vlaneseq
      %v1027 = vshrl.u32 %v1026, 7
      %v1028 = vsub.s32 0, %v1027
      %v1029 = vrot.slane %v1012, %v1028
      %v1031 = vadd.f32 %v1017, %v1029
      %v1032 = vadd.f32 %v1018, %v1029
      %v1033 = vadd.f32 %v1019, %v1029
      %v1034 = vadd.f32 %v1020, %v1029
      %v1035 = vadd.f32 %v1021, %v1029
      %v1036 = vadd.f32 %v1022, %v1029
      %v1037 = vadd.f32 %v1023, %v1029
      %v1038 = vadd.f32 %v1024, %v1029
      %vm1039 = vcmp.gt.f32.partialorder %v1031, 0.0
      %vm1040 = vcmp.gt.f32.partialorder %v1032, 0.0
      %vm1041 = vcmp.gt.f32.partialorder %v1033, 0.0
      %vm1042 = vcmp.gt.f32.partialorder %v1034, 0.0
      %vm1043 = vcmp.gt.f32.partialorder %v1035, 0.0
      %vm1044 = vcmp.gt.f32.partialorder %v1036, 0.0
      %vm1045 = vcmp.gt.f32.partialorder %v1037, 0.0
      %vm1046 = vcmp.gt.f32.partialorder %v1038, 0.0
      %v1047 = vmul.f32 %v1031, 0.2
      %v1048 = vmul.f32 %v1032, 0.2
      %v1049 = vmul.f32 %v1033, 0.2
      %v1050 = vmul.f32 %v1034, 0.2
      %v1051 = vmul.f32 %v1035, 0.2
      %v1052 = vmul.f32 %v1036, 0.2
      %v1053 = vmul.f32 %v1037, 0.2
      %v1054 = vmul.f32 %v1038, 0.2
      %v1055 = vsel %vm1039, %v1031, %v1047
      %v1056 = vsel %vm1040, %v1032, %v1048
      %v1057 = vsel %vm1041, %v1033, %v1049
      %v1058 = vsel %vm1042, %v1034, %v1050
      %v1059 = vsel %vm1043, %v1035, %v1051
      %v1060 = vsel %vm1044, %v1036, %v1052
      %v1061 = vsel %vm1045, %v1037, %v1053
      %v1062 = vsel %vm1046, %v1038, %v1054
      %v1063 = vpack.c.bf16 %v1055, %v1055
      %v1064 = vpack.c.bf16 %v1056, %v1056
      %v1065 = vpack.c.bf16 %v1057, %v1057
      %v1066 = vpack.c.bf16 %v1058, %v1058
      %v1067 = vpack.c.bf16 %v1059, %v1059
      %v1068 = vpack.c.bf16 %v1060, %v1060
      %v1069 = vpack.c.bf16 %v1061, %v1061
      %v1070 = vpack.c.bf16 %v1062, %v1062
      %vm1071 = vcmask 257024
      %1072 = vst.msk [vmem:[%s252] sm:$0xf] %vm1071, 0
      %vm1073 = vcmask 253952
      %1074 = vst.msk [vmem:[%s252 + $0x4] sm:$0x1] %vm1073, 0
      %s1075 = scalar_lea.vmem %s252, 72
      %1076 = vst.msk [vmem:[%s1075] sm:$0xf] %vm1071, 0
      %1077 = vst.msk [vmem:[%s1075 + $0x4] sm:$0x1] %vm1073, 0
      %s1078 = scalar_lea.vmem %s252, 8
      %vm1079 = vcmask 253952
      %vm1080 = vsmask.f32 256
      %vm1081 = vmand %vm1079, %vm1080
      %v1082 = vld [vmem:[%s1078] sm:$0x1]
      %v1083 = vsel %vm1081, 0, %v1082
      %1084 = vst [vmem:[%s1078] sm:$0x1] %v1083
      %v1085 = vld [vmem:[%s1078 + $0x8] sm:$0x1]
      %v1086 = vsel %vm1081, 0, %v1085
      %1087 = vst [vmem:[%s1078 + $0x8] sm:$0x1] %v1086
      %v1088 = vld [vmem:[%s1078 + $0x10] sm:$0x1]
      %v1089 = vsel %vm1081, 0, %v1088
      %1090 = vst [vmem:[%s1078 + $0x10] sm:$0x1] %v1089
      %v1091 = vld [vmem:[%s1078 + $0x18] sm:$0x1]
      %v1092 = vsel %vm1081, 0, %v1091
      %1093 = vst [vmem:[%s1078 + $0x18] sm:$0x1] %v1092
      %v1094 = vld [vmem:[%s1078 + $0x20] sm:$0x1]
      %v1095 = vsel %vm1081, 0, %v1094
      %1096 = vst [vmem:[%s1078 + $0x20] sm:$0x1] %v1095
      %v1097 = vld [vmem:[%s1078 + $0x28] sm:$0x1]
      %v1098 = vsel %vm1081, 0, %v1097
      %1099 = vst [vmem:[%s1078 + $0x28] sm:$0x1] %v1098
      %v1100 = vld [vmem:[%s1078 + $0x30] sm:$0x1]
      %v1101 = vsel %vm1081, 0, %v1100
      %1102 = vst [vmem:[%s1078 + $0x30] sm:$0x1] %v1101
      %v1103 = vld [vmem:[%s1078 + $0x38] sm:$0x1]
      %v1104 = vsel %vm1081, 0, %v1103
      %1105 = vst [vmem:[%s1078 + $0x38] sm:$0x1] %v1104
      %vm1106 = vsmask.f32 7938
      %vm1107 = vmand %vm1079, %vm1106
      %v1108 = vld [vmem:[%s1078 + $0x4] sm:$0x1]
      %v1109 = vsel %vm1107, 0, %v1108
      %1110 = vst [vmem:[%s1078 + $0x4] sm:$0x1] %v1109
      %v1111 = vld [vmem:[%s1078 + $0xc] sm:$0x1]
      %v1112 = vsel %vm1107, 0, %v1111
      %1113 = vst [vmem:[%s1078 + $0xc] sm:$0x1] %v1112
      %v1114 = vld [vmem:[%s1078 + $0x14] sm:$0x1]
      %v1115 = vsel %vm1107, 0, %v1114
      %1116 = vst [vmem:[%s1078 + $0x14] sm:$0x1] %v1115
      %v1117 = vld [vmem:[%s1078 + $0x1c] sm:$0x1]
      %v1118 = vsel %vm1107, 0, %v1117
      %1119 = vst [vmem:[%s1078 + $0x1c] sm:$0x1] %v1118
      %v1120 = vld [vmem:[%s1078 + $0x24] sm:$0x1]
      %v1121 = vsel %vm1107, 0, %v1120
      %1122 = vst [vmem:[%s1078 + $0x24] sm:$0x1] %v1121
      %v1123 = vld [vmem:[%s1078 + $0x2c] sm:$0x1]
      %v1124 = vsel %vm1107, 0, %v1123
      %1125 = vst [vmem:[%s1078 + $0x2c] sm:$0x1] %v1124
      %v1126 = vld [vmem:[%s1078 + $0x34] sm:$0x1]
      %v1127 = vsel %vm1107, 0, %v1126
      %1128 = vst [vmem:[%s1078 + $0x34] sm:$0x1] %v1127
      %v1129 = vld [vmem:[%s1078 + $0x3c] sm:$0x1]
      %v1130 = vsel %vm1107, 0, %v1129
      %1131 = vst [vmem:[%s1078 + $0x3c] sm:$0x1] %v1130
      %v1140 = vunpack.c.l.b16 %v1063
      %v1141 = vunpack.c.l.b16 %v1064
      %v1142 = vunpack.c.l.b16 %v1065
      %v1143 = vunpack.c.l.b16 %v1066
      %v1144 = vunpack.c.l.b16 %v1067
      %v1145 = vunpack.c.l.b16 %v1068
      %v1146 = vunpack.c.l.b16 %v1069
      %v1147 = vunpack.c.l.b16 %v1070
      %v1148 = vpack.c.b16 %v1140, %v1140
      %v1149 = vpack.c.b16 %v1141, %v1141
      %v1150 = vpack.c.b16 %v1142, %v1142
      %v1151 = vpack.c.b16 %v1143, %v1143
      %v1152 = vpack.c.b16 %v1144, %v1144
      %v1153 = vpack.c.b16 %v1145, %v1145
      %v1154 = vpack.c.b16 %v1146, %v1146
      %v1155 = vpack.c.b16 %v1147, %v1147
      %v1157 = vshrl.u32 %v1148, 16
      %v1159 = vrot.slane %v1157, 7
      %v1160 = vshll.u32 %v1148, 16
      %v1162 = vor.u32 %v1159, %v1160
      %v1163 = vrot.slane %v1159, 4
      %v1165 = vshrl.u32 %v1149, 16
      %v1167 = vrot.slane %v1165, 7
      %v1168 = vshll.u32 %v1149, 16
      %v1170 = vor.u32 %v1167, %v1168
      %v1171 = vrot.slane %v1167, 4
      %v1173 = vshrl.u32 %v1150, 16
      %v1175 = vrot.slane %v1173, 7
      %v1176 = vshll.u32 %v1150, 16
      %v1178 = vor.u32 %v1175, %v1176
      %v1179 = vrot.slane %v1175, 4
      %v1181 = vshrl.u32 %v1151, 16
      %v1183 = vrot.slane %v1181, 7
      %v1184 = vshll.u32 %v1151, 16
      %v1186 = vor.u32 %v1183, %v1184
      %v1187 = vrot.slane %v1183, 4
      %v1189 = vshrl.u32 %v1152, 16
      %v1191 = vrot.slane %v1189, 7
      %v1192 = vshll.u32 %v1152, 16
      %v1194 = vor.u32 %v1191, %v1192
      %v1195 = vrot.slane %v1191, 4
      %v1197 = vshrl.u32 %v1153, 16
      %v1199 = vrot.slane %v1197, 7
      %v1200 = vshll.u32 %v1153, 16
      %v1202 = vor.u32 %v1199, %v1200
      %v1203 = vrot.slane %v1199, 4
      %v1205 = vshrl.u32 %v1154, 16
      %v1207 = vrot.slane %v1205, 7
      %v1208 = vshll.u32 %v1154, 16
      %v1210 = vor.u32 %v1207, %v1208
      %v1211 = vrot.slane %v1207, 4
      %v1213 = vshrl.u32 %v1155, 16
      %v1215 = vrot.slane %v1213, 7
      %v1216 = vshll.u32 %v1155, 16
      %v1218 = vor.u32 %v1215, %v1216
      %v1219 = vrot.slane %v1215, 4
      %vm1236 = vcmask 257024
      %vm1237 = vmand %vm1236, %vm1106
      %v1238 = vld [vmem:[%s1078] sm:$0xf]
      %v1239 = vsel %vm1237, %v1162, %v1238
      %1240 = vst [vmem:[%s1078] sm:$0xf] %v1239
      %v1241 = vld [vmem:[%s1078 + $0x4] sm:$0x1]
      %v1242 = vsel %vm1081, %v1163, %v1241
      %1243 = vst [vmem:[%s1078 + $0x4] sm:$0x1] %v1242
      %v1244 = vld [vmem:[%s1078 + $0x8] sm:$0xf]
      %v1245 = vsel %vm1237, %v1170, %v1244
      %1246 = vst [vmem:[%s1078 + $0x8] sm:$0xf] %v1245
      %v1247 = vld [vmem:[%s1078 + $0xc] sm:$0x1]
      %v1248 = vsel %vm1081, %v1171, %v1247
      %1249 = vst [vmem:[%s1078 + $0xc] sm:$0x1] %v1248
      %v1250 = vld [vmem:[%s1078 + $0x10] sm:$0xf]
      %v1251 = vsel %vm1237, %v1178, %v1250
      %1252 = vst [vmem:[%s1078 + $0x10] sm:$0xf] %v1251
      %v1253 = vld [vmem:[%s1078 + $0x14] sm:$0x1]
      %v1254 = vsel %vm1081, %v1179, %v1253
      %1255 = vst [vmem:[%s1078 + $0x14] sm:$0x1] %v1254
      %v1256 = vld [vmem:[%s1078 + $0x18] sm:$0xf]
      %v1257 = vsel %vm1237, %v1186, %v1256
      %1258 = vst [vmem:[%s1078 + $0x18] sm:$0xf] %v1257
      %v1259 = vld [vmem:[%s1078 + $0x1c] sm:$0x1]
      %v1260 = vsel %vm1081, %v1187, %v1259
      %1261 = vst [vmem:[%s1078 + $0x1c] sm:$0x1] %v1260
      %v1262 = vld [vmem:[%s1078 + $0x20] sm:$0xf]
      %v1263 = vsel %vm1237, %v1194, %v1262
      %1264 = vst [vmem:[%s1078 + $0x20] sm:$0xf] %v1263
      %v1265 = vld [vmem:[%s1078 + $0x24] sm:$0x1]
      %v1266 = vsel %vm1081, %v1195, %v1265
      %1267 = vst [vmem:[%s1078 + $0x24] sm:$0x1] %v1266
      %v1268 = vld [vmem:[%s1078 + $0x28] sm:$0xf]
      %v1269 = vsel %vm1237, %v1202, %v1268
      %1270 = vst [vmem:[%s1078 + $0x28] sm:$0xf] %v1269
      %v1271 = vld [vmem:[%s1078 + $0x2c] sm:$0x1]
      %v1272 = vsel %vm1081, %v1203, %v1271
      %1273 = vst [vmem:[%s1078 + $0x2c] sm:$0x1] %v1272
      %v1274 = vld [vmem:[%s1078 + $0x30] sm:$0xf]
      %v1275 = vsel %vm1237, %v1210, %v1274
      %1276 = vst [vmem:[%s1078 + $0x30] sm:$0xf] %v1275
      %v1277 = vld [vmem:[%s1078 + $0x34] sm:$0x1]
      %v1278 = vsel %vm1081, %v1211, %v1277
      %1279 = vst [vmem:[%s1078 + $0x34] sm:$0x1] %v1278
      %v1280 = vld [vmem:[%s1078 + $0x38] sm:$0xf]
      %v1281 = vsel %vm1237, %v1218, %v1280
      %1282 = vst [vmem:[%s1078 + $0x38] sm:$0xf] %v1281
      %v1283 = vld [vmem:[%s1078 + $0x3c] sm:$0x1]
      %v1284 = vsel %vm1081, %v1219, %v1283
      %1285 = vst [vmem:[%s1078 + $0x3c] sm:$0x1] %v1284
      %p1286 = scmp.lt.s32.totalorder %s16, 1
      %s1287 = scalar_select %p1286, %s16, 1
      %s1288 = smul.addr %s1287, 20
      %s1289 = smul.addr %s1288, 4
      %s1290 = scalar_lea.vmem %s5, %s1289
      // Predicated region
      $region41: #{res_block_forward.4} parent=39 // pred_check
        %p1291 = pneg %p154
      $region42: #{res_block_forward.4} parent=39 // pred_check_branch
        %1293 = sbr.rel (%p1291) target = $region44
      $region43: #{res_block_forward.4} parent=39 // pred_region
        _
      $region44: #{res_block_forward.4} parent=39 // pred_fallthru
        _
    $region40: #{res_block_forward.4} parent=5 // pred_fallthru
      _
    %p1294 = scmp.le.s32.totalorder 2, %s11
    // Predicated region
    $region45: #{res_block_forward.4} parent=5 // pred_check
      %p1295 = pneg %p1294
    $region46: #{res_block_forward.4} parent=5 // pred_check_branch
      %1297 = sbr.rel (%p1295) target = $region48
    $region47: #{res_block_forward.4} parent=5 // pred_region
      %s1298 = ssub.s32 %s11, 2
      // Predicated region
      $region49: #{res_block_forward.4} parent=47 // pred_check
        %p1299 = pneg %p160
      $region50: #{res_block_forward.4} parent=47 // pred_check_branch
        %1301 = sbr.rel (%p1299) target = $region52
      $region51: #{res_block_forward.4} parent=47 // pred_region
        %p1302 = scmp.lt.s32.totalorder %s17, 1
        %s1303 = scalar_select %p1302, %s17, 1
        %s1304 = smul.addr %s1303, 20
        %s1305 = smul.addr %s1304, 4
        %s1306 = scalar_lea.vmem %s5, %s1305
      $region52: #{res_block_forward.4} parent=47 // pred_fallthru
        _
    $region48: #{res_block_forward.4} parent=5 // pred_fallthru
      _
  $region6: #{res_block_forward.4} parent=0 // loop_footer
    %s15 = sadd.s32 1, %s11
  $region7: #{res_block_forward.4} parent=0 // loop_footer_branch
    %10 = sbr.rel target = $region3
  $region8: #{res_block_forward.4} parent=0 // loop_exit
    _

</llo_original>
